<compile_context>
chip_gen: v7x
topology: tpu7x:2x2x1
jax: 0.10.0
libtpu: 0.0.40
codegen_flags: <defaults>
</compile_context>

<pallas_src>
import math
import functools

import jax
import jax.numpy as jnp
from jax import lax
from jax.experimental import pallas as pl
from jax.experimental.pallas import tpu as pltpu

NEG_INF = -1e30                       # large finite negative (safer than -inf in masks)
VMEM_LIMIT = 48 * 1024 * 1024         # leave headroom even on v7x (64 MiB VMEM)


def _cparams(*sem):
    return pltpu.CompilerParams(dimension_semantics=sem,
                                vmem_limit_bytes=VMEM_LIMIT)


# ------------------------- fused embedding kernel -------------------------
# out = LayerNorm(word + (pos_emb + tok_emb)) + sinusoidal_pe     (one batch per step)

def _embed_kernel(word_ref, pos_ref, sin_ref, g_ref, b_ref, o_ref, *, eps):
    z = word_ref[0].astype(jnp.float32) + pos_ref[...].astype(jnp.float32)
    mu = jnp.mean(z, axis=-1, keepdims=True)
    var = jnp.mean(jnp.square(z - mu), axis=-1, keepdims=True)
    zn = (z - mu) * lax.rsqrt(var + eps)
    y = zn * g_ref[...] + b_ref[...] + sin_ref[...].astype(jnp.float32)
    o_ref[0] = y.astype(o_ref.dtype)


def embed_ln_pe(word, pos_tok, sin_pe, gamma, beta, *, eps):
    B, S, D = word.shape
    return pl.pallas_call(
        functools.partial(_embed_kernel, eps=eps),
        out_shape=jax.ShapeDtypeStruct((B, S, D), jnp.float32),
        grid=(B,),
        in_specs=[
            pl.BlockSpec((1, S, D), lambda b: (b, 0, 0)),
            pl.BlockSpec((S, D), lambda b: (0, 0)),
            pl.BlockSpec((S, D), lambda b: (0, 0)),
            pl.BlockSpec((1, D), lambda b: (0, 0)),
            pl.BlockSpec((1, D), lambda b: (0, 0)),
        ],
        out_specs=pl.BlockSpec((1, S, D), lambda b: (b, 0, 0)),
        compiler_params=_cparams("parallel"),
    )(word, pos_tok, sin_pe, gamma.reshape(1, D), beta.reshape(1, D))


# --------------- fused attention block (QKV + MHA + out-proj + add&LN) ---------------
# One batch element per grid step; all heads handled inside the kernel (no per-head
# grid steps, no head transposes in the XLA glue).

def _attn_block_kernel(x_ref, win_ref, bin_ref, wout_ref, bout_ref,
                       g_ref, b_ref, o_ref, *, nhead, scale, eps):
    x = x_ref[0].astype(jnp.float32)                       # (S, D)
    S, D = x.shape
    Dh = D // nhead

    # combined in-projection on the MXU (bf16 operands, f32 accumulation)
    qkv = jnp.dot(x.astype(jnp.bfloat16), win_ref[...],
                  preferred_element_type=jnp.float32) + bin_ref[...]     # (S, 3D)

    row = lax.broadcasted_iota(jnp.int32, (S, S), 0)
    col = lax.broadcasted_iota(jnp.int32, (S, S), 1)
    causal = col > row                                     # strictly-upper = future

    outs = []
    for h in range(nhead):                                 # static unrolled head loop
        q = qkv[:, h * Dh:(h + 1) * Dh]
        k = qkv[:, D + h * Dh:D + (h + 1) * Dh]
        v = qkv[:, 2 * D + h * Dh:2 * D + (h + 1) * Dh]
        s = lax.dot_general(q.astype(jnp.bfloat16), k.astype(jnp.bfloat16),
                            (((1,), (1,)), ((), ())),
                            preferred_element_type=jnp.float32) * scale   # (S, S)
        s = jnp.where(causal, NEG_INF, s)
        s = s - jnp.max(s, axis=-1, keepdims=True)
        p = jnp.exp(s)
        p = p * pl.reciprocal(jnp.sum(p, axis=-1, keepdims=True), approx=True)
        outs.append(jnp.dot(p.astype(jnp.bfloat16), v.astype(jnp.bfloat16),
                            preferred_element_type=jnp.float32))
    o = jnp.concatenate(outs, axis=-1)                     # (S, D)

    # output projection + residual + LayerNorm (post-norm, eps=1e-5)
    sa = jnp.dot(o.astype(jnp.bfloat16), wout_ref[...],
                 preferred_element_type=jnp.float32) + bout_ref[...]
    z = x + sa
    mu = jnp.mean(z, axis=-1, keepdims=True)
    var = jnp.mean(jnp.square(z - mu), axis=-1, keepdims=True)
    zn = (z - mu) * lax.rsqrt(var + eps)
    o_ref[0] = (zn * g_ref[...] + b_ref[...]).astype(o_ref.dtype)


def attention_block(x, p, *, nhead, eps=1e-5):
    B, S, D = x.shape
    Dh = D // nhead
    return pl.pallas_call(
        functools.partial(_attn_block_kernel, nhead=nhead,
                          scale=1.0 / math.sqrt(Dh), eps=eps),
        out_shape=jax.ShapeDtypeStruct((B, S, D), jnp.float32),
        grid=(B,),
        in_specs=[
            pl.BlockSpec((1, S, D), lambda b: (b, 0, 0)),
            pl.BlockSpec((D, 3 * D), lambda b: (0, 0)),
            pl.BlockSpec((1, 3 * D), lambda b: (0, 0)),
            pl.BlockSpec((D, D), lambda b: (0, 0)),
            pl.BlockSpec((1, D), lambda b: (0, 0)),
            pl.BlockSpec((1, D), lambda b: (0, 0)),
            pl.BlockSpec((1, D), lambda b: (0, 0)),
        ],
        out_specs=pl.BlockSpec((1, S, D), lambda b: (b, 0, 0)),
        compiler_params=_cparams("parallel"),
    )(x, p["w_in"], p["b_in"].reshape(1, -1), p["w_out"],
      p["b_out"].reshape(1, -1), p["ln1_g"].reshape(1, -1),
      p["ln1_b"].reshape(1, -1))


# ------------------- fused FFN block (linear->ReLU->linear + add&LN) -------------------

def _ffn_block_kernel(x_ref, w1_ref, b1_ref, w2_ref, b2_ref, g_ref, b_ref,
                      o_ref, *, eps):
    x = x_ref[...].astype(jnp.float32)                     # (rows, D)
    h = jnp.dot(x.astype(jnp.bfloat16), w1_ref[...],
                preferred_element_type=jnp.float32) + b1_ref[...]
    h = jnp.maximum(h, 0.0)
    ff = jnp.dot(h.astype(jnp.bfloat16), w2_ref[...],
                 preferred_element_type=jnp.float32) + b2_ref[...]
    z = x + ff
    mu = jnp.mean(z, axis=-1, keepdims=True)
    var = jnp.mean(jnp.square(z - mu), axis=-1, keepdims=True)
    zn = (z - mu) * lax.rsqrt(var + eps)
    o_ref[...] = (zn * g_ref[...] + b_ref[...]).astype(o_ref.dtype)


def ffn_block(x2, p, *, eps=1e-5, block_rows=128):
    N, D = x2.shape
    FF = p["w1"].shape[1]
    br = min(block_rows, N)
    return pl.pallas_call(
        functools.partial(_ffn_block_kernel, eps=eps),
        out_shape=jax.ShapeDtypeStruct((N, D), jnp.float32),
        grid=(pl.cdiv(N, br),),
        in_specs=[
            pl.BlockSpec((br, D), lambda i: (i, 0)),
            pl.BlockSpec((D, FF), lambda i: (0, 0)),
            pl.BlockSpec((1, FF), lambda i: (0, 0)),
            pl.BlockSpec((FF, D), lambda i: (0, 0)),
            pl.BlockSpec((1, D), lambda i: (0, 0)),
            pl.BlockSpec((1, D), lambda i: (0, 0)),
            pl.BlockSpec((1, D), lambda i: (0, 0)),
        ],
        out_specs=pl.BlockSpec((br, D), lambda i: (i, 0)),
        compiler_params=_cparams("parallel"),
    )(x2, p["w1"], p["b1"].reshape(1, -1), p["w2"], p["b2"].reshape(1, -1),
      p["ln2_g"].reshape(1, -1), p["ln2_b"].reshape(1, -1))


# ------------------------- LM head: column-tiled, lane-aligned linear -------------------------

def _linear_kernel(x_ref, w_ref, b_ref, o_ref):
    y = jnp.dot(x_ref[...], w_ref[...], preferred_element_type=jnp.float32)
    o_ref[...] = (y + b_ref[...]).astype(o_ref.dtype)


def lm_head(x2, w, b, *, block_rows=128, block_cols=512):
    N, Din = x2.shape
    Dout = w.shape[1]                                      # already padded to 128-multiple
    br = min(block_rows, N)
    bc = min(block_cols, Dout)
    return pl.pallas_call(
        _linear_kernel,
        out_shape=jax.ShapeDtypeStruct((N, Dout), jnp.float32),
        grid=(pl.cdiv(N, br), pl.cdiv(Dout, bc)),
        in_specs=[
            pl.BlockSpec((br, Din), lambda i, j: (i, 0)),
            pl.BlockSpec((Din, bc), lambda i, j: (0, j)),   # weight tiled over vocab cols
            pl.BlockSpec((1, bc), lambda i, j: (0, j)),
        ],
        out_specs=pl.BlockSpec((br, bc), lambda i, j: (i, j)),
        compiler_params=_cparams("parallel", "parallel"),
    )(x2.astype(jnp.bfloat16), w, b.reshape(1, -1))


# ------------------------- model glue (plain JAX) -------------------------

def sinusoidal_pe(max_len, d_model):
    pos = jnp.arange(max_len, dtype=jnp.float32)[:, None]
    div = jnp.exp(jnp.arange(0, d_model, 2, dtype=jnp.float32)
                  * (-math.log(10000.0) / d_model))
    pe = jnp.zeros((max_len, d_model), jnp.float32)
    pe = pe.at[:, 0::2].set(jnp.sin(pos * div))
    pe = pe.at[:, 1::2].set(jnp.cos(pos * div))
    return pe


def encoder_layer(x, p, nhead):
    B, S, D = x.shape
    x = attention_block(x, p, nhead=nhead)                 # fused attn + add&LN
    x2 = ffn_block(x.reshape(B * S, D), p)                 # fused FFN + add&LN
    return x2.reshape(B, S, D)


def transformer_lm_forward(input_ids, params, *, nhead, vocab):
    B, S = input_ids.shape
    D = params["word_emb"].shape[1]

    # TODO(synk): the embedding-table gather stays in XLA glue (jnp.take); a Pallas
    # DMA-gather is unnecessary at these sizes.
    word = jnp.take(params["word_emb"], input_ids, axis=0)          # (B, S, D)
    pos_tok = params["pos_emb"][:S] + params["tok_emb"][0]          # (S, D)
    sin_pe = params["sin_pe"][:S]                                   # (S, D)

    # BertEmbeddings LayerNorm(eps=1e-12) fused with the sinusoidal-PE add.
    x = embed_ln_pe(word, pos_tok, sin_pe,
                    params["emb_ln_g"], params["emb_ln_b"], eps=1e-12)

    for lp in params["layers"]:
        x = encoder_layer(x, lp, nhead)

    logits = lm_head(x.reshape(B * S, D), params["fc_w"], params["fc_b"])
    return logits.reshape(B, S, -1)[..., :vocab]            # drop lane padding


def init_params(key, *, vocab, max_pos, d_model, nhead, num_layers, dim_ff):
    keys = jax.random.split(key, 8 + num_layers)
    vocab_pad = ((vocab + 127) // 128) * 128                # lane-aligned LM head

    def nrm(k, shape, scale=0.02):
        return (scale * jax.random.normal(k, shape)).astype(jnp.float32)

    def nrm16(k, shape, scale=0.02):
        return nrm(k, shape, scale).astype(jnp.bfloat16)    # MXU operands in bf16

    fc_w = jnp.zeros((d_model, vocab_pad), jnp.float32)
    fc_w = fc_w.at[:, :vocab].set(nrm(keys[3], (d_model, vocab)))

    params = dict(
        word_emb=nrm(keys[0], (vocab, d_model)),
        pos_emb=nrm(keys[1], (max_pos, d_model)),
        tok_emb=nrm(keys[2], (2, d_model)),
        emb_ln_g=jnp.ones((d_model,), jnp.float32),
        emb_ln_b=jnp.zeros((d_model,), jnp.float32),
        sin_pe=sinusoidal_pe(256, d_model),
        fc_w=fc_w.astype(jnp.bfloat16),
        fc_b=jnp.zeros((vocab_pad,), jnp.float32),
        layers=[],
    )
    for l in range(num_layers):
        lk = jax.random.split(keys[8 + l], 4)
        params["layers"].append(dict(
            w_in=nrm16(lk[0], (d_model, 3 * d_model)),
            b_in=jnp.zeros((3 * d_model,), jnp.float32),
            w_out=nrm16(lk[1], (d_model, d_model)),
            b_out=jnp.zeros((d_model,), jnp.float32),
            ln1_g=jnp.ones((d_model,), jnp.float32),
            ln1_b=jnp.zeros((d_model,), jnp.float32),
            w1=nrm16(lk[2], (d_model, dim_ff)),
            b1=jnp.zeros((dim_ff,), jnp.float32),
            w2=nrm16(lk[3], (dim_ff, d_model)),
            b2=jnp.zeros((d_model,), jnp.float32),
            ln2_g=jnp.ones((d_model,), jnp.float32),
            ln2_b=jnp.zeros((d_model,), jnp.float32),
        ))
    return params


if __name__ == "__main__":
    # Small, TPU-friendly config consistent with the module structure
    # (module defaults: d_model=768, nhead=4, num_layers=4, dim_feedforward=512).
    D_MODEL, NHEAD, NUM_LAYERS, DIM_FF = 256, 4, 4, 512
    VOCAB, MAX_POS = 1000, 64
    B, S = 2, 8

    key = jax.random.PRNGKey(0)
    pkey, ikey = jax.random.split(key)
    params = init_params(pkey, vocab=VOCAB, max_pos=MAX_POS, d_model=D_MODEL,
                         nhead=NHEAD, num_layers=NUM_LAYERS, dim_ff=DIM_FF)
    input_ids = jax.random.randint(ikey, (B, S), 0, VOCAB, dtype=jnp.int32)

    fwd = jax.jit(functools.partial(transformer_lm_forward, nhead=NHEAD, vocab=VOCAB))
    logits = fwd(input_ids, params)
    jax.block_until_ready(logits)
    assert logits.shape == (B, S, VOCAB) and logits.dtype == jnp.float32
    print("KERNEL_OK")
</pallas_src>

<mosaic_0001>
module attributes {stable_mosaic.version = 11 : i64} {
  func.func @_embed_kernel(%arg0: i32, %arg1: memref<1x8x256xf32, #tpu.memory_space<vmem>>, %arg2: memref<8x256xf32, #tpu.memory_space<vmem>>, %arg3: memref<8x256xf32, #tpu.memory_space<vmem>>, %arg4: memref<1x256xf32, #tpu.memory_space<vmem>>, %arg5: memref<1x256xf32, #tpu.memory_space<vmem>>, %arg6: memref<1x8x256xf32, #tpu.memory_space<vmem>>) attributes {dimension_semantics = [#tpu.dimension_semantics<parallel>], iteration_bounds = array<i64: 2>, scalar_prefetch = 0 : i64, scratch_operands = 0 : i64, tpu.core_type = #tpu.core_type<tc>, window_params = [{transform_indices = @transform_0, window_bounds = array<i64: 1, 8, 256>}, {pipeline_mode = #tpu.pipeline_mode<synchronous>, transform_indices = @transform_1, window_bounds = array<i64: 8, 256>}, {pipeline_mode = #tpu.pipeline_mode<synchronous>, transform_indices = @transform_2, window_bounds = array<i64: 8, 256>}, {pipeline_mode = #tpu.pipeline_mode<synchronous>, transform_indices = @transform_3, window_bounds = array<i64: 1, 256>}, {pipeline_mode = #tpu.pipeline_mode<synchronous>, transform_indices = @transform_4, window_bounds = array<i64: 1, 256>}, {transform_indices = @transform_5, window_bounds = array<i64: 1, 8, 256>}]} {
    %c0 = arith.constant 0 : index
    %c0_0 = arith.constant 0 : index
    %c0_1 = arith.constant 0 : index
    %0 = vector.load %arg1[%c0, %c0_0, %c0_1] : memref<1x8x256xf32, #tpu.memory_space<vmem>>, vector<1x8x256xf32>
    %1 = vector.shape_cast %0 : vector<1x8x256xf32> to vector<8x256xf32>
    %c0_2 = arith.constant 0 : index
    %c0_3 = arith.constant 0 : index
    %2 = vector.load %arg2[%c0_2, %c0_3] : memref<8x256xf32, #tpu.memory_space<vmem>>, vector<8x256xf32>
    %3 = arith.addf %1, %2 : vector<8x256xf32>
    %cst = arith.constant dense<0.000000e+00> : vector<8xf32>
    %4 = vector.multi_reduction <add>, %3, %cst [1] : vector<8x256xf32> to vector<8xf32>
    %5 = vector.shape_cast %4 : vector<8xf32> to vector<8x1xf32>
    %cst_4 = arith.constant 2.560000e+02 : f32
    %6 = vector.broadcast %cst_4 : f32 to vector<8x1xf32>
    %7 = arith.divf %5, %6 : vector<8x1xf32>
    %8 = vector.broadcast %7 : vector<8x1xf32> to vector<8x256xf32>
    %9 = arith.subf %3, %8 : vector<8x256xf32>
    %10 = arith.mulf %9, %9 : vector<8x256xf32>
    %cst_5 = arith.constant dense<0.000000e+00> : vector<8xf32>
    %11 = vector.multi_reduction <add>, %10, %cst_5 [1] : vector<8x256xf32> to vector<8xf32>
    %12 = vector.shape_cast %11 : vector<8xf32> to vector<8x1xf32>
    %cst_6 = arith.constant 2.560000e+02 : f32
    %13 = vector.broadcast %cst_6 : f32 to vector<8x1xf32>
    %14 = arith.divf %12, %13 : vector<8x1xf32>
    %15 = vector.broadcast %7 : vector<8x1xf32> to vector<8x256xf32>
    %16 = arith.subf %3, %15 : vector<8x256xf32>
    %cst_7 = arith.constant 9.99999996E-13 : f32
    %17 = vector.broadcast %cst_7 : f32 to vector<8x1xf32>
    %18 = arith.addf %14, %17 : vector<8x1xf32>
    %19 = math.rsqrt %18 : vector<8x1xf32>
    %20 = vector.broadcast %19 : vector<8x1xf32> to vector<8x256xf32>
    %21 = arith.mulf %16, %20 : vector<8x256xf32>
    %c0_8 = arith.constant 0 : index
    %c0_9 = arith.constant 0 : index
    %22 = vector.load %arg4[%c0_8, %c0_9] : memref<1x256xf32, #tpu.memory_space<vmem>>, vector<1x256xf32>
    %23 = vector.broadcast %22 : vector<1x256xf32> to vector<8x256xf32>
    %24 = arith.mulf %21, %23 : vector<8x256xf32>
    %c0_10 = arith.constant 0 : index
    %c0_11 = arith.constant 0 : index
    %25 = vector.load %arg5[%c0_10, %c0_11] : memref<1x256xf32, #tpu.memory_space<vmem>>, vector<1x256xf32>
    %26 = vector.broadcast %25 : vector<1x256xf32> to vector<8x256xf32>
    %27 = arith.addf %24, %26 : vector<8x256xf32>
    %c0_12 = arith.constant 0 : index
    %c0_13 = arith.constant 0 : index
    %28 = vector.load %arg3[%c0_12, %c0_13] : memref<8x256xf32, #tpu.memory_space<vmem>>, vector<8x256xf32>
    %29 = arith.addf %27, %28 : vector<8x256xf32>
    %c0_14 = arith.constant 0 : index
    %c0_15 = arith.constant 0 : index
    %c0_16 = arith.constant 0 : index
    %30 = vector.load %arg6[%c0_14, %c0_15, %c0_16] : memref<1x8x256xf32, #tpu.memory_space<vmem>>, vector<1x8x256xf32>
    %31 = vector.shape_cast %30 : vector<1x8x256xf32> to vector<8x256xf32>
    %32 = vector.shape_cast %29 : vector<8x256xf32> to vector<1x8x256xf32>
    tpu.vector_store %arg6[%c0_14, %c0_15, %c0_16], %32 {strides = array<i32>} : memref<1x8x256xf32, #tpu.memory_space<vmem>>, vector<1x8x256xf32>,
    return
  }
  func.func @transform_0(%arg0: i32) -> (i32, i32, i32) {
    %c0_i32 = arith.constant 0 : i32
    %c0_i32_0 = arith.constant 0 : i32
    %c0_i32_1 = arith.constant 0 : i32
    return %arg0, %c0_i32, %c0_i32_0 : i32, i32, i32
  }
  func.func @transform_1(%arg0: i32) -> (i32, i32) {
    %c0_i32 = arith.constant 0 : i32
    %c0_i32_0 = arith.constant 0 : i32
    %c0_i32_1 = arith.constant 0 : i32
    return %c0_i32, %c0_i32_0 : i32, i32
  }
  func.func @transform_2(%arg0: i32) -> (i32, i32) {
    %c0_i32 = arith.constant 0 : i32
    %c0_i32_0 = arith.constant 0 : i32
    %c0_i32_1 = arith.constant 0 : i32
    return %c0_i32, %c0_i32_0 : i32, i32
  }
  func.func @transform_3(%arg0: i32) -> (i32, i32) {
    %c0_i32 = arith.constant 0 : i32
    %c0_i32_0 = arith.constant 0 : i32
    %c0_i32_1 = arith.constant 0 : i32
    return %c0_i32, %c0_i32_0 : i32, i32
  }
  func.func @transform_4(%arg0: i32) -> (i32, i32) {
    %c0_i32 = arith.constant 0 : i32
    %c0_i32_0 = arith.constant 0 : i32
    %c0_i32_1 = arith.constant 0 : i32
    return %c0_i32, %c0_i32_0 : i32, i32
  }
  func.func @transform_5(%arg0: i32) -> (i32, i32, i32) {
    %c0_i32 = arith.constant 0 : i32
    %c0_i32_0 = arith.constant 0 : i32
    %c0_i32_1 = arith.constant 0 : i32
    return %arg0, %c0_i32, %c0_i32_0 : i32, i32, i32
  }
}

module attributes {stable_mosaic.version = 11 : i64} {
  func.func @_ffn_block_kernel(%arg0: i32, %arg1: memref<16x256xf32, #tpu.memory_space<vmem>>, %arg2: memref<256x512xbf16, #tpu.memory_space<vmem>>, %arg3: memref<1x512xf32, #tpu.memory_space<vmem>>, %arg4: memref<512x256xbf16, #tpu.memory_space<vmem>>, %arg5: memref<1x256xf32, #tpu.memory_space<vmem>>, %arg6: memref<1x256xf32, #tpu.memory_space<vmem>>, %arg7: memref<1x256xf32, #tpu.memory_space<vmem>>, %arg8: memref<16x256xf32, #tpu.memory_space<vmem>>) attributes {dimension_semantics = [#tpu.dimension_semantics<parallel>], iteration_bounds = array<i64: 1>, scalar_prefetch = 0 : i64, scratch_operands = 0 : i64, tpu.core_type = #tpu.core_type<tc>, window_params = [{transform_indices = @transform_0, window_bounds = array<i64: 16, 256>}, {pipeline_mode = #tpu.pipeline_mode<synchronous>, transform_indices = @transform_1, window_bounds = array<i64: 256, 512>}, {pipeline_mode = #tpu.pipeline_mode<synchronous>, transform_indices = @transform_2, window_bounds = array<i64: 1, 512>}, {pipeline_mode = #tpu.pipeline_mode<synchronous>, transform_indices = @transform_3, window_bounds = array<i64: 512, 256>}, {pipeline_mode = #tpu.pipeline_mode<synchronous>, transform_indices = @transform_4, window_bounds = array<i64: 1, 256>}, {pipeline_mode = #tpu.pipeline_mode<synchronous>, transform_indices = @transform_5, window_bounds = array<i64: 1, 256>}, {pipeline_mode = #tpu.pipeline_mode<synchronous>, transform_indices = @transform_6, window_bounds = array<i64: 1, 256>}, {transform_indices = @transform_7, window_bounds = array<i64: 16, 256>}]} {
    %c0 = arith.constant 0 : index
    %c0_0 = arith.constant 0 : index
    %0 = vector.load %arg1[%c0, %c0_0] : memref<16x256xf32, #tpu.memory_space<vmem>>, vector<16x256xf32>
    %1 = arith.truncf %0 : vector<16x256xf32> to vector<16x256xbf16>
    %c0_1 = arith.constant 0 : index
    %c0_2 = arith.constant 0 : index
    %2 = vector.load %arg2[%c0_1, %c0_2] : memref<256x512xbf16, #tpu.memory_space<vmem>>, vector<256x512xbf16>
    %cst = arith.constant dense<0.000000e+00> : vector<16x512xf32>
    %3 = tpu.matmul %1, %2, %cst {dimension_numbers = #tpu.dot_dimension_numbers<[1], [0], [0], [1], [0, 0, 1, 1], [], []>} : vector<16x256xbf16>, vector<256x512xbf16>, vector<16x512xf32> -> vector<16x512xf32>
    %c0_3 = arith.constant 0 : index
    %c0_4 = arith.constant 0 : index
    %4 = vector.load %arg3[%c0_3, %c0_4] : memref<1x512xf32, #tpu.memory_space<vmem>>, vector<1x512xf32>
    %5 = vector.broadcast %4 : vector<1x512xf32> to vector<16x512xf32>
    %6 = arith.addf %3, %5 : vector<16x512xf32>
    %cst_5 = arith.constant 0.000000e+00 : f32
    %7 = vector.broadcast %cst_5 : f32 to vector<16x512xf32>
    %8 = arith.maximumf %6, %7 : vector<16x512xf32>
    %9 = arith.truncf %8 : vector<16x512xf32> to vector<16x512xbf16>
    %c0_6 = arith.constant 0 : index
    %c0_7 = arith.constant 0 : index
    %10 = vector.load %arg4[%c0_6, %c0_7] : memref<512x256xbf16, #tpu.memory_space<vmem>>, vector<512x256xbf16>
    %cst_8 = arith.constant dense<0.000000e+00> : vector<16x256xf32>
    %11 = tpu.matmul %9, %10, %cst_8 {dimension_numbers = #tpu.dot_dimension_numbers<[1], [0], [0], [1], [0, 0, 1, 1], [], []>} : vector<16x512xbf16>, vector<512x256xbf16>, vector<16x256xf32> -> vector<16x256xf32>
    %c0_9 = arith.constant 0 : index
    %c0_10 = arith.constant 0 : index
    %12 = vector.load %arg5[%c0_9, %c0_10] : memref<1x256xf32, #tpu.memory_space<vmem>>, vector<1x256xf32>
    %13 = vector.broadcast %12 : vector<1x256xf32> to vector<16x256xf32>
    %14 = arith.addf %11, %13 : vector<16x256xf32>
    %15 = arith.addf %0, %14 : vector<16x256xf32>
    %cst_11 = arith.constant dense<0.000000e+00> : vector<16xf32>
    %16 = vector.multi_reduction <add>, %15, %cst_11 [1] : vector<16x256xf32> to vector<16xf32>
    %17 = vector.shape_cast %16 : vector<16xf32> to vector<16x1xf32>
    %cst_12 = arith.constant 2.560000e+02 : f32
    %18 = vector.broadcast %cst_12 : f32 to vector<16x1xf32>
    %19 = arith.divf %17, %18 : vector<16x1xf32>
    %20 = vector.broadcast %19 : vector<16x1xf32> to vector<16x256xf32>
    %21 = arith.subf %15, %20 : vector<16x256xf32>
    %22 = arith.mulf %21, %21 : vector<16x256xf32>
    %cst_13 = arith.constant dense<0.000000e+00> : vector<16xf32>
    %23 = vector.multi_reduction <add>, %22, %cst_13 [1] : vector<16x256xf32> to vector<16xf32>
    %24 = vector.shape_cast %23 : vector<16xf32> to vector<16x1xf32>
    %cst_14 = arith.constant 2.560000e+02 : f32
    %25 = vector.broadcast %cst_14 : f32 to vector<16x1xf32>
    %26 = arith.divf %24, %25 : vector<16x1xf32>
    %27 = vector.broadcast %19 : vector<16x1xf32> to vector<16x256xf32>
    %28 = arith.subf %15, %27 : vector<16x256xf32>
    %cst_15 = arith.constant 9.99999974E-6 : f32
    %29 = vector.broadcast %cst_15 : f32 to vector<16x1xf32>
    %30 = arith.addf %26, %29 : vector<16x1xf32>
    %31 = math.rsqrt %30 : vector<16x1xf32>
    %32 = vector.broadcast %31 : vector<16x1xf32> to vector<16x256xf32>
    %33 = arith.mulf %28, %32 : vector<16x256xf32>
    %c0_16 = arith.constant 0 : index
    %c0_17 = arith.constant 0 : index
    %34 = vector.load %arg6[%c0_16, %c0_17] : memref<1x256xf32, #tpu.memory_space<vmem>>, vector<1x256xf32>
    %35 = vector.broadcast %34 : vector<1x256xf32> to vector<16x256xf32>
    %36 = arith.mulf %33, %35 : vector<16x256xf32>
    %c0_18 = arith.constant 0 : index
    %c0_19 = arith.constant 0 : index
    %37 = vector.load %arg7[%c0_18, %c0_19] : memref<1x256xf32, #tpu.memory_space<vmem>>, vector<1x256xf32>
    %38 = vector.broadcast %37 : vector<1x256xf32> to vector<16x256xf32>
    %39 = arith.addf %36, %38 : vector<16x256xf32>
    %c0_20 = arith.constant 0 : index
    %c0_21 = arith.constant 0 : index
    %40 = vector.load %arg8[%c0_20, %c0_21] : memref<16x256xf32, #tpu.memory_space<vmem>>, vector<16x256xf32>
    tpu.vector_store %arg8[%c0_20, %c0_21], %39 {strides = array<i32>} : memref<16x256xf32, #tpu.memory_space<vmem>>, vector<16x256xf32>,
    return
  }
  func.func @transform_0(%arg0: i32) -> (i32, i32) {
    %c0_i32 = arith.constant 0 : i32
    %c0_i32_0 = arith.constant 0 : i32
    return %arg0, %c0_i32 : i32, i32
  }
  func.func @transform_1(%arg0: i32) -> (i32, i32) {
    %c0_i32 = arith.constant 0 : i32
    %c0_i32_0 = arith.constant 0 : i32
    %c0_i32_1 = arith.constant 0 : i32
    return %c0_i32, %c0_i32_0 : i32, i32
  }
  func.func @transform_2(%arg0: i32) -> (i32, i32) {
    %c0_i32 = arith.constant 0 : i32
    %c0_i32_0 = arith.constant 0 : i32
    %c0_i32_1 = arith.constant 0 : i32
    return %c0_i32, %c0_i32_0 : i32, i32
  }
  func.func @transform_3(%arg0: i32) -> (i32, i32) {
    %c0_i32 = arith.constant 0 : i32
    %c0_i32_0 = arith.constant 0 : i32
    %c0_i32_1 = arith.constant 0 : i32
    return %c0_i32, %c0_i32_0 : i32, i32
  }
  func.func @transform_4(%arg0: i32) -> (i32, i32) {
    %c0_i32 = arith.constant 0 : i32
    %c0_i32_0 = arith.constant 0 : i32
    %c0_i32_1 = arith.constant 0 : i32
    return %c0_i32, %c0_i32_0 : i32, i32
  }
  func.func @transform_5(%arg0: i32) -> (i32, i32) {
    %c0_i32 = arith.constant 0 : i32
    %c0_i32_0 = arith.constant 0 : i32
    %c0_i32_1 = arith.constant 0 : i32
    return %c0_i32, %c0_i32_0 : i32, i32
  }
  func.func @transform_6(%arg0: i32) -> (i32, i32) {
    %c0_i32 = arith.constant 0 : i32
    %c0_i32_0 = arith.constant 0 : i32
    %c0_i32_1 = arith.constant 0 : i32
    return %c0_i32, %c0_i32_0 : i32, i32
  }
  func.func @transform_7(%arg0: i32) -> (i32, i32) {
    %c0_i32 = arith.constant 0 : i32
    %c0_i32_0 = arith.constant 0 : i32
    return %arg0, %c0_i32 : i32, i32
  }
}

module attributes {stable_mosaic.version = 11 : i64} {
  func.func @_attn_block_kernel(%arg0: i32, %arg1: memref<1x8x256xf32, #tpu.memory_space<vmem>>, %arg2: memref<256x768xbf16, #tpu.memory_space<vmem>>, %arg3: memref<1x768xf32, #tpu.memory_space<vmem>>, %arg4: memref<256x256xbf16, #tpu.memory_space<vmem>>, %arg5: memref<1x256xf32, #tpu.memory_space<vmem>>, %arg6: memref<1x256xf32, #tpu.memory_space<vmem>>, %arg7: memref<1x256xf32, #tpu.memory_space<vmem>>, %arg8: memref<1x8x256xf32, #tpu.memory_space<vmem>>) attributes {dimension_semantics = [#tpu.dimension_semantics<parallel>], iteration_bounds = array<i64: 2>, scalar_prefetch = 0 : i64, scratch_operands = 0 : i64, tpu.core_type = #tpu.core_type<tc>, window_params = [{transform_indices = @transform_0, window_bounds = array<i64: 1, 8, 256>}, {pipeline_mode = #tpu.pipeline_mode<synchronous>, transform_indices = @transform_1, window_bounds = array<i64: 256, 768>}, {pipeline_mode = #tpu.pipeline_mode<synchronous>, transform_indices = @transform_2, window_bounds = array<i64: 1, 768>}, {pipeline_mode = #tpu.pipeline_mode<synchronous>, transform_indices = @transform_3, window_bounds = array<i64: 256, 256>}, {pipeline_mode = #tpu.pipeline_mode<synchronous>, transform_indices = @transform_4, window_bounds = array<i64: 1, 256>}, {pipeline_mode = #tpu.pipeline_mode<synchronous>, transform_indices = @transform_5, window_bounds = array<i64: 1, 256>}, {pipeline_mode = #tpu.pipeline_mode<synchronous>, transform_indices = @transform_6, window_bounds = array<i64: 1, 256>}, {transform_indices = @transform_7, window_bounds = array<i64: 1, 8, 256>}]} {
    %c0 = arith.constant 0 : index
    %c0_0 = arith.constant 0 : index
    %c0_1 = arith.constant 0 : index
    %0 = vector.load %arg1[%c0, %c0_0, %c0_1] : memref<1x8x256xf32, #tpu.memory_space<vmem>>, vector<1x8x256xf32>
    %1 = vector.shape_cast %0 : vector<1x8x256xf32> to vector<8x256xf32>
    %2 = arith.truncf %1 : vector<8x256xf32> to vector<8x256xbf16>
    %c0_2 = arith.constant 0 : index
    %c0_3 = arith.constant 0 : index
    %3 = vector.load %arg2[%c0_2, %c0_3] : memref<256x768xbf16, #tpu.memory_space<vmem>>, vector<256x768xbf16>
    %cst = arith.constant dense<0.000000e+00> : vector<8x768xf32>
    %4 = tpu.matmul %2, %3, %cst {dimension_numbers = #tpu.dot_dimension_numbers<[1], [0], [0], [1], [0, 0, 1, 1], [], []>} : vector<8x256xbf16>, vector<256x768xbf16>, vector<8x768xf32> -> vector<8x768xf32>
    %c0_4 = arith.constant 0 : index
    %c0_5 = arith.constant 0 : index
    %5 = vector.load %arg3[%c0_4, %c0_5] : memref<1x768xf32, #tpu.memory_space<vmem>>, vector<1x768xf32>
    %6 = vector.broadcast %5 : vector<1x768xf32> to vector<8x768xf32>
    %7 = arith.addf %4, %6 : vector<8x768xf32>
    %8 = tpu.iota {dimensions = array<i32: 0>} : vector<8x8xi32>
    %9 = tpu.iota {dimensions = array<i32: 1>} : vector<8x8xi32>
    %10 = arith.cmpi sgt, %9, %8 : vector<8x8xi32>
    %11 = vector.extract_strided_slice %7 {offsets = [0, 0], sizes = [8, 64], strides = [1, 1]} : vector<8x768xf32> to vector<8x64xf32>
    %12 = vector.extract_strided_slice %7 {offsets = [0, 256], sizes = [8, 64], strides = [1, 1]} : vector<8x768xf32> to vector<8x64xf32>
    %13 = vector.extract_strided_slice %7 {offsets = [0, 512], sizes = [8, 64], strides = [1, 1]} : vector<8x768xf32> to vector<8x64xf32>
    %14 = arith.truncf %11 : vector<8x64xf32> to vector<8x64xbf16>
    %15 = arith.truncf %12 : vector<8x64xf32> to vector<8x64xbf16>
    %cst_6 = arith.constant dense<0.000000e+00> : vector<8x8xf32>
    %16 = tpu.matmul %14, %15, %cst_6 {dimension_numbers = #tpu.dot_dimension_numbers<[1], [1], [0], [0], [0, 0, 1, 0], [], []>} : vector<8x64xbf16>, vector<8x64xbf16>, vector<8x8xf32> -> vector<8x8xf32>
    %cst_7 = arith.constant 1.250000e-01 : f32
    %17 = vector.broadcast %cst_7 : f32 to vector<8x8xf32>
    %18 = arith.mulf %16, %17 : vector<8x8xf32>
    %cst_8 = arith.constant -1.000000e+30 : f32
    %19 = vector.broadcast %cst_8 : f32 to vector<8x8xf32>
    %20 = arith.select %10, %19, %18 : vector<8x8xi1>, vector<8x8xf32>
    %cst_9 = arith.constant dense<0xFF800000> : vector<8xf32>
    %21 = vector.multi_reduction <maximumf>, %20, %cst_9 [1] : vector<8x8xf32> to vector<8xf32>
    %22 = vector.shape_cast %21 : vector<8xf32> to vector<8x1xf32>
    %23 = vector.broadcast %22 : vector<8x1xf32> to vector<8x8xf32>
    %24 = arith.subf %20, %23 : vector<8x8xf32>
    %25 = math.exp %24 : vector<8x8xf32>
    %cst_10 = arith.constant dense<0.000000e+00> : vector<8xf32>
    %26 = vector.multi_reduction <add>, %25, %cst_10 [1] : vector<8x8xf32> to vector<8xf32>
    %27 = vector.shape_cast %26 : vector<8xf32> to vector<8x1xf32>
    %28 = tpu.reciprocal %27 {approx = true} : vector<8x1xf32> -> vector<8x1xf32>
    %29 = vector.broadcast %28 : vector<8x1xf32> to vector<8x8xf32>
    %30 = arith.mulf %25, %29 : vector<8x8xf32>
    %31 = arith.truncf %30 : vector<8x8xf32> to vector<8x8xbf16>
    %32 = arith.truncf %13 : vector<8x64xf32> to vector<8x64xbf16>
    %cst_11 = arith.constant dense<0.000000e+00> : vector<8x64xf32>
    %33 = tpu.matmul %31, %32, %cst_11 {dimension_numbers = #tpu.dot_dimension_numbers<[1], [0], [0], [1], [0, 0, 1, 1], [], []>} : vector<8x8xbf16>, vector<8x64xbf16>, vector<8x64xf32> -> vector<8x64xf32>
    %34 = vector.extract_strided_slice %7 {offsets = [0, 64], sizes = [8, 64], strides = [1, 1]} : vector<8x768xf32> to vector<8x64xf32>
    %35 = vector.extract_strided_slice %7 {offsets = [0, 320], sizes = [8, 64], strides = [1, 1]} : vector<8x768xf32> to vector<8x64xf32>
    %36 = vector.extract_strided_slice %7 {offsets = [0, 576], sizes = [8, 64], strides = [1, 1]} : vector<8x768xf32> to vector<8x64xf32>
    %37 = arith.truncf %34 : vector<8x64xf32> to vector<8x64xbf16>
    %38 = arith.truncf %35 : vector<8x64xf32> to vector<8x64xbf16>
    %cst_12 = arith.constant dense<0.000000e+00> : vector<8x8xf32>
    %39 = tpu.matmul %37, %38, %cst_12 {dimension_numbers = #tpu.dot_dimension_numbers<[1], [1], [0], [0], [0, 0, 1, 0], [], []>} : vector<8x64xbf16>, vector<8x64xbf16>, vector<8x8xf32> -> vector<8x8xf32>
    %cst_13 = arith.constant 1.250000e-01 : f32
    %40 = vector.broadcast %cst_13 : f32 to vector<8x8xf32>
    %41 = arith.mulf %39, %40 : vector<8x8xf32>
    %cst_14 = arith.constant -1.000000e+30 : f32
    %42 = vector.broadcast %cst_14 : f32 to vector<8x8xf32>
    %43 = arith.select %10, %42, %41 : vector<8x8xi1>, vector<8x8xf32>
    %cst_15 = arith.constant dense<0xFF800000> : vector<8xf32>
    %44 = vector.multi_reduction <maximumf>, %43, %cst_15 [1] : vector<8x8xf32> to vector<8xf32>
    %45 = vector.shape_cast %44 : vector<8xf32> to vector<8x1xf32>
    %46 = vector.broadcast %45 : vector<8x1xf32> to vector<8x8xf32>
    %47 = arith.subf %43, %46 : vector<8x8xf32>
    %48 = math.exp %47 : vector<8x8xf32>
    %cst_16 = arith.constant dense<0.000000e+00> : vector<8xf32>
    %49 = vector.multi_reduction <add>, %48, %cst_16 [1] : vector<8x8xf32> to vector<8xf32>
    %50 = vector.shape_cast %49 : vector<8xf32> to vector<8x1xf32>
    %51 = tpu.reciprocal %50 {approx = true} : vector<8x1xf32> -> vector<8x1xf32>
    %52 = vector.broadcast %51 : vector<8x1xf32> to vector<8x8xf32>
    %53 = arith.mulf %48, %52 : vector<8x8xf32>
    %54 = arith.truncf %53 : vector<8x8xf32> to vector<8x8xbf16>
    %55 = arith.truncf %36 : vector<8x64xf32> to vector<8x64xbf16>
    %cst_17 = arith.constant dense<0.000000e+00> : vector<8x64xf32>
    %56 = tpu.matmul %54, %55, %cst_17 {dimension_numbers = #tpu.dot_dimension_numbers<[1], [0], [0], [1], [0, 0, 1, 1], [], []>} : vector<8x8xbf16>, vector<8x64xbf16>, vector<8x64xf32> -> vector<8x64xf32>
    %57 = vector.extract_strided_slice %7 {offsets = [0, 128], sizes = [8, 64], strides = [1, 1]} : vector<8x768xf32> to vector<8x64xf32>
    %58 = vector.extract_strided_slice %7 {offsets = [0, 384], sizes = [8, 64], strides = [1, 1]} : vector<8x768xf32> to vector<8x64xf32>
    %59 = vector.extract_strided_slice %7 {offsets = [0, 640], sizes = [8, 64], strides = [1, 1]} : vector<8x768xf32> to vector<8x64xf32>
    %60 = arith.truncf %57 : vector<8x64xf32> to vector<8x64xbf16>
    %61 = arith.truncf %58 : vector<8x64xf32> to vector<8x64xbf16>
    %cst_18 = arith.constant dense<0.000000e+00> : vector<8x8xf32>
    %62 = tpu.matmul %60, %61, %cst_18 {dimension_numbers = #tpu.dot_dimension_numbers<[1], [1], [0], [0], [0, 0, 1, 0], [], []>} : vector<8x64xbf16>, vector<8x64xbf16>, vector<8x8xf32> -> vector<8x8xf32>
    %cst_19 = arith.constant 1.250000e-01 : f32
    %63 = vector.broadcast %cst_19 : f32 to vector<8x8xf32>
    %64 = arith.mulf %62, %63 : vector<8x8xf32>
    %cst_20 = arith.constant -1.000000e+30 : f32
    %65 = vector.broadcast %cst_20 : f32 to vector<8x8xf32>
    %66 = arith.select %10, %65, %64 : vector<8x8xi1>, vector<8x8xf32>
    %cst_21 = arith.constant dense<0xFF800000> : vector<8xf32>
    %67 = vector.multi_reduction <maximumf>, %66, %cst_21 [1] : vector<8x8xf32> to vector<8xf32>
    %68 = vector.shape_cast %67 : vector<8xf32> to vector<8x1xf32>
    %69 = vector.broadcast %68 : vector<8x1xf32> to vector<8x8xf32>
    %70 = arith.subf %66, %69 : vector<8x8xf32>
    %71 = math.exp %70 : vector<8x8xf32>
    %cst_22 = arith.constant dense<0.000000e+00> : vector<8xf32>
    %72 = vector.multi_reduction <add>, %71, %cst_22 [1] : vector<8x8xf32> to vector<8xf32>
    %73 = vector.shape_cast %72 : vector<8xf32> to vector<8x1xf32>
    %74 = tpu.reciprocal %73 {approx = true} : vector<8x1xf32> -> vector<8x1xf32>
    %75 = vector.broadcast %74 : vector<8x1xf32> to vector<8x8xf32>
    %76 = arith.mulf %71, %75 : vector<8x8xf32>
    %77 = arith.truncf %76 : vector<8x8xf32> to vector<8x8xbf16>
    %78 = arith.truncf %59 : vector<8x64xf32> to vector<8x64xbf16>
    %cst_23 = arith.constant dense<0.000000e+00> : vector<8x64xf32>
    %79 = tpu.matmul %77, %78, %cst_23 {dimension_numbers = #tpu.dot_dimension_numbers<[1], [0], [0], [1], [0, 0, 1, 1], [], []>} : vector<8x8xbf16>, vector<8x64xbf16>, vector<8x64xf32> -> vector<8x64xf32>
    %80 = vector.extract_strided_slice %7 {offsets = [0, 192], sizes = [8, 64], strides = [1, 1]} : vector<8x768xf32> to vector<8x64xf32>
    %81 = vector.extract_strided_slice %7 {offsets = [0, 448], sizes = [8, 64], strides = [1, 1]} : vector<8x768xf32> to vector<8x64xf32>
    %82 = vector.extract_strided_slice %7 {offsets = [0, 704], sizes = [8, 64], strides = [1, 1]} : vector<8x768xf32> to vector<8x64xf32>
    %83 = arith.truncf %80 : vector<8x64xf32> to vector<8x64xbf16>
    %84 = arith.truncf %81 : vector<8x64xf32> to vector<8x64xbf16>
    %cst_24 = arith.constant dense<0.000000e+00> : vector<8x8xf32>
    %85 = tpu.matmul %83, %84, %cst_24 {dimension_numbers = #tpu.dot_dimension_numbers<[1], [1], [0], [0], [0, 0, 1, 0], [], []>} : vector<8x64xbf16>, vector<8x64xbf16>, vector<8x8xf32> -> vector<8x8xf32>
    %cst_25 = arith.constant 1.250000e-01 : f32
    %86 = vector.broadcast %cst_25 : f32 to vector<8x8xf32>
    %87 = arith.mulf %85, %86 : vector<8x8xf32>
    %cst_26 = arith.constant -1.000000e+30 : f32
    %88 = vector.broadcast %cst_26 : f32 to vector<8x8xf32>
    %89 = arith.select %10, %88, %87 : vector<8x8xi1>, vector<8x8xf32>
    %cst_27 = arith.constant dense<0xFF800000> : vector<8xf32>
    %90 = vector.multi_reduction <maximumf>, %89, %cst_27 [1] : vector<8x8xf32> to vector<8xf32>
    %91 = vector.shape_cast %90 : vector<8xf32> to vector<8x1xf32>
    %92 = vector.broadcast %91 : vector<8x1xf32> to vector<8x8xf32>
    %93 = arith.subf %89, %92 : vector<8x8xf32>
    %94 = math.exp %93 : vector<8x8xf32>
    %cst_28 = arith.constant dense<0.000000e+00> : vector<8xf32>
    %95 = vector.multi_reduction <add>, %94, %cst_28 [1] : vector<8x8xf32> to vector<8xf32>
    %96 = vector.shape_cast %95 : vector<8xf32> to vector<8x1xf32>
    %97 = tpu.reciprocal %96 {approx = true} : vector<8x1xf32> -> vector<8x1xf32>
    %98 = vector.broadcast %97 : vector<8x1xf32> to vector<8x8xf32>
    %99 = arith.mulf %94, %98 : vector<8x8xf32>
    %100 = arith.truncf %99 : vector<8x8xf32> to vector<8x8xbf16>
    %101 = arith.truncf %82 : vector<8x64xf32> to vector<8x64xbf16>
    %cst_29 = arith.constant dense<0.000000e+00> : vector<8x64xf32>
    %102 = tpu.matmul %100, %101, %cst_29 {dimension_numbers = #tpu.dot_dimension_numbers<[1], [0], [0], [1], [0, 0, 1, 1], [], []>} : vector<8x8xbf16>, vector<8x64xbf16>, vector<8x64xf32> -> vector<8x64xf32>
    %103 = tpu.concatenate %33, %56, %79, %102 in 1 : vector<8x64xf32>, vector<8x64xf32>, vector<8x64xf32>, vector<8x64xf32> -> vector<8x256xf32>
    %104 = arith.truncf %103 : vector<8x256xf32> to vector<8x256xbf16>
    %c0_30 = arith.constant 0 : index
    %c0_31 = arith.constant 0 : index
    %105 = vector.load %arg4[%c0_30, %c0_31] : memref<256x256xbf16, #tpu.memory_space<vmem>>, vector<256x256xbf16>
    %cst_32 = arith.constant dense<0.000000e+00> : vector<8x256xf32>
    %106 = tpu.matmul %104, %105, %cst_32 {dimension_numbers = #tpu.dot_dimension_numbers<[1], [0], [0], [1], [0, 0, 1, 1], [], []>} : vector<8x256xbf16>, vector<256x256xbf16>, vector<8x256xf32> -> vector<8x256xf32>
    %c0_33 = arith.constant 0 : index
    %c0_34 = arith.constant 0 : index
    %107 = vector.load %arg5[%c0_33, %c0_34] : memref<1x256xf32, #tpu.memory_space<vmem>>, vector<1x256xf32>
    %108 = vector.broadcast %107 : vector<1x256xf32> to vector<8x256xf32>
    %109 = arith.addf %106, %108 : vector<8x256xf32>
    %110 = arith.addf %1, %109 : vector<8x256xf32>
    %cst_35 = arith.constant dense<0.000000e+00> : vector<8xf32>
    %111 = vector.multi_reduction <add>, %110, %cst_35 [1] : vector<8x256xf32> to vector<8xf32>
    %112 = vector.shape_cast %111 : vector<8xf32> to vector<8x1xf32>
    %cst_36 = arith.constant 2.560000e+02 : f32
    %113 = vector.broadcast %cst_36 : f32 to vector<8x1xf32>
    %114 = arith.divf %112, %113 : vector<8x1xf32>
    %115 = vector.broadcast %114 : vector<8x1xf32> to vector<8x256xf32>
    %116 = arith.subf %110, %115 : vector<8x256xf32>
    %117 = arith.mulf %116, %116 : vector<8x256xf32>
    %cst_37 = arith.constant dense<0.000000e+00> : vector<8xf32>
    %118 = vector.multi_reduction <add>, %117, %cst_37 [1] : vector<8x256xf32> to vector<8xf32>
    %119 = vector.shape_cast %118 : vector<8xf32> to vector<8x1xf32>
    %cst_38 = arith.constant 2.560000e+02 : f32
    %120 = vector.broadcast %cst_38 : f32 to vector<8x1xf32>
    %121 = arith.divf %119, %120 : vector<8x1xf32>
    %122 = vector.broadcast %114 : vector<8x1xf32> to vector<8x256xf32>
    %123 = arith.subf %110, %122 : vector<8x256xf32>
    %cst_39 = arith.constant 9.99999974E-6 : f32
    %124 = vector.broadcast %cst_39 : f32 to vector<8x1xf32>
    %125 = arith.addf %121, %124 : vector<8x1xf32>
    %126 = math.rsqrt %125 : vector<8x1xf32>
    %127 = vector.broadcast %126 : vector<8x1xf32> to vector<8x256xf32>
    %128 = arith.mulf %123, %127 : vector<8x256xf32>
    %c0_40 = arith.constant 0 : index
    %c0_41 = arith.constant 0 : index
    %129 = vector.load %arg6[%c0_40, %c0_41] : memref<1x256xf32, #tpu.memory_space<vmem>>, vector<1x256xf32>
    %130 = vector.broadcast %129 : vector<1x256xf32> to vector<8x256xf32>
    %131 = arith.mulf %128, %130 : vector<8x256xf32>
    %c0_42 = arith.constant 0 : index
    %c0_43 = arith.constant 0 : index
    %132 = vector.load %arg7[%c0_42, %c0_43] : memref<1x256xf32, #tpu.memory_space<vmem>>, vector<1x256xf32>
    %133 = vector.broadcast %132 : vector<1x256xf32> to vector<8x256xf32>
    %134 = arith.addf %131, %133 : vector<8x256xf32>
    %c0_44 = arith.constant 0 : index
    %c0_45 = arith.constant 0 : index
    %c0_46 = arith.constant 0 : index
    %135 = vector.load %arg8[%c0_44, %c0_45, %c0_46] : memref<1x8x256xf32, #tpu.memory_space<vmem>>, vector<1x8x256xf32>
    %136 = vector.shape_cast %135 : vector<1x8x256xf32> to vector<8x256xf32>
    %137 = vector.shape_cast %134 : vector<8x256xf32> to vector<1x8x256xf32>
    tpu.vector_store %arg8[%c0_44, %c0_45, %c0_46], %137 {strides = array<i32>} : memref<1x8x256xf32, #tpu.memory_space<vmem>>, vector<1x8x256xf32>,
    return
  }
  func.func @transform_0(%arg0: i32) -> (i32, i32, i32) {
    %c0_i32 = arith.constant 0 : i32
    %c0_i32_0 = arith.constant 0 : i32
    %c0_i32_1 = arith.constant 0 : i32
    return %arg0, %c0_i32, %c0_i32_0 : i32, i32, i32
  }
  func.func @transform_1(%arg0: i32) -> (i32, i32) {
    %c0_i32 = arith.constant 0 : i32
    %c0_i32_0 = arith.constant 0 : i32
    %c0_i32_1 = arith.constant 0 : i32
    return %c0_i32, %c0_i32_0 : i32, i32
  }
  func.func @transform_2(%arg0: i32) -> (i32, i32) {
    %c0_i32 = arith.constant 0 : i32
    %c0_i32_0 = arith.constant 0 : i32
    %c0_i32_1 = arith.constant 0 : i32
    return %c0_i32, %c0_i32_0 : i32, i32
  }
  func.func @transform_3(%arg0: i32) -> (i32, i32) {
    %c0_i32 = arith.constant 0 : i32
    %c0_i32_0 = arith.constant 0 : i32
    %c0_i32_1 = arith.constant 0 : i32
    return %c0_i32, %c0_i32_0 : i32, i32
  }
  func.func @transform_4(%arg0: i32) -> (i32, i32) {
    %c0_i32 = arith.constant 0 : i32
    %c0_i32_0 = arith.constant 0 : i32
    %c0_i32_1 = arith.constant 0 : i32
    return %c0_i32, %c0_i32_0 : i32, i32
  }
  func.func @transform_5(%arg0: i32) -> (i32, i32) {
    %c0_i32 = arith.constant 0 : i32
    %c0_i32_0 = arith.constant 0 : i32
    %c0_i32_1 = arith.constant 0 : i32
    return %c0_i32, %c0_i32_0 : i32, i32
  }
  func.func @transform_6(%arg0: i32) -> (i32, i32) {
    %c0_i32 = arith.constant 0 : i32
    %c0_i32_0 = arith.constant 0 : i32
    %c0_i32_1 = arith.constant 0 : i32
    return %c0_i32, %c0_i32_0 : i32, i32
  }
  func.func @transform_7(%arg0: i32) -> (i32, i32, i32) {
    %c0_i32 = arith.constant 0 : i32
    %c0_i32_0 = arith.constant 0 : i32
    %c0_i32_1 = arith.constant 0 : i32
    return %arg0, %c0_i32, %c0_i32_0 : i32, i32, i32
  }
}

module attributes {stable_mosaic.version = 11 : i64} {
  func.func @_attn_block_kernel(%arg0: i32, %arg1: memref<1x8x256xf32, #tpu.memory_space<vmem>>, %arg2: memref<256x768xbf16, #tpu.memory_space<vmem>>, %arg3: memref<1x768xf32, #tpu.memory_space<vmem>>, %arg4: memref<256x256xbf16, #tpu.memory_space<vmem>>, %arg5: memref<1x256xf32, #tpu.memory_space<vmem>>, %arg6: memref<1x256xf32, #tpu.memory_space<vmem>>, %arg7: memref<1x256xf32, #tpu.memory_space<vmem>>, %arg8: memref<1x8x256xf32, #tpu.memory_space<vmem>>) attributes {dimension_semantics = [#tpu.dimension_semantics<parallel>], iteration_bounds = array<i64: 2>, scalar_prefetch = 0 : i64, scratch_operands = 0 : i64, tpu.core_type = #tpu.core_type<tc>, window_params = [{transform_indices = @transform_0, window_bounds = array<i64: 1, 8, 256>}, {pipeline_mode = #tpu.pipeline_mode<synchronous>, transform_indices = @transform_1, window_bounds = array<i64: 256, 768>}, {pipeline_mode = #tpu.pipeline_mode<synchronous>, transform_indices = @transform_2, window_bounds = array<i64: 1, 768>}, {pipeline_mode = #tpu.pipeline_mode<synchronous>, transform_indices = @transform_3, window_bounds = array<i64: 256, 256>}, {pipeline_mode = #tpu.pipeline_mode<synchronous>, transform_indices = @transform_4, window_bounds = array<i64: 1, 256>}, {pipeline_mode = #tpu.pipeline_mode<synchronous>, transform_indices = @transform_5, window_bounds = array<i64: 1, 256>}, {pipeline_mode = #tpu.pipeline_mode<synchronous>, transform_indices = @transform_6, window_bounds = array<i64: 1, 256>}, {transform_indices = @transform_7, window_bounds = array<i64: 1, 8, 256>}]} {
    %c0 = arith.constant 0 : index
    %c0_0 = arith.constant 0 : index
    %c0_1 = arith.constant 0 : index
    %0 = vector.load %arg1[%c0, %c0_0, %c0_1] : memref<1x8x256xf32, #tpu.memory_space<vmem>>, vector<1x8x256xf32>
    %1 = vector.shape_cast %0 : vector<1x8x256xf32> to vector<8x256xf32>
    %2 = arith.truncf %1 : vector<8x256xf32> to vector<8x256xbf16>
    %c0_2 = arith.constant 0 : index
    %c0_3 = arith.constant 0 : index
    %3 = vector.load %arg2[%c0_2, %c0_3] : memref<256x768xbf16, #tpu.memory_space<vmem>>, vector<256x768xbf16>
    %cst = arith.constant dense<0.000000e+00> : vector<8x768xf32>
    %4 = tpu.matmul %2, %3, %cst {dimension_numbers = #tpu.dot_dimension_numbers<[1], [0], [0], [1], [0, 0, 1, 1], [], []>} : vector<8x256xbf16>, vector<256x768xbf16>, vector<8x768xf32> -> vector<8x768xf32>
    %c0_4 = arith.constant 0 : index
    %c0_5 = arith.constant 0 : index
    %5 = vector.load %arg3[%c0_4, %c0_5] : memref<1x768xf32, #tpu.memory_space<vmem>>, vector<1x768xf32>
    %6 = vector.broadcast %5 : vector<1x768xf32> to vector<8x768xf32>
    %7 = arith.addf %4, %6 : vector<8x768xf32>
    %8 = tpu.iota {dimensions = array<i32: 0>} : vector<8x8xi32>
    %9 = tpu.iota {dimensions = array<i32: 1>} : vector<8x8xi32>
    %10 = arith.cmpi sgt, %9, %8 : vector<8x8xi32>
    %11 = vector.extract_strided_slice %7 {offsets = [0, 0], sizes = [8, 64], strides = [1, 1]} : vector<8x768xf32> to vector<8x64xf32>
    %12 = vector.extract_strided_slice %7 {offsets = [0, 256], sizes = [8, 64], strides = [1, 1]} : vector<8x768xf32> to vector<8x64xf32>
    %13 = vector.extract_strided_slice %7 {offsets = [0, 512], sizes = [8, 64], strides = [1, 1]} : vector<8x768xf32> to vector<8x64xf32>
    %14 = arith.truncf %11 : vector<8x64xf32> to vector<8x64xbf16>
    %15 = arith.truncf %12 : vector<8x64xf32> to vector<8x64xbf16>
    %cst_6 = arith.constant dense<0.000000e+00> : vector<8x8xf32>
    %16 = tpu.matmul %14, %15, %cst_6 {dimension_numbers = #tpu.dot_dimension_numbers<[1], [1], [0], [0], [0, 0, 1, 0], [], []>} : vector<8x64xbf16>, vector<8x64xbf16>, vector<8x8xf32> -> vector<8x8xf32>
    %cst_7 = arith.constant 1.250000e-01 : f32
    %17 = vector.broadcast %cst_7 : f32 to vector<8x8xf32>
    %18 = arith.mulf %16, %17 : vector<8x8xf32>
    %cst_8 = arith.constant -1.000000e+30 : f32
    %19 = vector.broadcast %cst_8 : f32 to vector<8x8xf32>
    %20 = arith.select %10, %19, %18 : vector<8x8xi1>, vector<8x8xf32>
    %cst_9 = arith.constant dense<0xFF800000> : vector<8xf32>
    %21 = vector.multi_reduction <maximumf>, %20, %cst_9 [1] : vector<8x8xf32> to vector<8xf32>
    %22 = vector.shape_cast %21 : vector<8xf32> to vector<8x1xf32>
    %23 = vector.broadcast %22 : vector<8x1xf32> to vector<8x8xf32>
    %24 = arith.subf %20, %23 : vector<8x8xf32>
    %25 = math.exp %24 : vector<8x8xf32>
    %cst_10 = arith.constant dense<0.000000e+00> : vector<8xf32>
    %26 = vector.multi_reduction <add>, %25, %cst_10 [1] : vector<8x8xf32> to vector<8xf32>
    %27 = vector.shape_cast %26 : vector<8xf32> to vector<8x1xf32>
    %28 = tpu.reciprocal %27 {approx = true} : vector<8x1xf32> -> vector<8x1xf32>
    %29 = vector.broadcast %28 : vector<8x1xf32> to vector<8x8xf32>
    %30 = arith.mulf %25, %29 : vector<8x8xf32>
    %31 = arith.truncf %30 : vector<8x8xf32> to vector<8x8xbf16>
    %32 = arith.truncf %13 : vector<8x64xf32> to vector<8x64xbf16>
    %cst_11 = arith.constant dense<0.000000e+00> : vector<8x64xf32>
    %33 = tpu.matmul %31, %32, %cst_11 {dimension_numbers = #tpu.dot_dimension_numbers<[1], [0], [0], [1], [0, 0, 1, 1], [], []>} : vector<8x8xbf16>, vector<8x64xbf16>, vector<8x64xf32> -> vector<8x64xf32>
    %34 = vector.extract_strided_slice %7 {offsets = [0, 64], sizes = [8, 64], strides = [1, 1]} : vector<8x768xf32> to vector<8x64xf32>
    %35 = vector.extract_strided_slice %7 {offsets = [0, 320], sizes = [8, 64], strides = [1, 1]} : vector<8x768xf32> to vector<8x64xf32>
    %36 = vector.extract_strided_slice %7 {offsets = [0, 576], sizes = [8, 64], strides = [1, 1]} : vector<8x768xf32> to vector<8x64xf32>
    %37 = arith.truncf %34 : vector<8x64xf32> to vector<8x64xbf16>
    %38 = arith.truncf %35 : vector<8x64xf32> to vector<8x64xbf16>
    %cst_12 = arith.constant dense<0.000000e+00> : vector<8x8xf32>
    %39 = tpu.matmul %37, %38, %cst_12 {dimension_numbers = #tpu.dot_dimension_numbers<[1], [1], [0], [0], [0, 0, 1, 0], [], []>} : vector<8x64xbf16>, vector<8x64xbf16>, vector<8x8xf32> -> vector<8x8xf32>
    %cst_13 = arith.constant 1.250000e-01 : f32
    %40 = vector.broadcast %cst_13 : f32 to vector<8x8xf32>
    %41 = arith.mulf %39, %40 : vector<8x8xf32>
    %cst_14 = arith.constant -1.000000e+30 : f32
    %42 = vector.broadcast %cst_14 : f32 to vector<8x8xf32>
    %43 = arith.select %10, %42, %41 : vector<8x8xi1>, vector<8x8xf32>
    %cst_15 = arith.constant dense<0xFF800000> : vector<8xf32>
    %44 = vector.multi_reduction <maximumf>, %43, %cst_15 [1] : vector<8x8xf32> to vector<8xf32>
    %45 = vector.shape_cast %44 : vector<8xf32> to vector<8x1xf32>
    %46 = vector.broadcast %45 : vector<8x1xf32> to vector<8x8xf32>
    %47 = arith.subf %43, %46 : vector<8x8xf32>
    %48 = math.exp %47 : vector<8x8xf32>
    %cst_16 = arith.constant dense<0.000000e+00> : vector<8xf32>
    %49 = vector.multi_reduction <add>, %48, %cst_16 [1] : vector<8x8xf32> to vector<8xf32>
    %50 = vector.shape_cast %49 : vector<8xf32> to vector<8x1xf32>
    %51 = tpu.reciprocal %50 {approx = true} : vector<8x1xf32> -> vector<8x1xf32>
    %52 = vector.broadcast %51 : vector<8x1xf32> to vector<8x8xf32>
    %53 = arith.mulf %48, %52 : vector<8x8xf32>
    %54 = arith.truncf %53 : vector<8x8xf32> to vector<8x8xbf16>
    %55 = arith.truncf %36 : vector<8x64xf32> to vector<8x64xbf16>
    %cst_17 = arith.constant dense<0.000000e+00> : vector<8x64xf32>
    %56 = tpu.matmul %54, %55, %cst_17 {dimension_numbers = #tpu.dot_dimension_numbers<[1], [0], [0], [1], [0, 0, 1, 1], [], []>} : vector<8x8xbf16>, vector<8x64xbf16>, vector<8x64xf32> -> vector<8x64xf32>
    %57 = vector.extract_strided_slice %7 {offsets = [0, 128], sizes = [8, 64], strides = [1, 1]} : vector<8x768xf32> to vector<8x64xf32>
    %58 = vector.extract_strided_slice %7 {offsets = [0, 384], sizes = [8, 64], strides = [1, 1]} : vector<8x768xf32> to vector<8x64xf32>
    %59 = vector.extract_strided_slice %7 {offsets = [0, 640], sizes = [8, 64], strides = [1, 1]} : vector<8x768xf32> to vector<8x64xf32>
    %60 = arith.truncf %57 : vector<8x64xf32> to vector<8x64xbf16>
    %61 = arith.truncf %58 : vector<8x64xf32> to vector<8x64xbf16>
    %cst_18 = arith.constant dense<0.000000e+00> : vector<8x8xf32>
    %62 = tpu.matmul %60, %61, %cst_18 {dimension_numbers = #tpu.dot_dimension_numbers<[1], [1], [0], [0], [0, 0, 1, 0], [], []>} : vector<8x64xbf16>, vector<8x64xbf16>, vector<8x8xf32> -> vector<8x8xf32>
    %cst_19 = arith.constant 1.250000e-01 : f32
    %63 = vector.broadcast %cst_19 : f32 to vector<8x8xf32>
    %64 = arith.mulf %62, %63 : vector<8x8xf32>
    %cst_20 = arith.constant -1.000000e+30 : f32
    %65 = vector.broadcast %cst_20 : f32 to vector<8x8xf32>
    %66 = arith.select %10, %65, %64 : vector<8x8xi1>, vector<8x8xf32>
    %cst_21 = arith.constant dense<0xFF800000> : vector<8xf32>
    %67 = vector.multi_reduction <maximumf>, %66, %cst_21 [1] : vector<8x8xf32> to vector<8xf32>
    %68 = vector.shape_cast %67 : vector<8xf32> to vector<8x1xf32>
    %69 = vector.broadcast %68 : vector<8x1xf32> to vector<8x8xf32>
    %70 = arith.subf %66, %69 : vector<8x8xf32>
    %71 = math.exp %70 : vector<8x8xf32>
    %cst_22 = arith.constant dense<0.000000e+00> : vector<8xf32>
    %72 = vector.multi_reduction <add>, %71, %cst_22 [1] : vector<8x8xf32> to vector<8xf32>
    %73 = vector.shape_cast %72 : vector<8xf32> to vector<8x1xf32>
    %74 = tpu.reciprocal %73 {approx = true} : vector<8x1xf32> -> vector<8x1xf32>
    %75 = vector.broadcast %74 : vector<8x1xf32> to vector<8x8xf32>
    %76 = arith.mulf %71, %75 : vector<8x8xf32>
    %77 = arith.truncf %76 : vector<8x8xf32> to vector<8x8xbf16>
    %78 = arith.truncf %59 : vector<8x64xf32> to vector<8x64xbf16>
    %cst_23 = arith.constant dense<0.000000e+00> : vector<8x64xf32>
    %79 = tpu.matmul %77, %78, %cst_23 {dimension_numbers = #tpu.dot_dimension_numbers<[1], [0], [0], [1], [0, 0, 1, 1], [], []>} : vector<8x8xbf16>, vector<8x64xbf16>, vector<8x64xf32> -> vector<8x64xf32>
    %80 = vector.extract_strided_slice %7 {offsets = [0, 192], sizes = [8, 64], strides = [1, 1]} : vector<8x768xf32> to vector<8x64xf32>
    %81 = vector.extract_strided_slice %7 {offsets = [0, 448], sizes = [8, 64], strides = [1, 1]} : vector<8x768xf32> to vector<8x64xf32>
    %82 = vector.extract_strided_slice %7 {offsets = [0, 704], sizes = [8, 64], strides = [1, 1]} : vector<8x768xf32> to vector<8x64xf32>
    %83 = arith.truncf %80 : vector<8x64xf32> to vector<8x64xbf16>
    %84 = arith.truncf %81 : vector<8x64xf32> to vector<8x64xbf16>
    %cst_24 = arith.constant dense<0.000000e+00> : vector<8x8xf32>
    %85 = tpu.matmul %83, %84, %cst_24 {dimension_numbers = #tpu.dot_dimension_numbers<[1], [1], [0], [0], [0, 0, 1, 0], [], []>} : vector<8x64xbf16>, vector<8x64xbf16>, vector<8x8xf32> -> vector<8x8xf32>
    %cst_25 = arith.constant 1.250000e-01 : f32
    %86 = vector.broadcast %cst_25 : f32 to vector<8x8xf32>
    %87 = arith.mulf %85, %86 : vector<8x8xf32>
    %cst_26 = arith.constant -1.000000e+30 : f32
    %88 = vector.broadcast %cst_26 : f32 to vector<8x8xf32>
    %89 = arith.select %10, %88, %87 : vector<8x8xi1>, vector<8x8xf32>
    %cst_27 = arith.constant dense<0xFF800000> : vector<8xf32>
    %90 = vector.multi_reduction <maximumf>, %89, %cst_27 [1] : vector<8x8xf32> to vector<8xf32>
    %91 = vector.shape_cast %90 : vector<8xf32> to vector<8x1xf32>
    %92 = vector.broadcast %91 : vector<8x1xf32> to vector<8x8xf32>
    %93 = arith.subf %89, %92 : vector<8x8xf32>
    %94 = math.exp %93 : vector<8x8xf32>
    %cst_28 = arith.constant dense<0.000000e+00> : vector<8xf32>
    %95 = vector.multi_reduction <add>, %94, %cst_28 [1] : vector<8x8xf32> to vector<8xf32>
    %96 = vector.shape_cast %95 : vector<8xf32> to vector<8x1xf32>
    %97 = tpu.reciprocal %96 {approx = true} : vector<8x1xf32> -> vector<8x1xf32>
    %98 = vector.broadcast %97 : vector<8x1xf32> to vector<8x8xf32>
    %99 = arith.mulf %94, %98 : vector<8x8xf32>
    %100 = arith.truncf %99 : vector<8x8xf32> to vector<8x8xbf16>
    %101 = arith.truncf %82 : vector<8x64xf32> to vector<8x64xbf16>
    %cst_29 = arith.constant dense<0.000000e+00> : vector<8x64xf32>
    %102 = tpu.matmul %100, %101, %cst_29 {dimension_numbers = #tpu.dot_dimension_numbers<[1], [0], [0], [1], [0, 0, 1, 1], [], []>} : vector<8x8xbf16>, vector<8x64xbf16>, vector<8x64xf32> -> vector<8x64xf32>
    %103 = tpu.concatenate %33, %56, %79, %102 in 1 : vector<8x64xf32>, vector<8x64xf32>, vector<8x64xf32>, vector<8x64xf32> -> vector<8x256xf32>
    %104 = arith.truncf %103 : vector<8x256xf32> to vector<8x256xbf16>
    %c0_30 = arith.constant 0 : index
    %c0_31 = arith.constant 0 : index
    %105 = vector.load %arg4[%c0_30, %c0_31] : memref<256x256xbf16, #tpu.memory_space<vmem>>, vector<256x256xbf16>
    %cst_32 = arith.constant dense<0.000000e+00> : vector<8x256xf32>
    %106 = tpu.matmul %104, %105, %cst_32 {dimension_numbers = #tpu.dot_dimension_numbers<[1], [0], [0], [1], [0, 0, 1, 1], [], []>} : vector<8x256xbf16>, vector<256x256xbf16>, vector<8x256xf32> -> vector<8x256xf32>
    %c0_33 = arith.constant 0 : index
    %c0_34 = arith.constant 0 : index
    %107 = vector.load %arg5[%c0_33, %c0_34] : memref<1x256xf32, #tpu.memory_space<vmem>>, vector<1x256xf32>
    %108 = vector.broadcast %107 : vector<1x256xf32> to vector<8x256xf32>
    %109 = arith.addf %106, %108 : vector<8x256xf32>
    %110 = arith.addf %1, %109 : vector<8x256xf32>
    %cst_35 = arith.constant dense<0.000000e+00> : vector<8xf32>
    %111 = vector.multi_reduction <add>, %110, %cst_35 [1] : vector<8x256xf32> to vector<8xf32>
    %112 = vector.shape_cast %111 : vector<8xf32> to vector<8x1xf32>
    %cst_36 = arith.constant 2.560000e+02 : f32
    %113 = vector.broadcast %cst_36 : f32 to vector<8x1xf32>
    %114 = arith.divf %112, %113 : vector<8x1xf32>
    %115 = vector.broadcast %114 : vector<8x1xf32> to vector<8x256xf32>
    %116 = arith.subf %110, %115 : vector<8x256xf32>
    %117 = arith.mulf %116, %116 : vector<8x256xf32>
    %cst_37 = arith.constant dense<0.000000e+00> : vector<8xf32>
    %118 = vector.multi_reduction <add>, %117, %cst_37 [1] : vector<8x256xf32> to vector<8xf32>
    %119 = vector.shape_cast %118 : vector<8xf32> to vector<8x1xf32>
    %cst_38 = arith.constant 2.560000e+02 : f32
    %120 = vector.broadcast %cst_38 : f32 to vector<8x1xf32>
    %121 = arith.divf %119, %120 : vector<8x1xf32>
    %122 = vector.broadcast %114 : vector<8x1xf32> to vector<8x256xf32>
    %123 = arith.subf %110, %122 : vector<8x256xf32>
    %cst_39 = arith.constant 9.99999974E-6 : f32
    %124 = vector.broadcast %cst_39 : f32 to vector<8x1xf32>
    %125 = arith.addf %121, %124 : vector<8x1xf32>
    %126 = math.rsqrt %125 : vector<8x1xf32>
    %127 = vector.broadcast %126 : vector<8x1xf32> to vector<8x256xf32>
    %128 = arith.mulf %123, %127 : vector<8x256xf32>
    %c0_40 = arith.constant 0 : index
    %c0_41 = arith.constant 0 : index
    %129 = vector.load %arg6[%c0_40, %c0_41] : memref<1x256xf32, #tpu.memory_space<vmem>>, vector<1x256xf32>
    %130 = vector.broadcast %129 : vector<1x256xf32> to vector<8x256xf32>
    %131 = arith.mulf %128, %130 : vector<8x256xf32>
    %c0_42 = arith.constant 0 : index
    %c0_43 = arith.constant 0 : index
    %132 = vector.load %arg7[%c0_42, %c0_43] : memref<1x256xf32, #tpu.memory_space<vmem>>, vector<1x256xf32>
    %133 = vector.broadcast %132 : vector<1x256xf32> to vector<8x256xf32>
    %134 = arith.addf %131, %133 : vector<8x256xf32>
    %c0_44 = arith.constant 0 : index
    %c0_45 = arith.constant 0 : index
    %c0_46 = arith.constant 0 : index
    %135 = vector.load %arg8[%c0_44, %c0_45, %c0_46] : memref<1x8x256xf32, #tpu.memory_space<vmem>>, vector<1x8x256xf32>
    %136 = vector.shape_cast %135 : vector<1x8x256xf32> to vector<8x256xf32>
    %137 = vector.shape_cast %134 : vector<8x256xf32> to vector<1x8x256xf32>
    tpu.vector_store %arg8[%c0_44, %c0_45, %c0_46], %137 {strides = array<i32>} : memref<1x8x256xf32, #tpu.memory_space<vmem>>, vector<1x8x256xf32>,
    return
  }
  func.func @transform_0(%arg0: i32) -> (i32, i32, i32) {
    %c0_i32 = arith.constant 0 : i32
    %c0_i32_0 = arith.constant 0 : i32
    %c0_i32_1 = arith.constant 0 : i32
    return %arg0, %c0_i32, %c0_i32_0 : i32, i32, i32
  }
  func.func @transform_1(%arg0: i32) -> (i32, i32) {
    %c0_i32 = arith.constant 0 : i32
    %c0_i32_0 = arith.constant 0 : i32
    %c0_i32_1 = arith.constant 0 : i32
    return %c0_i32, %c0_i32_0 : i32, i32
  }
  func.func @transform_2(%arg0: i32) -> (i32, i32) {
    %c0_i32 = arith.constant 0 : i32
    %c0_i32_0 = arith.constant 0 : i32
    %c0_i32_1 = arith.constant 0 : i32
    return %c0_i32, %c0_i32_0 : i32, i32
  }
  func.func @transform_3(%arg0: i32) -> (i32, i32) {
    %c0_i32 = arith.constant 0 : i32
    %c0_i32_0 = arith.constant 0 : i32
    %c0_i32_1 = arith.constant 0 : i32
    return %c0_i32, %c0_i32_0 : i32, i32
  }
  func.func @transform_4(%arg0: i32) -> (i32, i32) {
    %c0_i32 = arith.constant 0 : i32
    %c0_i32_0 = arith.constant 0 : i32
    %c0_i32_1 = arith.constant 0 : i32
    return %c0_i32, %c0_i32_0 : i32, i32
  }
  func.func @transform_5(%arg0: i32) -> (i32, i32) {
    %c0_i32 = arith.constant 0 : i32
    %c0_i32_0 = arith.constant 0 : i32
    %c0_i32_1 = arith.constant 0 : i32
    return %c0_i32, %c0_i32_0 : i32, i32
  }
  func.func @transform_6(%arg0: i32) -> (i32, i32) {
    %c0_i32 = arith.constant 0 : i32
    %c0_i32_0 = arith.constant 0 : i32
    %c0_i32_1 = arith.constant 0 : i32
    return %c0_i32, %c0_i32_0 : i32, i32
  }
  func.func @transform_7(%arg0: i32) -> (i32, i32, i32) {
    %c0_i32 = arith.constant 0 : i32
    %c0_i32_0 = arith.constant 0 : i32
    %c0_i32_1 = arith.constant 0 : i32
    return %arg0, %c0_i32, %c0_i32_0 : i32, i32, i32
  }
}

module attributes {stable_mosaic.version = 11 : i64} {
  func.func @_linear_kernel(%arg0: i32, %arg1: i32, %arg2: memref<16x256xbf16, #tpu.memory_space<vmem>>, %arg3: memref<256x512xbf16, #tpu.memory_space<vmem>>, %arg4: memref<1x512xf32, #tpu.memory_space<vmem>>, %arg5: memref<16x512xf32, #tpu.memory_space<vmem>>) attributes {dimension_semantics = [#tpu.dimension_semantics<parallel>, #tpu.dimension_semantics<parallel>], iteration_bounds = array<i64: 1, 2>, scalar_prefetch = 0 : i64, scratch_operands = 0 : i64, tpu.core_type = #tpu.core_type<tc>, window_params = [{transform_indices = @transform_0, window_bounds = array<i64: 16, 256>}, {transform_indices = @transform_1, window_bounds = array<i64: 256, 512>}, {transform_indices = @transform_2, window_bounds = array<i64: 1, 512>}, {transform_indices = @transform_3, window_bounds = array<i64: 16, 512>}]} {
    %c0 = arith.constant 0 : index
    %c0_0 = arith.constant 0 : index
    %0 = vector.load %arg2[%c0, %c0_0] : memref<16x256xbf16, #tpu.memory_space<vmem>>, vector<16x256xbf16>
    %c0_1 = arith.constant 0 : index
    %c0_2 = arith.constant 0 : index
    %1 = vector.load %arg3[%c0_1, %c0_2] : memref<256x512xbf16, #tpu.memory_space<vmem>>, vector<256x512xbf16>
    %cst = arith.constant dense<0.000000e+00> : vector<16x512xf32>
    %2 = tpu.matmul %0, %1, %cst {dimension_numbers = #tpu.dot_dimension_numbers<[1], [0], [0], [1], [0, 0, 1, 1], [], []>} : vector<16x256xbf16>, vector<256x512xbf16>, vector<16x512xf32> -> vector<16x512xf32>
    %c0_3 = arith.constant 0 : index
    %c0_4 = arith.constant 0 : index
    %3 = vector.load %arg4[%c0_3, %c0_4] : memref<1x512xf32, #tpu.memory_space<vmem>>, vector<1x512xf32>
    %4 = vector.broadcast %3 : vector<1x512xf32> to vector<16x512xf32>
    %5 = arith.addf %2, %4 : vector<16x512xf32>
    %c0_5 = arith.constant 0 : index
    %c0_6 = arith.constant 0 : index
    %6 = vector.load %arg5[%c0_5, %c0_6] : memref<16x512xf32, #tpu.memory_space<vmem>>, vector<16x512xf32>
    tpu.vector_store %arg5[%c0_5, %c0_6], %5 {strides = array<i32>} : memref<16x512xf32, #tpu.memory_space<vmem>>, vector<16x512xf32>,
    return
  }
  func.func @transform_0(%arg0: i32, %arg1: i32) -> (i32, i32) {
    %c0_i32 = arith.constant 0 : i32
    %c0_i32_0 = arith.constant 0 : i32
    return %arg0, %c0_i32 : i32, i32
  }
  func.func @transform_1(%arg0: i32, %arg1: i32) -> (i32, i32) {
    %c0_i32 = arith.constant 0 : i32
    %c0_i32_0 = arith.constant 0 : i32
    return %c0_i32, %arg1 : i32, i32
  }
  func.func @transform_2(%arg0: i32, %arg1: i32) -> (i32, i32) {
    %c0_i32 = arith.constant 0 : i32
    %c0_i32_0 = arith.constant 0 : i32
    return %c0_i32, %arg1 : i32, i32
  }
  func.func @transform_3(%arg0: i32, %arg1: i32) -> (i32, i32) {
    %c0_i32 = arith.constant 0 : i32
    return %arg0, %arg1 : i32, i32
  }
}

</mosaic_0001>

<llo_original>
// kernel: transformer_lm_forward.10
$region0: #{transformer_lm_forward.10}
  #allocation0 [shape = 'u32[]', space=smem, size = 0x4, offset = 0x4, fixed_abs, tag = 'smem constant byte address 0x4 - core index']
  #allocation1 [shape = 'u32[144,128]{1,0:T(1,128)}', space=vmem, size = 0x12000, scoped, tag = 'internal scratch']
  %s0 = inlined_call_operand.vmem [shape: f32[2,8,256], index: 0, kind: input, shape index: {}]
  %s1 = inlined_call_operand.vmem [shape: f32[8,256], index: 1, kind: input, shape index: {}]
  %s2 = inlined_call_operand.vmem [shape: f32[8,256], index: 2, kind: input, shape index: {}]
  %s3 = inlined_call_operand.hbm [shape: f32[1,256], index: 3, kind: input, shape index: {}]
  %s4 = inlined_call_operand.hbm [shape: f32[1,256], index: 4, kind: input, shape index: {}]
  %s5 = inlined_call_operand.vmem [shape: f32[2,8,256], index: 5, kind: output, shape index: {}]
  %s6 = sld [smem:[#allocation0]]
  $region61: #{transformer_lm_forward.10} parent=0
    _
  %s8 = ssub.s32 1, %s6
  %s9 = scalar_select 0, %s8, %s6
  $region1: #{transformer_lm_forward.10} parent=0
    #allocation2 [shape = 'u8[1024]{0}', space=vmem, size = 0x400, scoped, tag = 'input window, operand 3, single buffered']
    #allocation3 [shape = 's32[2]{0}', space=sflag, size = 0x8, scoped, tag = 'scoped memory for transformer_lm_forward.10']
    #allocation4 [shape = 'u8[1024]{0}', space=vmem, size = 0x400, scoped, tag = 'input window, operand 4, single buffered']
    #allocation5 [shape = 's32[1]{0}', space=sflag, size = 0x4, scoped, tag = 'scoped memory for transformer_lm_forward.10']
    %10 = vsyncpa [#allocation3], 0
    %11 = vsyncpa [#allocation5], 0
    loop: start=0, step=1, limit=4
    $region2: #{transformer_lm_forward.10} parent=1 // loop_pre_header
      _
    $region3: #{transformer_lm_forward.10} parent=1 // loop_header
      %s13 = sphi 0, %s17
      %p14 = scmp.ge.s32.totalorder %s13, 4
      %s23 = sphi 0, %s25
      %s26 = sphi 0, %s23
      %s27 = sphi 0, %s26
      %s43 = sphi 0, %s27
      %s47 = sphi 0, %s47
      %s49 = sphi 0, %s47
      %s50 = sphi 0, %s49
      %s64 = sphi 0, %s50
      %s68 = sphi 0, %s68
      %s70 = sphi 0, %s68
      %s71 = sphi 0, %s70
      %s85 = sphi 0, %s71
      %s89 = sphi 0, %s89
      %s91 = sphi 0, %s89
      %s92 = sphi 0, %s91
      %s106 = sphi 0, %s92
      %s110 = sphi 0, %s110
      %s112 = sphi 0, %s110
      %s113 = sphi 0, %s112
      %s127 = sphi 0, %s113
      %s133 = sphi 0, %s135
      %s136 = sphi 0, %s133
      %s137 = sphi 0, %s136
      %s153 = sphi 0, %s137
    $region4: #{transformer_lm_forward.10} parent=1 // loop_header_branch
      %16 = sbr.rel (%p14) target = $region8
    $region5: #{transformer_lm_forward.10} parent=1 // loop_body
      %s18 = ssub.s32 %s13, 1
      %s19 = ssub.s32 %s13, 2
      %s20 = sadd.s32 %s13, 1
      %s21 = ssub.s32 %s13, %s20
      %p22 = scmp.eq.s32.totalorder %s21, 0
      %s24 = sadd.s32 %s23, 1
      %s25 = scalar_select %p22, %s23, %s24
      %p28 = pneg %p22
      %p29 = scmp.eq.s32.totalorder %s13, 1
      %p30 = por %p28, %p29
      %p31 = scmp.ne.s32.totalorder %s23, %s26
      %p32 = scmp.eq.s32.totalorder %s13, 0
      %p33 = por %p31, %p32
      %p34 = scmp.ne.s32.totalorder %s23, %s26
      %p35 = scmp.eq.s32.totalorder %s18, 1
      %p36 = por %p34, %p35
      %p37 = scmp.ne.s32.totalorder %s26, %s27
      %p38 = scmp.eq.s32.totalorder %s18, 0
      %p39 = por %p37, %p38
      %p40 = scmp.ne.s32.totalorder %s26, %s27
      %p41 = scmp.eq.s32.totalorder %s19, 1
      %p42 = por %p40, %p41
      %p44 = scmp.ne.s32.totalorder %s27, %s43
      %p45 = scmp.eq.s32.totalorder %s19, 0
      %p46 = por %p44, %p45
      %s48 = sadd.s32 %s47, 1
      %p51 = scmp.eq.s32.totalorder %s13, 1
      %p52 = scmp.ne.s32.totalorder %s47, %s49
      %p53 = scmp.eq.s32.totalorder %s13, 0
      %p54 = por %p52, %p53
      %p55 = scmp.ne.s32.totalorder %s47, %s49
      %p56 = scmp.eq.s32.totalorder %s18, 1
      %p57 = por %p55, %p56
      %p58 = scmp.ne.s32.totalorder %s49, %s50
      %p59 = scmp.eq.s32.totalorder %s18, 0
      %p60 = por %p58, %p59
      %p61 = scmp.ne.s32.totalorder %s49, %s50
      %p62 = scmp.eq.s32.totalorder %s19, 1
      %p63 = por %p61, %p62
      %p65 = scmp.ne.s32.totalorder %s50, %s64
      %p66 = scmp.eq.s32.totalorder %s19, 0
      %p67 = por %p65, %p66
      %s69 = sadd.s32 %s68, 1
      %p72 = scmp.eq.s32.totalorder %s13, 1
      %p73 = scmp.ne.s32.totalorder %s68, %s70
      %p74 = scmp.eq.s32.totalorder %s13, 0
      %p75 = por %p73, %p74
      %p76 = scmp.ne.s32.totalorder %s68, %s70
      %p77 = scmp.eq.s32.totalorder %s18, 1
      %p78 = por %p76, %p77
      %p79 = scmp.ne.s32.totalorder %s70, %s71
      %p80 = scmp.eq.s32.totalorder %s18, 0
      %p81 = por %p79, %p80
      %p82 = scmp.ne.s32.totalorder %s70, %s71
      %p83 = scmp.eq.s32.totalorder %s19, 1
      %p84 = por %p82, %p83
      %p86 = scmp.ne.s32.totalorder %s71, %s85
      %p87 = scmp.eq.s32.totalorder %s19, 0
      %p88 = por %p86, %p87
      %s90 = sadd.s32 %s89, 1
      %p93 = scmp.eq.s32.totalorder %s13, 1
      %p94 = scmp.ne.s32.totalorder %s89, %s91
      %p95 = scmp.eq.s32.totalorder %s13, 0
      %p96 = por %p94, %p95
      %p97 = scmp.ne.s32.totalorder %s89, %s91
      %p98 = scmp.eq.s32.totalorder %s18, 1
      %p99 = por %p97, %p98
      %p100 = scmp.ne.s32.totalorder %s91, %s92
      %p101 = scmp.eq.s32.totalorder %s18, 0
      %p102 = por %p100, %p101
      %p103 = scmp.ne.s32.totalorder %s91, %s92
      %p104 = scmp.eq.s32.totalorder %s19, 1
      %p105 = por %p103, %p104
      %p107 = scmp.ne.s32.totalorder %s92, %s106
      %p108 = scmp.eq.s32.totalorder %s19, 0
      %p109 = por %p107, %p108
      %s111 = sadd.s32 %s110, 1
      %p114 = scmp.eq.s32.totalorder %s13, 1
      %p115 = scmp.ne.s32.totalorder %s110, %s112
      %p116 = scmp.eq.s32.totalorder %s13, 0
      %p117 = por %p115, %p116
      %p118 = scmp.ne.s32.totalorder %s110, %s112
      %p119 = scmp.eq.s32.totalorder %s18, 1
      %p120 = por %p118, %p119
      %p121 = scmp.ne.s32.totalorder %s112, %s113
      %p122 = scmp.eq.s32.totalorder %s18, 0
      %p123 = por %p121, %p122
      %p124 = scmp.ne.s32.totalorder %s112, %s113
      %p125 = scmp.eq.s32.totalorder %s19, 1
      %p126 = por %p124, %p125
      %p128 = scmp.ne.s32.totalorder %s113, %s127
      %p129 = scmp.eq.s32.totalorder %s19, 0
      %p130 = por %p128, %p129
      %s131 = ssub.s32 %s13, %s20
      %p132 = scmp.eq.s32.totalorder %s131, 0
      %s134 = sadd.s32 %s133, 1
      %s135 = scalar_select %p132, %s133, %s134
      %p138 = pneg %p132
      %p139 = scmp.eq.s32.totalorder %s13, 1
      %p140 = por %p138, %p139
      %p141 = scmp.ne.s32.totalorder %s133, %s136
      %p142 = scmp.eq.s32.totalorder %s13, 0
      %p143 = por %p141, %p142
      %p144 = scmp.ne.s32.totalorder %s133, %s136
      %p145 = scmp.eq.s32.totalorder %s18, 1
      %p146 = por %p144, %p145
      %p147 = scmp.ne.s32.totalorder %s136, %s137
      %p148 = scmp.eq.s32.totalorder %s18, 0
      %p149 = por %p147, %p148
      %p150 = scmp.ne.s32.totalorder %s136, %s137
      %p151 = scmp.eq.s32.totalorder %s19, 1
      %p152 = por %p150, %p151
      %p154 = scmp.ne.s32.totalorder %s137, %s153
      %p155 = scmp.eq.s32.totalorder %s19, 0
      %p156 = por %p154, %p155
      %p157 = scmp.le.s32.totalorder 1, %s13
      %p158 = scmp.lt.s32.totalorder %s13, 3
      %p159 = pnand %p157, %p158
      %p160 = pneg %p159
      // Predicated region
      $region9: #{transformer_lm_forward.10} parent=5 // pred_check
        _
      $region10: #{transformer_lm_forward.10} parent=5 // pred_check_branch
        %162 = sbr.rel (%p159) target = $region12
      $region11: #{transformer_lm_forward.10} parent=5 // pred_region
        %s163 = ssub.s32 %s13, 1
        // Predicated region
        $region13: #{transformer_lm_forward.10} parent=11 // pred_check
          %p164 = pneg %p60
        $region14: #{transformer_lm_forward.10} parent=11 // pred_check_branch
          %166 = sbr.rel (%p164) target = $region16
        $region15: #{transformer_lm_forward.10} parent=11 // pred_region
          _
        $region16: #{transformer_lm_forward.10} parent=11 // pred_fallthru
          _
        // Predicated region
        $region17: #{transformer_lm_forward.10} parent=11 // pred_check
          %p167 = pneg %p81
        $region18: #{transformer_lm_forward.10} parent=11 // pred_check_branch
          %169 = sbr.rel (%p167) target = $region20
        $region19: #{transformer_lm_forward.10} parent=11 // pred_region
          _
        $region20: #{transformer_lm_forward.10} parent=11 // pred_fallthru
          _
        // Predicated region
        $region21: #{transformer_lm_forward.10} parent=11 // pred_check
          %p170 = pneg %p102
        $region22: #{transformer_lm_forward.10} parent=11 // pred_check_branch
          %172 = sbr.rel (%p170) target = $region24
        $region23: #{transformer_lm_forward.10} parent=11 // pred_region
          %s174 = ssub.s32 32, 32
          %175 = vsyncadd [#allocation3], %s174
          %s177 = sshll.u32 [#allocation2], 4
          %s178 = int_to_ptr.vmem [resolvable:$true] %s177
          %180 = dma.hbm_to_vmem [thread:$0]  %s3, 32, %s178, [#allocation3]
        $region24: #{transformer_lm_forward.10} parent=11 // pred_fallthru
          _
        // Predicated region
        $region25: #{transformer_lm_forward.10} parent=11 // pred_check
          %p181 = pneg %p123
        $region26: #{transformer_lm_forward.10} parent=11 // pred_check_branch
          %183 = sbr.rel (%p181) target = $region28
        $region27: #{transformer_lm_forward.10} parent=11 // pred_region
          %s185 = ssub.s32 32, 32
          %186 = vsyncadd [#allocation5], %s185
          %s188 = sshll.u32 [#allocation4], 4
          %s189 = int_to_ptr.vmem [resolvable:$true] %s188
          %191 = dma.hbm_to_vmem [thread:$0]  %s4, 32, %s189, [#allocation5]
        $region28: #{transformer_lm_forward.10} parent=11 // pred_fallthru
          _
      $region12: #{transformer_lm_forward.10} parent=5 // pred_fallthru
        _
      %p192 = scmp.lt.s32.totalorder %s13, 2
      // Predicated region
      $region29: #{transformer_lm_forward.10} parent=5 // pred_check
        %p193 = pneg %p192
      $region30: #{transformer_lm_forward.10} parent=5 // pred_check_branch
        %195 = sbr.rel (%p193) target = $region32
      $region31: #{transformer_lm_forward.10} parent=5 // pred_region
        // Predicated region
        $region33: #{transformer_lm_forward.10} parent=31 // pred_check
          %p196 = pneg %p33
        $region34: #{transformer_lm_forward.10} parent=31 // pred_check_branch
          %198 = sbr.rel (%p196) target = $region36
        $region35: #{transformer_lm_forward.10} parent=31 // pred_region
          %p199 = scmp.lt.s32.totalorder %s13, 1
          %s200 = scalar_select %p199, %s13, 1
          %s201 = smul.addr %s200, 2
          %s202 = smul.addr %s201, 8
          %s203 = scalar_lea.vmem %s0, %s202
        $region36: #{transformer_lm_forward.10} parent=31 // pred_fallthru
          _
      $region32: #{transformer_lm_forward.10} parent=5 // pred_fallthru
        _
      %p204 = scmp.le.s32.totalorder 1, %s13
      %p205 = scmp.lt.s32.totalorder %s13, 3
      %p206 = pnand %p204, %p205
      %p207 = pneg %p206
      // Predicated region
      $region37: #{transformer_lm_forward.10} parent=5 // pred_check
        _
      $region38: #{transformer_lm_forward.10} parent=5 // pred_check_branch
        %209 = sbr.rel (%p206) target = $region40
      $region39: #{transformer_lm_forward.10} parent=5 // pred_region
        %s210 = ssub.s32 %s13, 1
        // Predicated region
        $region41: #{transformer_lm_forward.10} parent=39 // pred_check
          %p211 = pneg %p102
        $region42: #{transformer_lm_forward.10} parent=39 // pred_check_branch
          %213 = sbr.rel (%p211) target = $region44
        $region43: #{transformer_lm_forward.10} parent=39 // pred_region
          %214 = dma.done [#allocation3], 32
        $region44: #{transformer_lm_forward.10} parent=39 // pred_fallthru
          _
        // Predicated region
        $region45: #{transformer_lm_forward.10} parent=39 // pred_check
          %p215 = pneg %p123
        $region46: #{transformer_lm_forward.10} parent=39 // pred_check_branch
          %217 = sbr.rel (%p215) target = $region48
        $region47: #{transformer_lm_forward.10} parent=39 // pred_region
          %218 = dma.done [#allocation5], 32
        $region48: #{transformer_lm_forward.10} parent=39 // pred_fallthru
          _
        %p219 = scmp.lt.s32.totalorder %s18, 1
        %s220 = scalar_select %p219, %s18, 1
        %s221 = smul.addr %s220, 2
        %s222 = smul.addr %s221, 8
        %s223 = scalar_lea.vmem %s0, %s222
        %p224 = pneg %p39
        %p225 = pneg %p36
        %p226 = pneg %p60
        %p227 = pneg %p57
        %p228 = pneg %p81
        %p229 = pneg %p78
        %p230 = pneg %p102
        %p231 = pneg %p99
        %p232 = pneg %p123
        %p233 = pneg %p120
        %p234 = pneg %p149
        %p235 = pneg %p146
        %p236 = scmp.lt.s32.totalorder %s18, 1
        %s237 = scalar_select %p236, %s18, 1
        %s238 = smul.addr %s237, 2
        %s239 = smul.addr %s238, 8
        %s240 = scalar_lea.vmem %s5, %s239
        %p241 = scmp.lt.s32.totalorder %s18, 1
        %s242 = scalar_select %p241, %s18, 1
        %s243 = smul.addr %s242, 2
        %s244 = smul.addr %s243, 8
        %s245 = scalar_lea.vmem %s0, %s244
        %p246 = scmp.lt.s32.totalorder %s18, 1
        %s247 = scalar_select %p246, %s18, 1
        %s248 = smul.addr %s247, 2
        %s249 = smul.addr %s248, 8
        %s250 = scalar_lea.vmem %s5, %s249
        %v251 = vld [vmem:[%s245] sm:$0xff]
        %v252 = vld [vmem:[%s245 + $0x8] sm:$0xff]
        %v253 = vld [vmem:[%s1] sm:$0xff]
        %v254 = vld [vmem:[%s1 + $0x8] sm:$0xff]
        %v255 = vadd.f32 %v251, %v253
        %v256 = vadd.f32 %v252, %v254
        %v257 = vadd.f32 %v255, %v256
        %258 = vadd.xlane.f32.xlu0 %v257
        %v259 = vpop.xlane.xlu0 %258
        %v260 = vrcp.pop 256.0
        %v261 = vmul.f32 %v259, %v260
        %v262 = vsub.f32 %v255, %v261
        %v263 = vsub.f32 %v256, %v261
        %v264 = vmul.f32 %v262, %v262
        %v265 = vmul.f32 %v263, %v263
        %v266 = vadd.f32 %v264, %v265
        %267 = vadd.xlane.f32.xlu0 %v266
        %v268 = vpop.xlane.xlu0 %267
        %v269 = vmul.f32 %v268, %v260
        %v270 = vadd.f32 %v269, 1e-12
        %v271 = vrsqrt.pop %v270
        %v272 = vmul.f32 %v262, %v271
        %v273 = vmul.f32 %v263, %v271
        %v274 = vld [vmem:[#allocation2] sm:$0x3]
        %v276 = vlaneseq
        %v277 = vshrl.u32 %v276, 7
        %v278 = vsub.s32 0, %v277
        %v279 = vrot.slane %v274, %v278
        %v280 = vlaneseq
        %v281 = vshrl.u32 %v280, 7
        %v282 = vsub.s32 1, %v281
        %v283 = vrot.slane %v274, %v282
        %v286 = vmul.f32 %v272, %v279
        %v287 = vmul.f32 %v273, %v283
        %v288 = vld [vmem:[#allocation4] sm:$0x3]
        %v290 = vlaneseq
        %v291 = vshrl.u32 %v290, 7
        %v292 = vsub.s32 0, %v291
        %v293 = vrot.slane %v288, %v292
        %v294 = vlaneseq
        %v295 = vshrl.u32 %v294, 7
        %v296 = vsub.s32 1, %v295
        %v297 = vrot.slane %v288, %v296
        %v300 = vadd.f32 %v286, %v293
        %v301 = vadd.f32 %v287, %v297
        %v302 = vld [vmem:[%s2] sm:$0xff]
        %v303 = vld [vmem:[%s2 + $0x8] sm:$0xff]
        %v304 = vadd.f32 %v300, %v302
        %v305 = vadd.f32 %v301, %v303
        %306 = vst [vmem:[%s250] sm:$0xff] %v304
        %307 = vst [vmem:[%s250 + $0x8] sm:$0xff] %v305
        %p308 = scmp.lt.s32.totalorder %s18, 1
        %s309 = scalar_select %p308, %s18, 1
        %s310 = smul.addr %s309, 2
        %s311 = smul.addr %s310, 8
        %s312 = scalar_lea.vmem %s5, %s311
        // Predicated region
        $region49: #{transformer_lm_forward.10} parent=39 // pred_check
          %p313 = pneg %p146
        $region50: #{transformer_lm_forward.10} parent=39 // pred_check_branch
          %315 = sbr.rel (%p313) target = $region52
        $region51: #{transformer_lm_forward.10} parent=39 // pred_region
          _
        $region52: #{transformer_lm_forward.10} parent=39 // pred_fallthru
          _
      $region40: #{transformer_lm_forward.10} parent=5 // pred_fallthru
        _
      %p316 = scmp.le.s32.totalorder 2, %s13
      // Predicated region
      $region53: #{transformer_lm_forward.10} parent=5 // pred_check
        %p317 = pneg %p316
      $region54: #{transformer_lm_forward.10} parent=5 // pred_check_branch
        %319 = sbr.rel (%p317) target = $region56
      $region55: #{transformer_lm_forward.10} parent=5 // pred_region
        %s320 = ssub.s32 %s13, 2
        // Predicated region
        $region57: #{transformer_lm_forward.10} parent=55 // pred_check
          %p321 = pneg %p152
        $region58: #{transformer_lm_forward.10} parent=55 // pred_check_branch
          %323 = sbr.rel (%p321) target = $region60
        $region59: #{transformer_lm_forward.10} parent=55 // pred_region
          %p324 = scmp.lt.s32.totalorder %s19, 1
          %s325 = scalar_select %p324, %s19, 1
          %s326 = smul.addr %s325, 2
          %s327 = smul.addr %s326, 8
          %s328 = scalar_lea.vmem %s5, %s327
        $region60: #{transformer_lm_forward.10} parent=55 // pred_fallthru
          _
      $region56: #{transformer_lm_forward.10} parent=5 // pred_fallthru
        _
    $region6: #{transformer_lm_forward.10} parent=1 // loop_footer
      %s17 = sadd.s32 1, %s13
    $region7: #{transformer_lm_forward.10} parent=1 // loop_footer_branch
      %12 = sbr.rel target = $region3
    $region8: #{transformer_lm_forward.10} parent=1 // loop_exit
      _
    %329 = vsyncpa [#allocation3], 1
    %s330 = scalar_lea.sflag [#allocation3], 1
    %331 = vsyncpa %s330, 1
    %332 = vsyncpa [#allocation5], 1

// kernel: transformer_lm_forward.12
$region0: #{transformer_lm_forward.12}
  #allocation0 [shape = 'u32[]', space=smem, size = 0x4, offset = 0x4, fixed_abs, tag = 'smem constant byte address 0x4 - core index']
  #allocation1 [shape = 'u32[144,128]{1,0:T(1,128)}', space=vmem, size = 0x12000, scoped, tag = 'internal scratch']
  %s0 = inlined_call_operand.vmem [shape: f32[16,256], index: 0, kind: input, shape index: {}]
  %s1 = inlined_call_operand.vmem [shape: bf16[256,512], index: 1, kind: input, shape index: {}]
  %s2 = inlined_call_operand.vmem [shape: f32[1,512], index: 2, kind: input, shape index: {}]
  %s3 = inlined_call_operand.vmem [shape: bf16[512,256], index: 3, kind: input, shape index: {}]
  %s4 = inlined_call_operand.vmem [shape: f32[1,256], index: 4, kind: input, shape index: {}]
  %s5 = inlined_call_operand.vmem [shape: f32[1,256], index: 5, kind: input, shape index: {}]
  %s6 = inlined_call_operand.vmem [shape: f32[1,256], index: 6, kind: input, shape index: {}]
  %s7 = inlined_call_operand.vmem [shape: f32[16,256], index: 7, kind: output, shape index: {}]
  %s8 = sld [smem:[#allocation0]]
  $region38: #{transformer_lm_forward.12} parent=0
    _
  %s10 = ssub.s32 1, %s8
  %s11 = scalar_select 0, %s10, %s8
  // Predicated region
  $region2: #{transformer_lm_forward.12} parent=0 // pred_check
    _
  $region3: #{transformer_lm_forward.12} parent=0 // pred_check_branch
    %13 = sbr.rel (0) target = $region5
  $region4: #{transformer_lm_forward.12} parent=0 // pred_region
    _
  $region5: #{transformer_lm_forward.12} parent=0 // pred_fallthru
    _
  // Predicated region
  $region6: #{transformer_lm_forward.12} parent=0 // pred_check
    _
  $region7: #{transformer_lm_forward.12} parent=0 // pred_check_branch
    %15 = sbr.rel (0) target = $region9
  $region8: #{transformer_lm_forward.12} parent=0 // pred_region
    _
  $region9: #{transformer_lm_forward.12} parent=0 // pred_fallthru
    _
  // Predicated region
  $region10: #{transformer_lm_forward.12} parent=0 // pred_check
    _
  $region11: #{transformer_lm_forward.12} parent=0 // pred_check_branch
    %17 = sbr.rel (0) target = $region13
  $region12: #{transformer_lm_forward.12} parent=0 // pred_region
    _
  $region13: #{transformer_lm_forward.12} parent=0 // pred_fallthru
    _
  // Predicated region
  $region14: #{transformer_lm_forward.12} parent=0 // pred_check
    _
  $region15: #{transformer_lm_forward.12} parent=0 // pred_check_branch
    %19 = sbr.rel (0) target = $region17
  $region16: #{transformer_lm_forward.12} parent=0 // pred_region
    _
  $region17: #{transformer_lm_forward.12} parent=0 // pred_fallthru
    _
  // Predicated region
  $region18: #{transformer_lm_forward.12} parent=0 // pred_check
    _
  $region19: #{transformer_lm_forward.12} parent=0 // pred_check_branch
    %21 = sbr.rel (0) target = $region21
  $region20: #{transformer_lm_forward.12} parent=0 // pred_region
    _
  $region21: #{transformer_lm_forward.12} parent=0 // pred_fallthru
    _
  // Predicated region
  $region22: #{transformer_lm_forward.12} parent=0 // pred_check
    _
  $region23: #{transformer_lm_forward.12} parent=0 // pred_check_branch
    %23 = sbr.rel (0) target = $region25
  $region24: #{transformer_lm_forward.12} parent=0 // pred_region
    _
  $region25: #{transformer_lm_forward.12} parent=0 // pred_fallthru
    _
  // Predicated region
  $region26: #{transformer_lm_forward.12} parent=0 // pred_check
    _
  $region27: #{transformer_lm_forward.12} parent=0 // pred_check_branch
    %25 = sbr.rel (0) target = $region29
  $region28: #{transformer_lm_forward.12} parent=0 // pred_region
    _
  $region29: #{transformer_lm_forward.12} parent=0 // pred_fallthru
    _
  %v26 = vld [vmem:[%s0] sm:$0xff]
  %v27 = vld [vmem:[%s0 + $0x8] sm:$0xff]
  %v28 = vld [vmem:[%s0 + $0x10] sm:$0xff]
  %v29 = vld [vmem:[%s0 + $0x18] sm:$0xff]
  %v30 = vpack.c.bf16 %v28, %v26
  %v31 = vpack.c.bf16 %v29, %v27
  %v32 = vld [vmem:[%s1] sm:$0xff]
  %v33 = vld [vmem:[%s1 + $0x8] sm:$0xff]
  %v34 = vld [vmem:[%s1 + $0x10] sm:$0xff]
  %v35 = vld [vmem:[%s1 + $0x18] sm:$0xff]
  %v36 = vld [vmem:[%s1 + $0x20] sm:$0xff]
  %v37 = vld [vmem:[%s1 + $0x28] sm:$0xff]
  %v38 = vld [vmem:[%s1 + $0x30] sm:$0xff]
  %v39 = vld [vmem:[%s1 + $0x38] sm:$0xff]
  %v40 = vld [vmem:[%s1 + $0x40] sm:$0xff]
  %v41 = vld [vmem:[%s1 + $0x48] sm:$0xff]
  %v42 = vld [vmem:[%s1 + $0x50] sm:$0xff]
  %v43 = vld [vmem:[%s1 + $0x58] sm:$0xff]
  %v44 = vld [vmem:[%s1 + $0x60] sm:$0xff]
  %v45 = vld [vmem:[%s1 + $0x68] sm:$0xff]
  %v46 = vld [vmem:[%s1 + $0x70] sm:$0xff]
  %v47 = vld [vmem:[%s1 + $0x78] sm:$0xff]
  %v48 = vld [vmem:[%s1 + $0x80] sm:$0xff]
  %v49 = vld [vmem:[%s1 + $0x88] sm:$0xff]
  %v50 = vld [vmem:[%s1 + $0x90] sm:$0xff]
  %v51 = vld [vmem:[%s1 + $0x98] sm:$0xff]
  %v52 = vld [vmem:[%s1 + $0xa0] sm:$0xff]
  %v53 = vld [vmem:[%s1 + $0xa8] sm:$0xff]
  %v54 = vld [vmem:[%s1 + $0xb0] sm:$0xff]
  %v55 = vld [vmem:[%s1 + $0xb8] sm:$0xff]
  %v56 = vld [vmem:[%s1 + $0xc0] sm:$0xff]
  %v57 = vld [vmem:[%s1 + $0xc8] sm:$0xff]
  %v58 = vld [vmem:[%s1 + $0xd0] sm:$0xff]
  %v59 = vld [vmem:[%s1 + $0xd8] sm:$0xff]
  %v60 = vld [vmem:[%s1 + $0xe0] sm:$0xff]
  %v61 = vld [vmem:[%s1 + $0xe8] sm:$0xff]
  %v62 = vld [vmem:[%s1 + $0xf0] sm:$0xff]
  %v63 = vld [vmem:[%s1 + $0xf8] sm:$0xff]
  %v64 = vld [vmem:[%s1 + $0x100] sm:$0xff]
  %v65 = vld [vmem:[%s1 + $0x108] sm:$0xff]
  %v66 = vld [vmem:[%s1 + $0x110] sm:$0xff]
  %v67 = vld [vmem:[%s1 + $0x118] sm:$0xff]
  %v68 = vld [vmem:[%s1 + $0x120] sm:$0xff]
  %v69 = vld [vmem:[%s1 + $0x128] sm:$0xff]
  %v70 = vld [vmem:[%s1 + $0x130] sm:$0xff]
  %v71 = vld [vmem:[%s1 + $0x138] sm:$0xff]
  %v72 = vld [vmem:[%s1 + $0x140] sm:$0xff]
  %v73 = vld [vmem:[%s1 + $0x148] sm:$0xff]
  %v74 = vld [vmem:[%s1 + $0x150] sm:$0xff]
  %v75 = vld [vmem:[%s1 + $0x158] sm:$0xff]
  %v76 = vld [vmem:[%s1 + $0x160] sm:$0xff]
  %v77 = vld [vmem:[%s1 + $0x168] sm:$0xff]
  %v78 = vld [vmem:[%s1 + $0x170] sm:$0xff]
  %v79 = vld [vmem:[%s1 + $0x178] sm:$0xff]
  %v80 = vld [vmem:[%s1 + $0x180] sm:$0xff]
  %v81 = vld [vmem:[%s1 + $0x188] sm:$0xff]
  %v82 = vld [vmem:[%s1 + $0x190] sm:$0xff]
  %v83 = vld [vmem:[%s1 + $0x198] sm:$0xff]
  %v84 = vld [vmem:[%s1 + $0x1a0] sm:$0xff]
  %v85 = vld [vmem:[%s1 + $0x1a8] sm:$0xff]
  %v86 = vld [vmem:[%s1 + $0x1b0] sm:$0xff]
  %v87 = vld [vmem:[%s1 + $0x1b8] sm:$0xff]
  %v88 = vld [vmem:[%s1 + $0x1c0] sm:$0xff]
  %v89 = vld [vmem:[%s1 + $0x1c8] sm:$0xff]
  %v90 = vld [vmem:[%s1 + $0x1d0] sm:$0xff]
  %v91 = vld [vmem:[%s1 + $0x1d8] sm:$0xff]
  %v92 = vld [vmem:[%s1 + $0x1e0] sm:$0xff]
  %v93 = vld [vmem:[%s1 + $0x1e8] sm:$0xff]
  %v94 = vld [vmem:[%s1 + $0x1f0] sm:$0xff]
  %v95 = vld [vmem:[%s1 + $0x1f8] sm:$0xff]
  %v96 = vld [vmem:[%s2] sm:$0xf]
  %v98 = vlaneseq
  %v99 = vshrl.u32 %v98, 7
  %v100 = vsub.s32 0, %v99
  %v101 = vrot.slane %v96, %v100
  %v102 = vlaneseq
  %v103 = vshrl.u32 %v102, 7
  %v104 = vsub.s32 1, %v103
  %v105 = vrot.slane %v96, %v104
  %v106 = vlaneseq
  %v107 = vshrl.u32 %v106, 7
  %v108 = vsub.s32 2, %v107
  %v109 = vrot.slane %v96, %v108
  %v110 = vlaneseq
  %v111 = vshrl.u32 %v110, 7
  %v112 = vsub.s32 3, %v111
  %v113 = vrot.slane %v96, %v112
  %v182 = vunpack.c.l.b16 %v32
  %v183 = vunpack.c.h.b16 %v32
  %v184 = vunpack.c.l.b16 %v33
  %v185 = vunpack.c.h.b16 %v33
  %v186 = vunpack.c.l.b16 %v34
  %v187 = vunpack.c.h.b16 %v34
  %v188 = vunpack.c.l.b16 %v35
  %v189 = vunpack.c.h.b16 %v35
  %v190 = vunpack.c.l.b16 %v36
  %v191 = vunpack.c.h.b16 %v36
  %v192 = vunpack.c.l.b16 %v37
  %v193 = vunpack.c.h.b16 %v37
  %v194 = vunpack.c.l.b16 %v38
  %v195 = vunpack.c.h.b16 %v38
  %v196 = vunpack.c.l.b16 %v39
  %v197 = vunpack.c.h.b16 %v39
  %v198 = vunpack.c.l.b16 %v40
  %v199 = vunpack.c.h.b16 %v40
  %v200 = vunpack.c.l.b16 %v41
  %v201 = vunpack.c.h.b16 %v41
  %v202 = vunpack.c.l.b16 %v42
  %v203 = vunpack.c.h.b16 %v42
  %v204 = vunpack.c.l.b16 %v43
  %v205 = vunpack.c.h.b16 %v43
  %v206 = vunpack.c.l.b16 %v44
  %v207 = vunpack.c.h.b16 %v44
  %v208 = vunpack.c.l.b16 %v45
  %v209 = vunpack.c.h.b16 %v45
  %v210 = vunpack.c.l.b16 %v46
  %v211 = vunpack.c.h.b16 %v46
  %v212 = vunpack.c.l.b16 %v47
  %v213 = vunpack.c.h.b16 %v47
  %v214 = vunpack.c.l.b16 %v48
  %v215 = vunpack.c.h.b16 %v48
  %v216 = vunpack.c.l.b16 %v49
  %v217 = vunpack.c.h.b16 %v49
  %v218 = vunpack.c.l.b16 %v50
  %v219 = vunpack.c.h.b16 %v50
  %v220 = vunpack.c.l.b16 %v51
  %v221 = vunpack.c.h.b16 %v51
  %v222 = vunpack.c.l.b16 %v52
  %v223 = vunpack.c.h.b16 %v52
  %v224 = vunpack.c.l.b16 %v53
  %v225 = vunpack.c.h.b16 %v53
  %v226 = vunpack.c.l.b16 %v54
  %v227 = vunpack.c.h.b16 %v54
  %v228 = vunpack.c.l.b16 %v55
  %v229 = vunpack.c.h.b16 %v55
  %v230 = vunpack.c.l.b16 %v56
  %v231 = vunpack.c.h.b16 %v56
  %v232 = vunpack.c.l.b16 %v57
  %v233 = vunpack.c.h.b16 %v57
  %v234 = vunpack.c.l.b16 %v58
  %v235 = vunpack.c.h.b16 %v58
  %v236 = vunpack.c.l.b16 %v59
  %v237 = vunpack.c.h.b16 %v59
  %v238 = vunpack.c.l.b16 %v60
  %v239 = vunpack.c.h.b16 %v60
  %v240 = vunpack.c.l.b16 %v61
  %v241 = vunpack.c.h.b16 %v61
  %v242 = vunpack.c.l.b16 %v62
  %v243 = vunpack.c.h.b16 %v62
  %v244 = vunpack.c.l.b16 %v63
  %v245 = vunpack.c.h.b16 %v63
  %v246 = vunpack.c.l.b16 %v64
  %v247 = vunpack.c.h.b16 %v64
  %v248 = vunpack.c.l.b16 %v65
  %v249 = vunpack.c.h.b16 %v65
  %v250 = vunpack.c.l.b16 %v66
  %v251 = vunpack.c.h.b16 %v66
  %v252 = vunpack.c.l.b16 %v67
  %v253 = vunpack.c.h.b16 %v67
  %v254 = vunpack.c.l.b16 %v68
  %v255 = vunpack.c.h.b16 %v68
  %v256 = vunpack.c.l.b16 %v69
  %v257 = vunpack.c.h.b16 %v69
  %v258 = vunpack.c.l.b16 %v70
  %v259 = vunpack.c.h.b16 %v70
  %v260 = vunpack.c.l.b16 %v71
  %v261 = vunpack.c.h.b16 %v71
  %v262 = vunpack.c.l.b16 %v72
  %v263 = vunpack.c.h.b16 %v72
  %v264 = vunpack.c.l.b16 %v73
  %v265 = vunpack.c.h.b16 %v73
  %v266 = vunpack.c.l.b16 %v74
  %v267 = vunpack.c.h.b16 %v74
  %v268 = vunpack.c.l.b16 %v75
  %v269 = vunpack.c.h.b16 %v75
  %v270 = vunpack.c.l.b16 %v76
  %v271 = vunpack.c.h.b16 %v76
  %v272 = vunpack.c.l.b16 %v77
  %v273 = vunpack.c.h.b16 %v77
  %v274 = vunpack.c.l.b16 %v78
  %v275 = vunpack.c.h.b16 %v78
  %v276 = vunpack.c.l.b16 %v79
  %v277 = vunpack.c.h.b16 %v79
  %v278 = vunpack.c.l.b16 %v80
  %v279 = vunpack.c.h.b16 %v80
  %v280 = vunpack.c.l.b16 %v81
  %v281 = vunpack.c.h.b16 %v81
  %v282 = vunpack.c.l.b16 %v82
  %v283 = vunpack.c.h.b16 %v82
  %v284 = vunpack.c.l.b16 %v83
  %v285 = vunpack.c.h.b16 %v83
  %v286 = vunpack.c.l.b16 %v84
  %v287 = vunpack.c.h.b16 %v84
  %v288 = vunpack.c.l.b16 %v85
  %v289 = vunpack.c.h.b16 %v85
  %v290 = vunpack.c.l.b16 %v86
  %v291 = vunpack.c.h.b16 %v86
  %v292 = vunpack.c.l.b16 %v87
  %v293 = vunpack.c.h.b16 %v87
  %v294 = vunpack.c.l.b16 %v88
  %v295 = vunpack.c.h.b16 %v88
  %v296 = vunpack.c.l.b16 %v89
  %v297 = vunpack.c.h.b16 %v89
  %v298 = vunpack.c.l.b16 %v90
  %v299 = vunpack.c.h.b16 %v90
  %v300 = vunpack.c.l.b16 %v91
  %v301 = vunpack.c.h.b16 %v91
  %v302 = vunpack.c.l.b16 %v92
  %v303 = vunpack.c.h.b16 %v92
  %v304 = vunpack.c.l.b16 %v93
  %v305 = vunpack.c.h.b16 %v93
  %v306 = vunpack.c.l.b16 %v94
  %v307 = vunpack.c.h.b16 %v94
  %v308 = vunpack.c.l.b16 %v95
  %v309 = vunpack.c.h.b16 %v95
  %v310 = vpack.c.b16 %v186, %v182
  %v311 = vpack.c.b16 %v187, %v183
  %v312 = vpack.c.b16 %v188, %v184
  %v313 = vpack.c.b16 %v189, %v185
  %v314 = vpack.c.b16 %v194, %v190
  %v315 = vpack.c.b16 %v195, %v191
  %v316 = vpack.c.b16 %v196, %v192
  %v317 = vpack.c.b16 %v197, %v193
  %v318 = vpack.c.b16 %v202, %v198
  %v319 = vpack.c.b16 %v203, %v199
  %v320 = vpack.c.b16 %v204, %v200
  %v321 = vpack.c.b16 %v205, %v201
  %v322 = vpack.c.b16 %v210, %v206
  %v323 = vpack.c.b16 %v211, %v207
  %v324 = vpack.c.b16 %v212, %v208
  %v325 = vpack.c.b16 %v213, %v209
  %v326 = vpack.c.b16 %v218, %v214
  %v327 = vpack.c.b16 %v219, %v215
  %v328 = vpack.c.b16 %v220, %v216
  %v329 = vpack.c.b16 %v221, %v217
  %v330 = vpack.c.b16 %v226, %v222
  %v331 = vpack.c.b16 %v227, %v223
  %v332 = vpack.c.b16 %v228, %v224
  %v333 = vpack.c.b16 %v229, %v225
  %v334 = vpack.c.b16 %v234, %v230
  %v335 = vpack.c.b16 %v235, %v231
  %v336 = vpack.c.b16 %v236, %v232
  %v337 = vpack.c.b16 %v237, %v233
  %v338 = vpack.c.b16 %v242, %v238
  %v339 = vpack.c.b16 %v243, %v239
  %v340 = vpack.c.b16 %v244, %v240
  %v341 = vpack.c.b16 %v245, %v241
  %v342 = vpack.c.b16 %v250, %v246
  %v343 = vpack.c.b16 %v251, %v247
  %v344 = vpack.c.b16 %v252, %v248
  %v345 = vpack.c.b16 %v253, %v249
  %v346 = vpack.c.b16 %v258, %v254
  %v347 = vpack.c.b16 %v259, %v255
  %v348 = vpack.c.b16 %v260, %v256
  %v349 = vpack.c.b16 %v261, %v257
  %v350 = vpack.c.b16 %v266, %v262
  %v351 = vpack.c.b16 %v267, %v263
  %v352 = vpack.c.b16 %v268, %v264
  %v353 = vpack.c.b16 %v269, %v265
  %v354 = vpack.c.b16 %v274, %v270
  %v355 = vpack.c.b16 %v275, %v271
  %v356 = vpack.c.b16 %v276, %v272
  %v357 = vpack.c.b16 %v277, %v273
  %v358 = vpack.c.b16 %v282, %v278
  %v359 = vpack.c.b16 %v283, %v279
  %v360 = vpack.c.b16 %v284, %v280
  %v361 = vpack.c.b16 %v285, %v281
  %v362 = vpack.c.b16 %v290, %v286
  %v363 = vpack.c.b16 %v291, %v287
  %v364 = vpack.c.b16 %v292, %v288
  %v365 = vpack.c.b16 %v293, %v289
  %v366 = vpack.c.b16 %v298, %v294
  %v367 = vpack.c.b16 %v299, %v295
  %v368 = vpack.c.b16 %v300, %v296
  %v369 = vpack.c.b16 %v301, %v297
  %v370 = vpack.c.b16 %v306, %v302
  %v371 = vpack.c.b16 %v307, %v303
  %v372 = vpack.c.b16 %v308, %v304
  %v373 = vpack.c.b16 %v309, %v305
  %438 = vmatprep.subr.bf16.mxu0 %v311
  %439 = vmatpush1.bf16.msra.mxu0 %v310
  %440 = vmatprep.subr.bf16.mxu0 %v315
  %441 = vmatpush1.bf16.msra.mxu0 %v314
  %442 = vmatprep.subr.bf16.mxu0 %v319
  %443 = vmatpush1.bf16.msra.mxu0 %v318
  %444 = vmatprep.subr.bf16.mxu0 %v323
  %445 = vmatpush1.bf16.msra.mxu0 %v322
  %446 = vmatprep.subr.bf16.mxu0 %v327
  %447 = vmatpush1.bf16.msra.mxu0 %v326
  %448 = vmatprep.subr.bf16.mxu0 %v331
  %449 = vmatpush1.bf16.msra.mxu0 %v330
  %450 = vmatprep.subr.bf16.mxu0 %v335
  %451 = vmatpush1.bf16.msra.mxu0 %v334
  %452 = vmatprep.subr.bf16.mxu0 %v339
  %453 = vmatpush1.bf16.msra.mxu0 %v338
  %454 = vmatprep.subr.bf16.mxu0 %v343
  %455 = vmatpush1.bf16.msra.mxu0 %v342
  %456 = vmatprep.subr.bf16.mxu0 %v347
  %457 = vmatpush1.bf16.msra.mxu0 %v346
  %458 = vmatprep.subr.bf16.mxu0 %v351
  %459 = vmatpush1.bf16.msra.mxu0 %v350
  %460 = vmatprep.subr.bf16.mxu0 %v355
  %461 = vmatpush1.bf16.msra.mxu0 %v354
  %462 = vmatprep.subr.bf16.mxu0 %v359
  %463 = vmatpush1.bf16.msra.mxu0 %v358
  %464 = vmatprep.subr.bf16.mxu0 %v363
  %465 = vmatpush1.bf16.msra.mxu0 %v362
  %466 = vmatprep.subr.bf16.mxu0 %v367
  %467 = vmatpush1.bf16.msra.mxu0 %v366
  %468 = vmatprep.subr.bf16.mxu0 %v371
  %469 = vmatpush1.bf16.msra.mxu0 %v370
  %470 = vmatprep.mubr.bf16.mxu0 %v31
  %471 = vmatmul.mubr.bf16.gmra.mrb[0].mxu0 %v30
  %v472 = vpop.f32.mrb[0].mxu0
  %v473 = vadd.f32 %v101, %v472
  %v474 = vpop.f32.mrb[0].mxu0
  %v475 = vadd.f32 %v105, %v474
  %v476 = vpop.f32.mrb[0].mxu0
  %v477 = vadd.f32 %v101, %v476
  %v478 = vpop.f32.mrb[0].mxu0
  %v479 = vadd.f32 %v105, %v478
  %480 = vdwg.mxu0
  %481 = vmatprep.subr.bf16.mxu0 %v313
  %482 = vmatpush1.bf16.msra.mxu0 %v312
  %483 = vmatprep.subr.bf16.mxu0 %v317
  %484 = vmatpush1.bf16.msra.mxu0 %v316
  %485 = vmatprep.subr.bf16.mxu0 %v321
  %486 = vmatpush1.bf16.msra.mxu0 %v320
  %487 = vmatprep.subr.bf16.mxu0 %v325
  %488 = vmatpush1.bf16.msra.mxu0 %v324
  %489 = vmatprep.subr.bf16.mxu0 %v329
  %490 = vmatpush1.bf16.msra.mxu0 %v328
  %491 = vmatprep.subr.bf16.mxu0 %v333
  %492 = vmatpush1.bf16.msra.mxu0 %v332
  %493 = vmatprep.subr.bf16.mxu0 %v337
  %494 = vmatpush1.bf16.msra.mxu0 %v336
  %495 = vmatprep.subr.bf16.mxu0 %v341
  %496 = vmatpush1.bf16.msra.mxu0 %v340
  %497 = vmatprep.subr.bf16.mxu0 %v345
  %498 = vmatpush1.bf16.msra.mxu0 %v344
  %499 = vmatprep.subr.bf16.mxu0 %v349
  %500 = vmatpush1.bf16.msra.mxu0 %v348
  %501 = vmatprep.subr.bf16.mxu0 %v353
  %502 = vmatpush1.bf16.msra.mxu0 %v352
  %503 = vmatprep.subr.bf16.mxu0 %v357
  %504 = vmatpush1.bf16.msra.mxu0 %v356
  %505 = vmatprep.subr.bf16.mxu0 %v361
  %506 = vmatpush1.bf16.msra.mxu0 %v360
  %507 = vmatprep.subr.bf16.mxu0 %v365
  %508 = vmatpush1.bf16.msra.mxu0 %v364
  %509 = vmatprep.subr.bf16.mxu0 %v369
  %510 = vmatpush1.bf16.msra.mxu0 %v368
  %511 = vmatprep.subr.bf16.mxu0 %v373
  %512 = vmatpush1.bf16.msra.mxu0 %v372
  %513 = vmatprep.mubr.bf16.mxu0 %v31
  %514 = vmatmul.mubr.bf16.gmra.mrb[0].mxu0 %v30
  %v515 = vpop.f32.mrb[0].mxu0
  %v516 = vadd.f32 %v109, %v515
  %v517 = vpop.f32.mrb[0].mxu0
  %v518 = vadd.f32 %v113, %v517
  %v519 = vpop.f32.mrb[0].mxu0
  %v520 = vadd.f32 %v109, %v519
  %v521 = vpop.f32.mrb[0].mxu0
  %v522 = vadd.f32 %v113, %v521
  %523 = vdwg.mxu0
  %v524 = vmax.f32 %v473, 0.0
  %v525 = vmax.f32 %v475, 0.0
  %v526 = vmax.f32 %v516, 0.0
  %v527 = vmax.f32 %v518, 0.0
  %v528 = vmax.f32 %v477, 0.0
  %v529 = vmax.f32 %v479, 0.0
  %v530 = vmax.f32 %v520, 0.0
  %v531 = vmax.f32 %v522, 0.0
  %v532 = vpack.c.bf16 %v528, %v524
  %v533 = vpack.c.bf16 %v529, %v525
  %v534 = vpack.c.bf16 %v530, %v526
  %v535 = vpack.c.bf16 %v531, %v527
  %v536 = vld [vmem:[%s3] sm:$0xff]
  %v537 = vld [vmem:[%s3 + $0x8] sm:$0xff]
  %v538 = vld [vmem:[%s3 + $0x10] sm:$0xff]
  %v539 = vld [vmem:[%s3 + $0x18] sm:$0xff]
  %v540 = vld [vmem:[%s3 + $0x20] sm:$0xff]
  %v541 = vld [vmem:[%s3 + $0x28] sm:$0xff]
  %v542 = vld [vmem:[%s3 + $0x30] sm:$0xff]
  %v543 = vld [vmem:[%s3 + $0x38] sm:$0xff]
  %v544 = vld [vmem:[%s3 + $0x40] sm:$0xff]
  %v545 = vld [vmem:[%s3 + $0x48] sm:$0xff]
  %v546 = vld [vmem:[%s3 + $0x50] sm:$0xff]
  %v547 = vld [vmem:[%s3 + $0x58] sm:$0xff]
  %v548 = vld [vmem:[%s3 + $0x60] sm:$0xff]
  %v549 = vld [vmem:[%s3 + $0x68] sm:$0xff]
  %v550 = vld [vmem:[%s3 + $0x70] sm:$0xff]
  %v551 = vld [vmem:[%s3 + $0x78] sm:$0xff]
  %v552 = vld [vmem:[%s3 + $0x80] sm:$0xff]
  %v553 = vld [vmem:[%s3 + $0x88] sm:$0xff]
  %v554 = vld [vmem:[%s3 + $0x90] sm:$0xff]
  %v555 = vld [vmem:[%s3 + $0x98] sm:$0xff]
  %v556 = vld [vmem:[%s3 + $0xa0] sm:$0xff]
  %v557 = vld [vmem:[%s3 + $0xa8] sm:$0xff]
  %v558 = vld [vmem:[%s3 + $0xb0] sm:$0xff]
  %v559 = vld [vmem:[%s3 + $0xb8] sm:$0xff]
  %v560 = vld [vmem:[%s3 + $0xc0] sm:$0xff]
  %v561 = vld [vmem:[%s3 + $0xc8] sm:$0xff]
  %v562 = vld [vmem:[%s3 + $0xd0] sm:$0xff]
  %v563 = vld [vmem:[%s3 + $0xd8] sm:$0xff]
  %v564 = vld [vmem:[%s3 + $0xe0] sm:$0xff]
  %v565 = vld [vmem:[%s3 + $0xe8] sm:$0xff]
  %v566 = vld [vmem:[%s3 + $0xf0] sm:$0xff]
  %v567 = vld [vmem:[%s3 + $0xf8] sm:$0xff]
  %v568 = vld [vmem:[%s3 + $0x100] sm:$0xff]
  %v569 = vld [vmem:[%s3 + $0x108] sm:$0xff]
  %v570 = vld [vmem:[%s3 + $0x110] sm:$0xff]
  %v571 = vld [vmem:[%s3 + $0x118] sm:$0xff]
  %v572 = vld [vmem:[%s3 + $0x120] sm:$0xff]
  %v573 = vld [vmem:[%s3 + $0x128] sm:$0xff]
  %v574 = vld [vmem:[%s3 + $0x130] sm:$0xff]
  %v575 = vld [vmem:[%s3 + $0x138] sm:$0xff]
  %v576 = vld [vmem:[%s3 + $0x140] sm:$0xff]
  %v577 = vld [vmem:[%s3 + $0x148] sm:$0xff]
  %v578 = vld [vmem:[%s3 + $0x150] sm:$0xff]
  %v579 = vld [vmem:[%s3 + $0x158] sm:$0xff]
  %v580 = vld [vmem:[%s3 + $0x160] sm:$0xff]
  %v581 = vld [vmem:[%s3 + $0x168] sm:$0xff]
  %v582 = vld [vmem:[%s3 + $0x170] sm:$0xff]
  %v583 = vld [vmem:[%s3 + $0x178] sm:$0xff]
  %v584 = vld [vmem:[%s3 + $0x180] sm:$0xff]
  %v585 = vld [vmem:[%s3 + $0x188] sm:$0xff]
  %v586 = vld [vmem:[%s3 + $0x190] sm:$0xff]
  %v587 = vld [vmem:[%s3 + $0x198] sm:$0xff]
  %v588 = vld [vmem:[%s3 + $0x1a0] sm:$0xff]
  %v589 = vld [vmem:[%s3 + $0x1a8] sm:$0xff]
  %v590 = vld [vmem:[%s3 + $0x1b0] sm:$0xff]
  %v591 = vld [vmem:[%s3 + $0x1b8] sm:$0xff]
  %v592 = vld [vmem:[%s3 + $0x1c0] sm:$0xff]
  %v593 = vld [vmem:[%s3 + $0x1c8] sm:$0xff]
  %v594 = vld [vmem:[%s3 + $0x1d0] sm:$0xff]
  %v595 = vld [vmem:[%s3 + $0x1d8] sm:$0xff]
  %v596 = vld [vmem:[%s3 + $0x1e0] sm:$0xff]
  %v597 = vld [vmem:[%s3 + $0x1e8] sm:$0xff]
  %v598 = vld [vmem:[%s3 + $0x1f0] sm:$0xff]
  %v599 = vld [vmem:[%s3 + $0x1f8] sm:$0xff]
  %v600 = vld [vmem:[%s4] sm:$0x3]
  %v602 = vlaneseq
  %v603 = vshrl.u32 %v602, 7
  %v604 = vsub.s32 0, %v603
  %v605 = vrot.slane %v600, %v604
  %v606 = vlaneseq
  %v607 = vshrl.u32 %v606, 7
  %v608 = vsub.s32 1, %v607
  %v609 = vrot.slane %v600, %v608
  %v676 = vunpack.c.l.b16 %v536
  %v677 = vunpack.c.h.b16 %v536
  %v678 = vunpack.c.l.b16 %v537
  %v679 = vunpack.c.h.b16 %v537
  %v680 = vunpack.c.l.b16 %v538
  %v681 = vunpack.c.h.b16 %v538
  %v682 = vunpack.c.l.b16 %v539
  %v683 = vunpack.c.h.b16 %v539
  %v684 = vunpack.c.l.b16 %v540
  %v685 = vunpack.c.h.b16 %v540
  %v686 = vunpack.c.l.b16 %v541
  %v687 = vunpack.c.h.b16 %v541
  %v688 = vunpack.c.l.b16 %v542
  %v689 = vunpack.c.h.b16 %v542
  %v690 = vunpack.c.l.b16 %v543
  %v691 = vunpack.c.h.b16 %v543
  %v692 = vunpack.c.l.b16 %v544
  %v693 = vunpack.c.h.b16 %v544
  %v694 = vunpack.c.l.b16 %v545
  %v695 = vunpack.c.h.b16 %v545
  %v696 = vunpack.c.l.b16 %v546
  %v697 = vunpack.c.h.b16 %v546
  %v698 = vunpack.c.l.b16 %v547
  %v699 = vunpack.c.h.b16 %v547
  %v700 = vunpack.c.l.b16 %v548
  %v701 = vunpack.c.h.b16 %v548
  %v702 = vunpack.c.l.b16 %v549
  %v703 = vunpack.c.h.b16 %v549
  %v704 = vunpack.c.l.b16 %v550
  %v705 = vunpack.c.h.b16 %v550
  %v706 = vunpack.c.l.b16 %v551
  %v707 = vunpack.c.h.b16 %v551
  %v708 = vunpack.c.l.b16 %v552
  %v709 = vunpack.c.h.b16 %v552
  %v710 = vunpack.c.l.b16 %v553
  %v711 = vunpack.c.h.b16 %v553
  %v712 = vunpack.c.l.b16 %v554
  %v713 = vunpack.c.h.b16 %v554
  %v714 = vunpack.c.l.b16 %v555
  %v715 = vunpack.c.h.b16 %v555
  %v716 = vunpack.c.l.b16 %v556
  %v717 = vunpack.c.h.b16 %v556
  %v718 = vunpack.c.l.b16 %v557
  %v719 = vunpack.c.h.b16 %v557
  %v720 = vunpack.c.l.b16 %v558
  %v721 = vunpack.c.h.b16 %v558
  %v722 = vunpack.c.l.b16 %v559
  %v723 = vunpack.c.h.b16 %v559
  %v724 = vunpack.c.l.b16 %v560
  %v725 = vunpack.c.h.b16 %v560
  %v726 = vunpack.c.l.b16 %v561
  %v727 = vunpack.c.h.b16 %v561
  %v728 = vunpack.c.l.b16 %v562
  %v729 = vunpack.c.h.b16 %v562
  %v730 = vunpack.c.l.b16 %v563
  %v731 = vunpack.c.h.b16 %v563
  %v732 = vunpack.c.l.b16 %v564
  %v733 = vunpack.c.h.b16 %v564
  %v734 = vunpack.c.l.b16 %v565
  %v735 = vunpack.c.h.b16 %v565
  %v736 = vunpack.c.l.b16 %v566
  %v737 = vunpack.c.h.b16 %v566
  %v738 = vunpack.c.l.b16 %v567
  %v739 = vunpack.c.h.b16 %v567
  %v740 = vunpack.c.l.b16 %v568
  %v741 = vunpack.c.h.b16 %v568
  %v742 = vunpack.c.l.b16 %v569
  %v743 = vunpack.c.h.b16 %v569
  %v744 = vunpack.c.l.b16 %v570
  %v745 = vunpack.c.h.b16 %v570
  %v746 = vunpack.c.l.b16 %v571
  %v747 = vunpack.c.h.b16 %v571
  %v748 = vunpack.c.l.b16 %v572
  %v749 = vunpack.c.h.b16 %v572
  %v750 = vunpack.c.l.b16 %v573
  %v751 = vunpack.c.h.b16 %v573
  %v752 = vunpack.c.l.b16 %v574
  %v753 = vunpack.c.h.b16 %v574
  %v754 = vunpack.c.l.b16 %v575
  %v755 = vunpack.c.h.b16 %v575
  %v756 = vunpack.c.l.b16 %v576
  %v757 = vunpack.c.h.b16 %v576
  %v758 = vunpack.c.l.b16 %v577
  %v759 = vunpack.c.h.b16 %v577
  %v760 = vunpack.c.l.b16 %v578
  %v761 = vunpack.c.h.b16 %v578
  %v762 = vunpack.c.l.b16 %v579
  %v763 = vunpack.c.h.b16 %v579
  %v764 = vunpack.c.l.b16 %v580
  %v765 = vunpack.c.h.b16 %v580
  %v766 = vunpack.c.l.b16 %v581
  %v767 = vunpack.c.h.b16 %v581
  %v768 = vunpack.c.l.b16 %v582
  %v769 = vunpack.c.h.b16 %v582
  %v770 = vunpack.c.l.b16 %v583
  %v771 = vunpack.c.h.b16 %v583
  %v772 = vunpack.c.l.b16 %v584
  %v773 = vunpack.c.h.b16 %v584
  %v774 = vunpack.c.l.b16 %v585
  %v775 = vunpack.c.h.b16 %v585
  %v776 = vunpack.c.l.b16 %v586
  %v777 = vunpack.c.h.b16 %v586
  %v778 = vunpack.c.l.b16 %v587
  %v779 = vunpack.c.h.b16 %v587
  %v780 = vunpack.c.l.b16 %v588
  %v781 = vunpack.c.h.b16 %v588
  %v782 = vunpack.c.l.b16 %v589
  %v783 = vunpack.c.h.b16 %v589
  %v784 = vunpack.c.l.b16 %v590
  %v785 = vunpack.c.h.b16 %v590
  %v786 = vunpack.c.l.b16 %v591
  %v787 = vunpack.c.h.b16 %v591
  %v788 = vunpack.c.l.b16 %v592
  %v789 = vunpack.c.h.b16 %v592
  %v790 = vunpack.c.l.b16 %v593
  %v791 = vunpack.c.h.b16 %v593
  %v792 = vunpack.c.l.b16 %v594
  %v793 = vunpack.c.h.b16 %v594
  %v794 = vunpack.c.l.b16 %v595
  %v795 = vunpack.c.h.b16 %v595
  %v796 = vunpack.c.l.b16 %v596
  %v797 = vunpack.c.h.b16 %v596
  %v798 = vunpack.c.l.b16 %v597
  %v799 = vunpack.c.h.b16 %v597
  %v800 = vunpack.c.l.b16 %v598
  %v801 = vunpack.c.h.b16 %v598
  %v802 = vunpack.c.l.b16 %v599
  %v803 = vunpack.c.h.b16 %v599
  %v804 = vpack.c.b16 %v678, %v676
  %v805 = vpack.c.b16 %v679, %v677
  %v806 = vpack.c.b16 %v682, %v680
  %v807 = vpack.c.b16 %v683, %v681
  %v808 = vpack.c.b16 %v686, %v684
  %v809 = vpack.c.b16 %v687, %v685
  %v810 = vpack.c.b16 %v690, %v688
  %v811 = vpack.c.b16 %v691, %v689
  %v812 = vpack.c.b16 %v694, %v692
  %v813 = vpack.c.b16 %v695, %v693
  %v814 = vpack.c.b16 %v698, %v696
  %v815 = vpack.c.b16 %v699, %v697
  %v816 = vpack.c.b16 %v702, %v700
  %v817 = vpack.c.b16 %v703, %v701
  %v818 = vpack.c.b16 %v706, %v704
  %v819 = vpack.c.b16 %v707, %v705
  %v820 = vpack.c.b16 %v710, %v708
  %v821 = vpack.c.b16 %v711, %v709
  %v822 = vpack.c.b16 %v714, %v712
  %v823 = vpack.c.b16 %v715, %v713
  %v824 = vpack.c.b16 %v718, %v716
  %v825 = vpack.c.b16 %v719, %v717
  %v826 = vpack.c.b16 %v722, %v720
  %v827 = vpack.c.b16 %v723, %v721
  %v828 = vpack.c.b16 %v726, %v724
  %v829 = vpack.c.b16 %v727, %v725
  %v830 = vpack.c.b16 %v730, %v728
  %v831 = vpack.c.b16 %v731, %v729
  %v832 = vpack.c.b16 %v734, %v732
  %v833 = vpack.c.b16 %v735, %v733
  %v834 = vpack.c.b16 %v738, %v736
  %v835 = vpack.c.b16 %v739, %v737
  %v836 = vpack.c.b16 %v742, %v740
  %v837 = vpack.c.b16 %v743, %v741
  %v838 = vpack.c.b16 %v746, %v744
  %v839 = vpack.c.b16 %v747, %v745
  %v840 = vpack.c.b16 %v750, %v748
  %v841 = vpack.c.b16 %v751, %v749
  %v842 = vpack.c.b16 %v754, %v752
  %v843 = vpack.c.b16 %v755, %v753
  %v844 = vpack.c.b16 %v758, %v756
  %v845 = vpack.c.b16 %v759, %v757
  %v846 = vpack.c.b16 %v762, %v760
  %v847 = vpack.c.b16 %v763, %v761
  %v848 = vpack.c.b16 %v766, %v764
  %v849 = vpack.c.b16 %v767, %v765
  %v850 = vpack.c.b16 %v770, %v768
  %v851 = vpack.c.b16 %v771, %v769
  %v852 = vpack.c.b16 %v774, %v772
  %v853 = vpack.c.b16 %v775, %v773
  %v854 = vpack.c.b16 %v778, %v776
  %v855 = vpack.c.b16 %v779, %v777
  %v856 = vpack.c.b16 %v782, %v780
  %v857 = vpack.c.b16 %v783, %v781
  %v858 = vpack.c.b16 %v786, %v784
  %v859 = vpack.c.b16 %v787, %v785
  %v860 = vpack.c.b16 %v790, %v788
  %v861 = vpack.c.b16 %v791, %v789
  %v862 = vpack.c.b16 %v794, %v792
  %v863 = vpack.c.b16 %v795, %v793
  %v864 = vpack.c.b16 %v798, %v796
  %v865 = vpack.c.b16 %v799, %v797
  %v866 = vpack.c.b16 %v802, %v800
  %v867 = vpack.c.b16 %v803, %v801
  %932 = vmatprep.subr.bf16.mxu0 %v805
  %933 = vmatpush1.bf16.msra.mxu0 %v804
  %934 = vmatprep.subr.bf16.mxu0 %v807
  %935 = vmatpush1.bf16.msra.mxu0 %v806
  %936 = vmatprep.subr.bf16.mxu0 %v809
  %937 = vmatpush1.bf16.msra.mxu0 %v808
  %938 = vmatprep.subr.bf16.mxu0 %v811
  %939 = vmatpush1.bf16.msra.mxu0 %v810
  %940 = vmatprep.subr.bf16.mxu0 %v813
  %941 = vmatpush1.bf16.msra.mxu0 %v812
  %942 = vmatprep.subr.bf16.mxu0 %v815
  %943 = vmatpush1.bf16.msra.mxu0 %v814
  %944 = vmatprep.subr.bf16.mxu0 %v817
  %945 = vmatpush1.bf16.msra.mxu0 %v816
  %946 = vmatprep.subr.bf16.mxu0 %v819
  %947 = vmatpush1.bf16.msra.mxu0 %v818
  %948 = vmatprep.subr.bf16.mxu0 %v821
  %949 = vmatpush1.bf16.msra.mxu0 %v820
  %950 = vmatprep.subr.bf16.mxu0 %v823
  %951 = vmatpush1.bf16.msra.mxu0 %v822
  %952 = vmatprep.subr.bf16.mxu0 %v825
  %953 = vmatpush1.bf16.msra.mxu0 %v824
  %954 = vmatprep.subr.bf16.mxu0 %v827
  %955 = vmatpush1.bf16.msra.mxu0 %v826
  %956 = vmatprep.subr.bf16.mxu0 %v829
  %957 = vmatpush1.bf16.msra.mxu0 %v828
  %958 = vmatprep.subr.bf16.mxu0 %v831
  %959 = vmatpush1.bf16.msra.mxu0 %v830
  %960 = vmatprep.subr.bf16.mxu0 %v833
  %961 = vmatpush1.bf16.msra.mxu0 %v832
  %962 = vmatprep.subr.bf16.mxu0 %v835
  %963 = vmatpush1.bf16.msra.mxu0 %v834
  %964 = vmatprep.mubr.bf16.mxu0 %v533
  %965 = vmatmul.mubr.bf16.gmra.mrb[0].mxu0 %v532
  %v966 = vpop.f32.mrb[0].mxu0
  %v967 = vadd.f32 %v605, %v966
  %v968 = vpop.f32.mrb[0].mxu0
  %v969 = vadd.f32 %v609, %v968
  %v970 = vpop.f32.mrb[0].mxu0
  %v971 = vadd.f32 %v605, %v970
  %v972 = vpop.f32.mrb[0].mxu0
  %v973 = vadd.f32 %v609, %v972
  %974 = vdwg.mxu0
  %975 = vmatprep.subr.bf16.mxu0 %v837
  %976 = vmatpush1.bf16.msra.mxu0 %v836
  %977 = vmatprep.subr.bf16.mxu0 %v839
  %978 = vmatpush1.bf16.msra.mxu0 %v838
  %979 = vmatprep.subr.bf16.mxu0 %v841
  %980 = vmatpush1.bf16.msra.mxu0 %v840
  %981 = vmatprep.subr.bf16.mxu0 %v843
  %982 = vmatpush1.bf16.msra.mxu0 %v842
  %983 = vmatprep.subr.bf16.mxu0 %v845
  %984 = vmatpush1.bf16.msra.mxu0 %v844
  %985 = vmatprep.subr.bf16.mxu0 %v847
  %986 = vmatpush1.bf16.msra.mxu0 %v846
  %987 = vmatprep.subr.bf16.mxu0 %v849
  %988 = vmatpush1.bf16.msra.mxu0 %v848
  %989 = vmatprep.subr.bf16.mxu0 %v851
  %990 = vmatpush1.bf16.msra.mxu0 %v850
  %991 = vmatprep.subr.bf16.mxu0 %v853
  %992 = vmatpush1.bf16.msra.mxu0 %v852
  %993 = vmatprep.subr.bf16.mxu0 %v855
  %994 = vmatpush1.bf16.msra.mxu0 %v854
  %995 = vmatprep.subr.bf16.mxu0 %v857
  %996 = vmatpush1.bf16.msra.mxu0 %v856
  %997 = vmatprep.subr.bf16.mxu0 %v859
  %998 = vmatpush1.bf16.msra.mxu0 %v858
  %999 = vmatprep.subr.bf16.mxu0 %v861
  %1000 = vmatpush1.bf16.msra.mxu0 %v860
  %1001 = vmatprep.subr.bf16.mxu0 %v863
  %1002 = vmatpush1.bf16.msra.mxu0 %v862
  %1003 = vmatprep.subr.bf16.mxu0 %v865
  %1004 = vmatpush1.bf16.msra.mxu0 %v864
  %1005 = vmatprep.subr.bf16.mxu0 %v867
  %1006 = vmatpush1.bf16.msra.mxu0 %v866
  %1007 = vmatprep.mubr.bf16.mxu0 %v535
  %1008 = vmatmul.mubr.bf16.gmra.mrb[0].mxu0 %v534
  %v1009 = vpop.f32.mrb[0].mxu0
  %v1010 = vadd.f32 %v967, %v1009
  %v1011 = vpop.f32.mrb[0].mxu0
  %v1012 = vadd.f32 %v969, %v1011
  %v1013 = vpop.f32.mrb[0].mxu0
  %v1014 = vadd.f32 %v971, %v1013
  %v1015 = vpop.f32.mrb[0].mxu0
  %v1016 = vadd.f32 %v973, %v1015
  %1017 = vdwg.mxu0
  %v1018 = vadd.f32 %v26, %v1010
  %v1019 = vadd.f32 %v27, %v1012
  %v1020 = vadd.f32 %v28, %v1014
  %v1021 = vadd.f32 %v29, %v1016
  %v1022 = vadd.f32 %v1018, %v1019
  %1023 = vadd.xlane.f32.xlu0 %v1022
  %v1024 = vpop.xlane.xlu0 %1023
  %v1025 = vadd.f32 %v1020, %v1021
  %1026 = vadd.xlane.f32.xlu0 %v1025
  %v1027 = vpop.xlane.xlu0 %1026
  %v1028 = vrcp.pop 256.0
  %v1029 = vmul.f32 %v1024, %v1028
  %v1030 = vmul.f32 %v1027, %v1028
  %v1031 = vsub.f32 %v1018, %v1029
  %v1032 = vsub.f32 %v1019, %v1029
  %v1033 = vsub.f32 %v1020, %v1030
  %v1034 = vsub.f32 %v1021, %v1030
  %v1035 = vmul.f32 %v1031, %v1031
  %v1036 = vmul.f32 %v1032, %v1032
  %v1037 = vmul.f32 %v1033, %v1033
  %v1038 = vmul.f32 %v1034, %v1034
  %v1039 = vadd.f32 %v1035, %v1036
  %1040 = vadd.xlane.f32.xlu0 %v1039
  %v1041 = vpop.xlane.xlu0 %1040
  %v1042 = vadd.f32 %v1037, %v1038
  %1043 = vadd.xlane.f32.xlu0 %v1042
  %v1044 = vpop.xlane.xlu0 %1043
  %v1045 = vmul.f32 %v1041, %v1028
  %v1046 = vmul.f32 %v1044, %v1028
  %v1047 = vadd.f32 %v1045, 1e-05
  %v1048 = vadd.f32 %v1046, 1e-05
  %v1049 = vrsqrt.pop %v1047
  %v1050 = vrsqrt.pop %v1048
  %v1051 = vmul.f32 %v1031, %v1049
  %v1052 = vmul.f32 %v1032, %v1049
  %v1053 = vmul.f32 %v1033, %v1050
  %v1054 = vmul.f32 %v1034, %v1050
  %v1055 = vld [vmem:[%s5] sm:$0x3]
  %v1057 = vlaneseq
  %v1058 = vshrl.u32 %v1057, 7
  %v1059 = vsub.s32 0, %v1058
  %v1060 = vrot.slane %v1055, %v1059
  %v1061 = vlaneseq
  %v1062 = vshrl.u32 %v1061, 7
  %v1063 = vsub.s32 1, %v1062
  %v1064 = vrot.slane %v1055, %v1063
  %v1067 = vmul.f32 %v1051, %v1060
  %v1068 = vmul.f32 %v1052, %v1064
  %v1069 = vmul.f32 %v1053, %v1060
  %v1070 = vmul.f32 %v1054, %v1064
  %v1071 = vld [vmem:[%s6] sm:$0x3]
  %v1073 = vlaneseq
  %v1074 = vshrl.u32 %v1073, 7
  %v1075 = vsub.s32 0, %v1074
  %v1076 = vrot.slane %v1071, %v1075
  %v1077 = vlaneseq
  %v1078 = vshrl.u32 %v1077, 7
  %v1079 = vsub.s32 1, %v1078
  %v1080 = vrot.slane %v1071, %v1079
  %v1083 = vadd.f32 %v1067, %v1076
  %v1084 = vadd.f32 %v1068, %v1080
  %v1085 = vadd.f32 %v1069, %v1076
  %v1086 = vadd.f32 %v1070, %v1080
  %1087 = vst [vmem:[%s7] sm:$0xff] %v1083
  %1088 = vst [vmem:[%s7 + $0x8] sm:$0xff] %v1084
  %1089 = vst [vmem:[%s7 + $0x10] sm:$0xff] %v1085
  %1090 = vst [vmem:[%s7 + $0x18] sm:$0xff] %v1086
  // Predicated region
  $region30: #{transformer_lm_forward.12} parent=0 // pred_check
    _
  $region31: #{transformer_lm_forward.12} parent=0 // pred_check_branch
    %1092 = sbr.rel (0) target = $region33
  $region32: #{transformer_lm_forward.12} parent=0 // pred_region
    _
  $region33: #{transformer_lm_forward.12} parent=0 // pred_fallthru
    _
  // Predicated region
  $region34: #{transformer_lm_forward.12} parent=0 // pred_check
    _
  $region35: #{transformer_lm_forward.12} parent=0 // pred_check_branch
    %1094 = sbr.rel (0) target = $region37
  $region36: #{transformer_lm_forward.12} parent=0 // pred_region
    _
  $region37: #{transformer_lm_forward.12} parent=0 // pred_fallthru
    _

// kernel: transformer_lm_forward.11
$region0: #{transformer_lm_forward.11}
  #allocation0 [shape = 'u32[]', space=smem, size = 0x4, offset = 0x4, fixed_abs, tag = 'smem constant byte address 0x4 - core index']
  #allocation1 [shape = 'u32[144,128]{1,0:T(1,128)}', space=vmem, size = 0x12000, scoped, tag = 'internal scratch']
  %s0 = inlined_call_operand.vmem [shape: f32[2,8,256], index: 0, kind: input, shape index: {}]
  %s1 = inlined_call_operand.vmem [shape: bf16[256,768], index: 1, kind: input, shape index: {}]
  %s2 = inlined_call_operand.vmem [shape: f32[1,768], index: 2, kind: input, shape index: {}]
  %s3 = inlined_call_operand.hbm [shape: bf16[256,256], index: 3, kind: input, shape index: {}]
  %s4 = inlined_call_operand.hbm [shape: f32[1,256], index: 4, kind: input, shape index: {}]
  %s5 = inlined_call_operand.hbm [shape: f32[1,256], index: 5, kind: input, shape index: {}]
  %s6 = inlined_call_operand.hbm [shape: f32[1,256], index: 6, kind: input, shape index: {}]
  %s7 = inlined_call_operand.vmem [shape: f32[2,8,256], index: 7, kind: output, shape index: {}]
  %s8 = sld [smem:[#allocation0]]
  $region77: #{transformer_lm_forward.11} parent=0
    _
  %s10 = ssub.s32 1, %s8
  %s11 = scalar_select 0, %s10, %s8
  $region1: #{transformer_lm_forward.11} parent=0
    #allocation2 [shape = 'u8[131072]{0}', space=vmem, size = 0x20000, scoped, tag = 'input window, operand 3, single buffered']
    #allocation3 [shape = 's32[2]{0}', space=sflag, size = 0x8, scoped, tag = 'scoped memory for transformer_lm_forward.11']
    #allocation4 [shape = 'u8[1024]{0}', space=vmem, size = 0x400, scoped, tag = 'input window, operand 4, single buffered']
    #allocation5 [shape = 's32[1]{0}', space=sflag, size = 0x4, scoped, tag = 'scoped memory for transformer_lm_forward.11']
    #allocation6 [shape = 'u8[1024]{0}', space=vmem, size = 0x400, scoped, tag = 'input window, operand 5, single buffered']
    #allocation7 [shape = 'u8[1024]{0}', space=vmem, size = 0x400, scoped, tag = 'input window, operand 6, single buffered']
    #allocation8 [shape = 's32[1]{0}', space=sflag, size = 0x4, scoped, tag = 'scoped memory for transformer_lm_forward.11']
    %12 = vsyncpa [#allocation3], 0
    %13 = vsyncpa [#allocation5], 0
    %14 = vsyncpa [#allocation8], 0
    loop: start=0, step=1, limit=4
    $region2: #{transformer_lm_forward.11} parent=1 // loop_pre_header
      _
    $region3: #{transformer_lm_forward.11} parent=1 // loop_header
      %s16 = sphi 0, %s20
      %p17 = scmp.ge.s32.totalorder %s16, 4
      %s26 = sphi 0, %s28
      %s29 = sphi 0, %s26
      %s30 = sphi 0, %s29
      %s46 = sphi 0, %s30
      %s50 = sphi 0, %s50
      %s52 = sphi 0, %s50
      %s53 = sphi 0, %s52
      %s67 = sphi 0, %s53
      %s71 = sphi 0, %s71
      %s73 = sphi 0, %s71
      %s74 = sphi 0, %s73
      %s88 = sphi 0, %s74
      %s92 = sphi 0, %s92
      %s94 = sphi 0, %s92
      %s95 = sphi 0, %s94
      %s109 = sphi 0, %s95
      %s113 = sphi 0, %s113
      %s115 = sphi 0, %s113
      %s116 = sphi 0, %s115
      %s130 = sphi 0, %s116
      %s134 = sphi 0, %s134
      %s136 = sphi 0, %s134
      %s137 = sphi 0, %s136
      %s151 = sphi 0, %s137
      %s155 = sphi 0, %s155
      %s157 = sphi 0, %s155
      %s158 = sphi 0, %s157
      %s172 = sphi 0, %s158
      %s178 = sphi 0, %s180
      %s181 = sphi 0, %s178
      %s182 = sphi 0, %s181
      %s198 = sphi 0, %s182
    $region4: #{transformer_lm_forward.11} parent=1 // loop_header_branch
      %19 = sbr.rel (%p17) target = $region8
    $region5: #{transformer_lm_forward.11} parent=1 // loop_body
      %s21 = ssub.s32 %s16, 1
      %s22 = ssub.s32 %s16, 2
      %s23 = sadd.s32 %s16, 1
      %s24 = ssub.s32 %s16, %s23
      %p25 = scmp.eq.s32.totalorder %s24, 0
      %s27 = sadd.s32 %s26, 1
      %s28 = scalar_select %p25, %s26, %s27
      %p31 = pneg %p25
      %p32 = scmp.eq.s32.totalorder %s16, 1
      %p33 = por %p31, %p32
      %p34 = scmp.ne.s32.totalorder %s26, %s29
      %p35 = scmp.eq.s32.totalorder %s16, 0
      %p36 = por %p34, %p35
      %p37 = scmp.ne.s32.totalorder %s26, %s29
      %p38 = scmp.eq.s32.totalorder %s21, 1
      %p39 = por %p37, %p38
      %p40 = scmp.ne.s32.totalorder %s29, %s30
      %p41 = scmp.eq.s32.totalorder %s21, 0
      %p42 = por %p40, %p41
      %p43 = scmp.ne.s32.totalorder %s29, %s30
      %p44 = scmp.eq.s32.totalorder %s22, 1
      %p45 = por %p43, %p44
      %p47 = scmp.ne.s32.totalorder %s30, %s46
      %p48 = scmp.eq.s32.totalorder %s22, 0
      %p49 = por %p47, %p48
      %s51 = sadd.s32 %s50, 1
      %p54 = scmp.eq.s32.totalorder %s16, 1
      %p55 = scmp.ne.s32.totalorder %s50, %s52
      %p56 = scmp.eq.s32.totalorder %s16, 0
      %p57 = por %p55, %p56
      %p58 = scmp.ne.s32.totalorder %s50, %s52
      %p59 = scmp.eq.s32.totalorder %s21, 1
      %p60 = por %p58, %p59
      %p61 = scmp.ne.s32.totalorder %s52, %s53
      %p62 = scmp.eq.s32.totalorder %s21, 0
      %p63 = por %p61, %p62
      %p64 = scmp.ne.s32.totalorder %s52, %s53
      %p65 = scmp.eq.s32.totalorder %s22, 1
      %p66 = por %p64, %p65
      %p68 = scmp.ne.s32.totalorder %s53, %s67
      %p69 = scmp.eq.s32.totalorder %s22, 0
      %p70 = por %p68, %p69
      %s72 = sadd.s32 %s71, 1
      %p75 = scmp.eq.s32.totalorder %s16, 1
      %p76 = scmp.ne.s32.totalorder %s71, %s73
      %p77 = scmp.eq.s32.totalorder %s16, 0
      %p78 = por %p76, %p77
      %p79 = scmp.ne.s32.totalorder %s71, %s73
      %p80 = scmp.eq.s32.totalorder %s21, 1
      %p81 = por %p79, %p80
      %p82 = scmp.ne.s32.totalorder %s73, %s74
      %p83 = scmp.eq.s32.totalorder %s21, 0
      %p84 = por %p82, %p83
      %p85 = scmp.ne.s32.totalorder %s73, %s74
      %p86 = scmp.eq.s32.totalorder %s22, 1
      %p87 = por %p85, %p86
      %p89 = scmp.ne.s32.totalorder %s74, %s88
      %p90 = scmp.eq.s32.totalorder %s22, 0
      %p91 = por %p89, %p90
      %s93 = sadd.s32 %s92, 1
      %p96 = scmp.eq.s32.totalorder %s16, 1
      %p97 = scmp.ne.s32.totalorder %s92, %s94
      %p98 = scmp.eq.s32.totalorder %s16, 0
      %p99 = por %p97, %p98
      %p100 = scmp.ne.s32.totalorder %s92, %s94
      %p101 = scmp.eq.s32.totalorder %s21, 1
      %p102 = por %p100, %p101
      %p103 = scmp.ne.s32.totalorder %s94, %s95
      %p104 = scmp.eq.s32.totalorder %s21, 0
      %p105 = por %p103, %p104
      %p106 = scmp.ne.s32.totalorder %s94, %s95
      %p107 = scmp.eq.s32.totalorder %s22, 1
      %p108 = por %p106, %p107
      %p110 = scmp.ne.s32.totalorder %s95, %s109
      %p111 = scmp.eq.s32.totalorder %s22, 0
      %p112 = por %p110, %p111
      %s114 = sadd.s32 %s113, 1
      %p117 = scmp.eq.s32.totalorder %s16, 1
      %p118 = scmp.ne.s32.totalorder %s113, %s115
      %p119 = scmp.eq.s32.totalorder %s16, 0
      %p120 = por %p118, %p119
      %p121 = scmp.ne.s32.totalorder %s113, %s115
      %p122 = scmp.eq.s32.totalorder %s21, 1
      %p123 = por %p121, %p122
      %p124 = scmp.ne.s32.totalorder %s115, %s116
      %p125 = scmp.eq.s32.totalorder %s21, 0
      %p126 = por %p124, %p125
      %p127 = scmp.ne.s32.totalorder %s115, %s116
      %p128 = scmp.eq.s32.totalorder %s22, 1
      %p129 = por %p127, %p128
      %p131 = scmp.ne.s32.totalorder %s116, %s130
      %p132 = scmp.eq.s32.totalorder %s22, 0
      %p133 = por %p131, %p132
      %s135 = sadd.s32 %s134, 1
      %p138 = scmp.eq.s32.totalorder %s16, 1
      %p139 = scmp.ne.s32.totalorder %s134, %s136
      %p140 = scmp.eq.s32.totalorder %s16, 0
      %p141 = por %p139, %p140
      %p142 = scmp.ne.s32.totalorder %s134, %s136
      %p143 = scmp.eq.s32.totalorder %s21, 1
      %p144 = por %p142, %p143
      %p145 = scmp.ne.s32.totalorder %s136, %s137
      %p146 = scmp.eq.s32.totalorder %s21, 0
      %p147 = por %p145, %p146
      %p148 = scmp.ne.s32.totalorder %s136, %s137
      %p149 = scmp.eq.s32.totalorder %s22, 1
      %p150 = por %p148, %p149
      %p152 = scmp.ne.s32.totalorder %s137, %s151
      %p153 = scmp.eq.s32.totalorder %s22, 0
      %p154 = por %p152, %p153
      %s156 = sadd.s32 %s155, 1
      %p159 = scmp.eq.s32.totalorder %s16, 1
      %p160 = scmp.ne.s32.totalorder %s155, %s157
      %p161 = scmp.eq.s32.totalorder %s16, 0
      %p162 = por %p160, %p161
      %p163 = scmp.ne.s32.totalorder %s155, %s157
      %p164 = scmp.eq.s32.totalorder %s21, 1
      %p165 = por %p163, %p164
      %p166 = scmp.ne.s32.totalorder %s157, %s158
      %p167 = scmp.eq.s32.totalorder %s21, 0
      %p168 = por %p166, %p167
      %p169 = scmp.ne.s32.totalorder %s157, %s158
      %p170 = scmp.eq.s32.totalorder %s22, 1
      %p171 = por %p169, %p170
      %p173 = scmp.ne.s32.totalorder %s158, %s172
      %p174 = scmp.eq.s32.totalorder %s22, 0
      %p175 = por %p173, %p174
      %s176 = ssub.s32 %s16, %s23
      %p177 = scmp.eq.s32.totalorder %s176, 0
      %s179 = sadd.s32 %s178, 1
      %s180 = scalar_select %p177, %s178, %s179
      %p183 = pneg %p177
      %p184 = scmp.eq.s32.totalorder %s16, 1
      %p185 = por %p183, %p184
      %p186 = scmp.ne.s32.totalorder %s178, %s181
      %p187 = scmp.eq.s32.totalorder %s16, 0
      %p188 = por %p186, %p187
      %p189 = scmp.ne.s32.totalorder %s178, %s181
      %p190 = scmp.eq.s32.totalorder %s21, 1
      %p191 = por %p189, %p190
      %p192 = scmp.ne.s32.totalorder %s181, %s182
      %p193 = scmp.eq.s32.totalorder %s21, 0
      %p194 = por %p192, %p193
      %p195 = scmp.ne.s32.totalorder %s181, %s182
      %p196 = scmp.eq.s32.totalorder %s22, 1
      %p197 = por %p195, %p196
      %p199 = scmp.ne.s32.totalorder %s182, %s198
      %p200 = scmp.eq.s32.totalorder %s22, 0
      %p201 = por %p199, %p200
      %p202 = scmp.le.s32.totalorder 1, %s16
      %p203 = scmp.lt.s32.totalorder %s16, 3
      %p204 = pnand %p202, %p203
      %p205 = pneg %p204
      // Predicated region
      $region9: #{transformer_lm_forward.11} parent=5 // pred_check
        _
      $region10: #{transformer_lm_forward.11} parent=5 // pred_check_branch
        %207 = sbr.rel (%p204) target = $region12
      $region11: #{transformer_lm_forward.11} parent=5 // pred_region
        %s208 = ssub.s32 %s16, 1
        // Predicated region
        $region13: #{transformer_lm_forward.11} parent=11 // pred_check
          %p209 = pneg %p63
        $region14: #{transformer_lm_forward.11} parent=11 // pred_check_branch
          %211 = sbr.rel (%p209) target = $region16
        $region15: #{transformer_lm_forward.11} parent=11 // pred_region
          _
        $region16: #{transformer_lm_forward.11} parent=11 // pred_fallthru
          _
        // Predicated region
        $region17: #{transformer_lm_forward.11} parent=11 // pred_check
          %p212 = pneg %p84
        $region18: #{transformer_lm_forward.11} parent=11 // pred_check_branch
          %214 = sbr.rel (%p212) target = $region20
        $region19: #{transformer_lm_forward.11} parent=11 // pred_region
          _
        $region20: #{transformer_lm_forward.11} parent=11 // pred_fallthru
          _
        // Predicated region
        $region21: #{transformer_lm_forward.11} parent=11 // pred_check
          %p215 = pneg %p105
        $region22: #{transformer_lm_forward.11} parent=11 // pred_check_branch
          %217 = sbr.rel (%p215) target = $region24
        $region23: #{transformer_lm_forward.11} parent=11 // pred_region
          %s219 = ssub.s32 4096, 4096
          %220 = vsyncadd [#allocation3], %s219
          %s221 = sshll.u32 [#allocation2], 4
          %s222 = int_to_ptr.vmem [resolvable:$true] %s221
          %227 = dma.hbm_to_vmem [thread:$0]  %s3, 4096, %s222, [#allocation3], 128, 128, 8
        $region24: #{transformer_lm_forward.11} parent=11 // pred_fallthru
          _
        // Predicated region
        $region25: #{transformer_lm_forward.11} parent=11 // pred_check
          %p228 = pneg %p126
        $region26: #{transformer_lm_forward.11} parent=11 // pred_check_branch
          %230 = sbr.rel (%p228) target = $region28
        $region27: #{transformer_lm_forward.11} parent=11 // pred_region
          %s232 = ssub.s32 32, 32
          %233 = vsyncadd [#allocation5], %s232
          %s235 = sshll.u32 [#allocation4], 4
          %s236 = int_to_ptr.vmem [resolvable:$true] %s235
          %238 = dma.hbm_to_vmem [thread:$0]  %s4, 32, %s236, [#allocation5]
        $region28: #{transformer_lm_forward.11} parent=11 // pred_fallthru
          _
        // Predicated region
        $region29: #{transformer_lm_forward.11} parent=11 // pred_check
          %p239 = pneg %p147
        $region30: #{transformer_lm_forward.11} parent=11 // pred_check_branch
          %241 = sbr.rel (%p239) target = $region32
        $region31: #{transformer_lm_forward.11} parent=11 // pred_region
          %s243 = ssub.s32 32, 32
          %244 = vsyncadd [#allocation5], %s243
          %s246 = sshll.u32 [#allocation6], 4
          %s247 = int_to_ptr.vmem [resolvable:$true] %s246
          %249 = dma.hbm_to_vmem [thread:$0]  %s5, 32, %s247, [#allocation5]
        $region32: #{transformer_lm_forward.11} parent=11 // pred_fallthru
          _
        // Predicated region
        $region33: #{transformer_lm_forward.11} parent=11 // pred_check
          %p250 = pneg %p168
        $region34: #{transformer_lm_forward.11} parent=11 // pred_check_branch
          %252 = sbr.rel (%p250) target = $region36
        $region35: #{transformer_lm_forward.11} parent=11 // pred_region
          %s254 = ssub.s32 32, 32
          %255 = vsyncadd [#allocation8], %s254
          %s257 = sshll.u32 [#allocation7], 4
          %s258 = int_to_ptr.vmem [resolvable:$true] %s257
          %260 = dma.hbm_to_vmem [thread:$0]  %s6, 32, %s258, [#allocation8]
        $region36: #{transformer_lm_forward.11} parent=11 // pred_fallthru
          _
      $region12: #{transformer_lm_forward.11} parent=5 // pred_fallthru
        _
      %p261 = scmp.lt.s32.totalorder %s16, 2
      // Predicated region
      $region37: #{transformer_lm_forward.11} parent=5 // pred_check
        %p262 = pneg %p261
      $region38: #{transformer_lm_forward.11} parent=5 // pred_check_branch
        %264 = sbr.rel (%p262) target = $region40
      $region39: #{transformer_lm_forward.11} parent=5 // pred_region
        // Predicated region
        $region41: #{transformer_lm_forward.11} parent=39 // pred_check
          %p265 = pneg %p36
        $region42: #{transformer_lm_forward.11} parent=39 // pred_check_branch
          %267 = sbr.rel (%p265) target = $region44
        $region43: #{transformer_lm_forward.11} parent=39 // pred_region
          %p268 = scmp.lt.s32.totalorder %s16, 1
          %s269 = scalar_select %p268, %s16, 1
          %s270 = smul.addr %s269, 2
          %s271 = smul.addr %s270, 8
          %s272 = scalar_lea.vmem %s0, %s271
        $region44: #{transformer_lm_forward.11} parent=39 // pred_fallthru
          _
      $region40: #{transformer_lm_forward.11} parent=5 // pred_fallthru
        _
      %p273 = scmp.le.s32.totalorder 1, %s16
      %p274 = scmp.lt.s32.totalorder %s16, 3
      %p275 = pnand %p273, %p274
      %p276 = pneg %p275
      // Predicated region
      $region45: #{transformer_lm_forward.11} parent=5 // pred_check
        _
      $region46: #{transformer_lm_forward.11} parent=5 // pred_check_branch
        %278 = sbr.rel (%p275) target = $region48
      $region47: #{transformer_lm_forward.11} parent=5 // pred_region
        %s279 = ssub.s32 %s16, 1
        // Predicated region
        $region49: #{transformer_lm_forward.11} parent=47 // pred_check
          %p280 = pneg %p105
        $region50: #{transformer_lm_forward.11} parent=47 // pred_check_branch
          %282 = sbr.rel (%p280) target = $region52
        $region51: #{transformer_lm_forward.11} parent=47 // pred_region
          %283 = dma.done [#allocation3], 4096
        $region52: #{transformer_lm_forward.11} parent=47 // pred_fallthru
          _
        // Predicated region
        $region53: #{transformer_lm_forward.11} parent=47 // pred_check
          %p284 = pneg %p126
        $region54: #{transformer_lm_forward.11} parent=47 // pred_check_branch
          %286 = sbr.rel (%p284) target = $region56
        $region55: #{transformer_lm_forward.11} parent=47 // pred_region
          %287 = dma.done [#allocation5], 32
        $region56: #{transformer_lm_forward.11} parent=47 // pred_fallthru
          _
        // Predicated region
        $region57: #{transformer_lm_forward.11} parent=47 // pred_check
          %p288 = pneg %p147
        $region58: #{transformer_lm_forward.11} parent=47 // pred_check_branch
          %290 = sbr.rel (%p288) target = $region60
        $region59: #{transformer_lm_forward.11} parent=47 // pred_region
          %291 = dma.done [#allocation5], 32
        $region60: #{transformer_lm_forward.11} parent=47 // pred_fallthru
          _
        // Predicated region
        $region61: #{transformer_lm_forward.11} parent=47 // pred_check
          %p292 = pneg %p168
        $region62: #{transformer_lm_forward.11} parent=47 // pred_check_branch
          %294 = sbr.rel (%p292) target = $region64
        $region63: #{transformer_lm_forward.11} parent=47 // pred_region
          %295 = dma.done [#allocation8], 32
        $region64: #{transformer_lm_forward.11} parent=47 // pred_fallthru
          _
        %p296 = scmp.lt.s32.totalorder %s21, 1
        %s297 = scalar_select %p296, %s21, 1
        %s298 = smul.addr %s297, 2
        %s299 = smul.addr %s298, 8
        %s300 = scalar_lea.vmem %s0, %s299
        %p301 = pneg %p42
        %p302 = pneg %p39
        %p303 = pneg %p63
        %p304 = pneg %p60
        %p305 = pneg %p84
        %p306 = pneg %p81
        %p307 = pneg %p105
        %p308 = pneg %p102
        %p309 = pneg %p126
        %p310 = pneg %p123
        %p311 = pneg %p147
        %p312 = pneg %p144
        %p313 = pneg %p168
        %p314 = pneg %p165
        %p315 = pneg %p194
        %p316 = pneg %p191
        %p317 = scmp.lt.s32.totalorder %s21, 1
        %s318 = scalar_select %p317, %s21, 1
        %s319 = smul.addr %s318, 2
        %s320 = smul.addr %s319, 8
        %s321 = scalar_lea.vmem %s7, %s320
        %p322 = scmp.lt.s32.totalorder %s21, 1
        %s323 = scalar_select %p322, %s21, 1
        %s324 = smul.addr %s323, 2
        %s325 = smul.addr %s324, 8
        %s326 = scalar_lea.vmem %s0, %s325
        %p327 = scmp.lt.s32.totalorder %s21, 1
        %s328 = scalar_select %p327, %s21, 1
        %s329 = smul.addr %s328, 2
        %s330 = smul.addr %s329, 8
        %s331 = scalar_lea.vmem %s7, %s330
        %v333 = vld [vmem:[%s326] sm:$0xff]
        %v334 = vld [vmem:[%s326 + $0x8] sm:$0xff]
        %v335 = vpack.c.bf16 %v333, %v333
        %v336 = vpack.c.bf16 %v334, %v334
        %v337 = vld [vmem:[%s1] sm:$0xff]
        %v338 = vld [vmem:[%s1 + $0x8] sm:$0xff]
        %v339 = vld [vmem:[%s1 + $0x10] sm:$0xff]
        %v340 = vld [vmem:[%s1 + $0x18] sm:$0xff]
        %v341 = vld [vmem:[%s1 + $0x20] sm:$0xff]
        %v342 = vld [vmem:[%s1 + $0x28] sm:$0xff]
        %v343 = vld [vmem:[%s1 + $0x30] sm:$0xff]
        %v344 = vld [vmem:[%s1 + $0x38] sm:$0xff]
        %v345 = vld [vmem:[%s1 + $0x40] sm:$0xff]
        %v346 = vld [vmem:[%s1 + $0x48] sm:$0xff]
        %v347 = vld [vmem:[%s1 + $0x50] sm:$0xff]
        %v348 = vld [vmem:[%s1 + $0x58] sm:$0xff]
        %v349 = vld [vmem:[%s1 + $0x60] sm:$0xff]
        %v350 = vld [vmem:[%s1 + $0x68] sm:$0xff]
        %v351 = vld [vmem:[%s1 + $0x70] sm:$0xff]
        %v352 = vld [vmem:[%s1 + $0x78] sm:$0xff]
        %v353 = vld [vmem:[%s1 + $0x80] sm:$0xff]
        %v354 = vld [vmem:[%s1 + $0x88] sm:$0xff]
        %v355 = vld [vmem:[%s1 + $0x90] sm:$0xff]
        %v356 = vld [vmem:[%s1 + $0x98] sm:$0xff]
        %v357 = vld [vmem:[%s1 + $0xa0] sm:$0xff]
        %v358 = vld [vmem:[%s1 + $0xa8] sm:$0xff]
        %v359 = vld [vmem:[%s1 + $0xb0] sm:$0xff]
        %v360 = vld [vmem:[%s1 + $0xb8] sm:$0xff]
        %v361 = vld [vmem:[%s1 + $0xc0] sm:$0xff]
        %v362 = vld [vmem:[%s1 + $0xc8] sm:$0xff]
        %v363 = vld [vmem:[%s1 + $0xd0] sm:$0xff]
        %v364 = vld [vmem:[%s1 + $0xd8] sm:$0xff]
        %v365 = vld [vmem:[%s1 + $0xe0] sm:$0xff]
        %v366 = vld [vmem:[%s1 + $0xe8] sm:$0xff]
        %v367 = vld [vmem:[%s1 + $0xf0] sm:$0xff]
        %v368 = vld [vmem:[%s1 + $0xf8] sm:$0xff]
        %v369 = vld [vmem:[%s1 + $0x100] sm:$0xff]
        %v370 = vld [vmem:[%s1 + $0x108] sm:$0xff]
        %v371 = vld [vmem:[%s1 + $0x110] sm:$0xff]
        %v372 = vld [vmem:[%s1 + $0x118] sm:$0xff]
        %v373 = vld [vmem:[%s1 + $0x120] sm:$0xff]
        %v374 = vld [vmem:[%s1 + $0x128] sm:$0xff]
        %v375 = vld [vmem:[%s1 + $0x130] sm:$0xff]
        %v376 = vld [vmem:[%s1 + $0x138] sm:$0xff]
        %v377 = vld [vmem:[%s1 + $0x140] sm:$0xff]
        %v378 = vld [vmem:[%s1 + $0x148] sm:$0xff]
        %v379 = vld [vmem:[%s1 + $0x150] sm:$0xff]
        %v380 = vld [vmem:[%s1 + $0x158] sm:$0xff]
        %v381 = vld [vmem:[%s1 + $0x160] sm:$0xff]
        %v382 = vld [vmem:[%s1 + $0x168] sm:$0xff]
        %v383 = vld [vmem:[%s1 + $0x170] sm:$0xff]
        %v384 = vld [vmem:[%s1 + $0x178] sm:$0xff]
        %v385 = vld [vmem:[%s1 + $0x180] sm:$0xff]
        %v386 = vld [vmem:[%s1 + $0x188] sm:$0xff]
        %v387 = vld [vmem:[%s1 + $0x190] sm:$0xff]
        %v388 = vld [vmem:[%s1 + $0x198] sm:$0xff]
        %v389 = vld [vmem:[%s1 + $0x1a0] sm:$0xff]
        %v390 = vld [vmem:[%s1 + $0x1a8] sm:$0xff]
        %v391 = vld [vmem:[%s1 + $0x1b0] sm:$0xff]
        %v392 = vld [vmem:[%s1 + $0x1b8] sm:$0xff]
        %v393 = vld [vmem:[%s1 + $0x1c0] sm:$0xff]
        %v394 = vld [vmem:[%s1 + $0x1c8] sm:$0xff]
        %v395 = vld [vmem:[%s1 + $0x1d0] sm:$0xff]
        %v396 = vld [vmem:[%s1 + $0x1d8] sm:$0xff]
        %v397 = vld [vmem:[%s1 + $0x1e0] sm:$0xff]
        %v398 = vld [vmem:[%s1 + $0x1e8] sm:$0xff]
        %v399 = vld [vmem:[%s1 + $0x1f0] sm:$0xff]
        %v400 = vld [vmem:[%s1 + $0x1f8] sm:$0xff]
        %v401 = vld [vmem:[%s1 + $0x200] sm:$0xff]
        %v402 = vld [vmem:[%s1 + $0x208] sm:$0xff]
        %v403 = vld [vmem:[%s1 + $0x210] sm:$0xff]
        %v404 = vld [vmem:[%s1 + $0x218] sm:$0xff]
        %v405 = vld [vmem:[%s1 + $0x220] sm:$0xff]
        %v406 = vld [vmem:[%s1 + $0x228] sm:$0xff]
        %v407 = vld [vmem:[%s1 + $0x230] sm:$0xff]
        %v408 = vld [vmem:[%s1 + $0x238] sm:$0xff]
        %v409 = vld [vmem:[%s1 + $0x240] sm:$0xff]
        %v410 = vld [vmem:[%s1 + $0x248] sm:$0xff]
        %v411 = vld [vmem:[%s1 + $0x250] sm:$0xff]
        %v412 = vld [vmem:[%s1 + $0x258] sm:$0xff]
        %v413 = vld [vmem:[%s1 + $0x260] sm:$0xff]
        %v414 = vld [vmem:[%s1 + $0x268] sm:$0xff]
        %v415 = vld [vmem:[%s1 + $0x270] sm:$0xff]
        %v416 = vld [vmem:[%s1 + $0x278] sm:$0xff]
        %v417 = vld [vmem:[%s1 + $0x280] sm:$0xff]
        %v418 = vld [vmem:[%s1 + $0x288] sm:$0xff]
        %v419 = vld [vmem:[%s1 + $0x290] sm:$0xff]
        %v420 = vld [vmem:[%s1 + $0x298] sm:$0xff]
        %v421 = vld [vmem:[%s1 + $0x2a0] sm:$0xff]
        %v422 = vld [vmem:[%s1 + $0x2a8] sm:$0xff]
        %v423 = vld [vmem:[%s1 + $0x2b0] sm:$0xff]
        %v424 = vld [vmem:[%s1 + $0x2b8] sm:$0xff]
        %v425 = vld [vmem:[%s1 + $0x2c0] sm:$0xff]
        %v426 = vld [vmem:[%s1 + $0x2c8] sm:$0xff]
        %v427 = vld [vmem:[%s1 + $0x2d0] sm:$0xff]
        %v428 = vld [vmem:[%s1 + $0x2d8] sm:$0xff]
        %v429 = vld [vmem:[%s1 + $0x2e0] sm:$0xff]
        %v430 = vld [vmem:[%s1 + $0x2e8] sm:$0xff]
        %v431 = vld [vmem:[%s1 + $0x2f0] sm:$0xff]
        %v432 = vld [vmem:[%s1 + $0x2f8] sm:$0xff]
        %v433 = vld [vmem:[%s2] sm:$0x3f]
        %v435 = vlaneseq
        %v436 = vshrl.u32 %v435, 7
        %v437 = vsub.s32 0, %v436
        %v438 = vrot.slane %v433, %v437
        %v439 = vlaneseq
        %v440 = vshrl.u32 %v439, 7
        %v441 = vsub.s32 1, %v440
        %v442 = vrot.slane %v433, %v441
        %v443 = vlaneseq
        %v444 = vshrl.u32 %v443, 7
        %v445 = vsub.s32 2, %v444
        %v446 = vrot.slane %v433, %v445
        %v447 = vlaneseq
        %v448 = vshrl.u32 %v447, 7
        %v449 = vsub.s32 3, %v448
        %v450 = vrot.slane %v433, %v449
        %v451 = vlaneseq
        %v452 = vshrl.u32 %v451, 7
        %v453 = vsub.s32 4, %v452
        %v454 = vrot.slane %v433, %v453
        %v455 = vlaneseq
        %v456 = vshrl.u32 %v455, 7
        %v457 = vsub.s32 5, %v456
        %v458 = vrot.slane %v433, %v457
        %v561 = vunpack.c.l.b16 %v337
        %v562 = vunpack.c.h.b16 %v337
        %v563 = vunpack.c.l.b16 %v338
        %v564 = vunpack.c.h.b16 %v338
        %v565 = vunpack.c.l.b16 %v339
        %v566 = vunpack.c.h.b16 %v339
        %v567 = vunpack.c.l.b16 %v340
        %v568 = vunpack.c.h.b16 %v340
        %v569 = vunpack.c.l.b16 %v341
        %v570 = vunpack.c.h.b16 %v341
        %v571 = vunpack.c.l.b16 %v342
        %v572 = vunpack.c.h.b16 %v342
        %v573 = vunpack.c.l.b16 %v343
        %v574 = vunpack.c.h.b16 %v343
        %v575 = vunpack.c.l.b16 %v344
        %v576 = vunpack.c.h.b16 %v344
        %v577 = vunpack.c.l.b16 %v345
        %v578 = vunpack.c.h.b16 %v345
        %v579 = vunpack.c.l.b16 %v346
        %v580 = vunpack.c.h.b16 %v346
        %v581 = vunpack.c.l.b16 %v347
        %v582 = vunpack.c.h.b16 %v347
        %v583 = vunpack.c.l.b16 %v348
        %v584 = vunpack.c.h.b16 %v348
        %v585 = vunpack.c.l.b16 %v349
        %v586 = vunpack.c.h.b16 %v349
        %v587 = vunpack.c.l.b16 %v350
        %v588 = vunpack.c.h.b16 %v350
        %v589 = vunpack.c.l.b16 %v351
        %v590 = vunpack.c.h.b16 %v351
        %v591 = vunpack.c.l.b16 %v352
        %v592 = vunpack.c.h.b16 %v352
        %v593 = vunpack.c.l.b16 %v353
        %v594 = vunpack.c.h.b16 %v353
        %v595 = vunpack.c.l.b16 %v354
        %v596 = vunpack.c.h.b16 %v354
        %v597 = vunpack.c.l.b16 %v355
        %v598 = vunpack.c.h.b16 %v355
        %v599 = vunpack.c.l.b16 %v356
        %v600 = vunpack.c.h.b16 %v356
        %v601 = vunpack.c.l.b16 %v357
        %v602 = vunpack.c.h.b16 %v357
        %v603 = vunpack.c.l.b16 %v358
        %v604 = vunpack.c.h.b16 %v358
        %v605 = vunpack.c.l.b16 %v359
        %v606 = vunpack.c.h.b16 %v359
        %v607 = vunpack.c.l.b16 %v360
        %v608 = vunpack.c.h.b16 %v360
        %v609 = vunpack.c.l.b16 %v361
        %v610 = vunpack.c.h.b16 %v361
        %v611 = vunpack.c.l.b16 %v362
        %v612 = vunpack.c.h.b16 %v362
        %v613 = vunpack.c.l.b16 %v363
        %v614 = vunpack.c.h.b16 %v363
        %v615 = vunpack.c.l.b16 %v364
        %v616 = vunpack.c.h.b16 %v364
        %v617 = vunpack.c.l.b16 %v365
        %v618 = vunpack.c.h.b16 %v365
        %v619 = vunpack.c.l.b16 %v366
        %v620 = vunpack.c.h.b16 %v366
        %v621 = vunpack.c.l.b16 %v367
        %v622 = vunpack.c.h.b16 %v367
        %v623 = vunpack.c.l.b16 %v368
        %v624 = vunpack.c.h.b16 %v368
        %v625 = vunpack.c.l.b16 %v369
        %v626 = vunpack.c.h.b16 %v369
        %v627 = vunpack.c.l.b16 %v370
        %v628 = vunpack.c.h.b16 %v370
        %v629 = vunpack.c.l.b16 %v371
        %v630 = vunpack.c.h.b16 %v371
        %v631 = vunpack.c.l.b16 %v372
        %v632 = vunpack.c.h.b16 %v372
        %v633 = vunpack.c.l.b16 %v373
        %v634 = vunpack.c.h.b16 %v373
        %v635 = vunpack.c.l.b16 %v374
        %v636 = vunpack.c.h.b16 %v374
        %v637 = vunpack.c.l.b16 %v375
        %v638 = vunpack.c.h.b16 %v375
        %v639 = vunpack.c.l.b16 %v376
        %v640 = vunpack.c.h.b16 %v376
        %v641 = vunpack.c.l.b16 %v377
        %v642 = vunpack.c.h.b16 %v377
        %v643 = vunpack.c.l.b16 %v378
        %v644 = vunpack.c.h.b16 %v378
        %v645 = vunpack.c.l.b16 %v379
        %v646 = vunpack.c.h.b16 %v379
        %v647 = vunpack.c.l.b16 %v380
        %v648 = vunpack.c.h.b16 %v380
        %v649 = vunpack.c.l.b16 %v381
        %v650 = vunpack.c.h.b16 %v381
        %v651 = vunpack.c.l.b16 %v382
        %v652 = vunpack.c.h.b16 %v382
        %v653 = vunpack.c.l.b16 %v383
        %v654 = vunpack.c.h.b16 %v383
        %v655 = vunpack.c.l.b16 %v384
        %v656 = vunpack.c.h.b16 %v384
        %v657 = vunpack.c.l.b16 %v385
        %v658 = vunpack.c.h.b16 %v385
        %v659 = vunpack.c.l.b16 %v386
        %v660 = vunpack.c.h.b16 %v386
        %v661 = vunpack.c.l.b16 %v387
        %v662 = vunpack.c.h.b16 %v387
        %v663 = vunpack.c.l.b16 %v388
        %v664 = vunpack.c.h.b16 %v388
        %v665 = vunpack.c.l.b16 %v389
        %v666 = vunpack.c.h.b16 %v389
        %v667 = vunpack.c.l.b16 %v390
        %v668 = vunpack.c.h.b16 %v390
        %v669 = vunpack.c.l.b16 %v391
        %v670 = vunpack.c.h.b16 %v391
        %v671 = vunpack.c.l.b16 %v392
        %v672 = vunpack.c.h.b16 %v392
        %v673 = vunpack.c.l.b16 %v393
        %v674 = vunpack.c.h.b16 %v393
        %v675 = vunpack.c.l.b16 %v394
        %v676 = vunpack.c.h.b16 %v394
        %v677 = vunpack.c.l.b16 %v395
        %v678 = vunpack.c.h.b16 %v395
        %v679 = vunpack.c.l.b16 %v396
        %v680 = vunpack.c.h.b16 %v396
        %v681 = vunpack.c.l.b16 %v397
        %v682 = vunpack.c.h.b16 %v397
        %v683 = vunpack.c.l.b16 %v398
        %v684 = vunpack.c.h.b16 %v398
        %v685 = vunpack.c.l.b16 %v399
        %v686 = vunpack.c.h.b16 %v399
        %v687 = vunpack.c.l.b16 %v400
        %v688 = vunpack.c.h.b16 %v400
        %v689 = vunpack.c.l.b16 %v401
        %v690 = vunpack.c.h.b16 %v401
        %v691 = vunpack.c.l.b16 %v402
        %v692 = vunpack.c.h.b16 %v402
        %v693 = vunpack.c.l.b16 %v403
        %v694 = vunpack.c.h.b16 %v403
        %v695 = vunpack.c.l.b16 %v404
        %v696 = vunpack.c.h.b16 %v404
        %v697 = vunpack.c.l.b16 %v405
        %v698 = vunpack.c.h.b16 %v405
        %v699 = vunpack.c.l.b16 %v406
        %v700 = vunpack.c.h.b16 %v406
        %v701 = vunpack.c.l.b16 %v407
        %v702 = vunpack.c.h.b16 %v407
        %v703 = vunpack.c.l.b16 %v408
        %v704 = vunpack.c.h.b16 %v408
        %v705 = vunpack.c.l.b16 %v409
        %v706 = vunpack.c.h.b16 %v409
        %v707 = vunpack.c.l.b16 %v410
        %v708 = vunpack.c.h.b16 %v410
        %v709 = vunpack.c.l.b16 %v411
        %v710 = vunpack.c.h.b16 %v411
        %v711 = vunpack.c.l.b16 %v412
        %v712 = vunpack.c.h.b16 %v412
        %v713 = vunpack.c.l.b16 %v413
        %v714 = vunpack.c.h.b16 %v413
        %v715 = vunpack.c.l.b16 %v414
        %v716 = vunpack.c.h.b16 %v414
        %v717 = vunpack.c.l.b16 %v415
        %v718 = vunpack.c.h.b16 %v415
        %v719 = vunpack.c.l.b16 %v416
        %v720 = vunpack.c.h.b16 %v416
        %v721 = vunpack.c.l.b16 %v417
        %v722 = vunpack.c.h.b16 %v417
        %v723 = vunpack.c.l.b16 %v418
        %v724 = vunpack.c.h.b16 %v418
        %v725 = vunpack.c.l.b16 %v419
        %v726 = vunpack.c.h.b16 %v419
        %v727 = vunpack.c.l.b16 %v420
        %v728 = vunpack.c.h.b16 %v420
        %v729 = vunpack.c.l.b16 %v421
        %v730 = vunpack.c.h.b16 %v421
        %v731 = vunpack.c.l.b16 %v422
        %v732 = vunpack.c.h.b16 %v422
        %v733 = vunpack.c.l.b16 %v423
        %v734 = vunpack.c.h.b16 %v423
        %v735 = vunpack.c.l.b16 %v424
        %v736 = vunpack.c.h.b16 %v424
        %v737 = vunpack.c.l.b16 %v425
        %v738 = vunpack.c.h.b16 %v425
        %v739 = vunpack.c.l.b16 %v426
        %v740 = vunpack.c.h.b16 %v426
        %v741 = vunpack.c.l.b16 %v427
        %v742 = vunpack.c.h.b16 %v427
        %v743 = vunpack.c.l.b16 %v428
        %v744 = vunpack.c.h.b16 %v428
        %v745 = vunpack.c.l.b16 %v429
        %v746 = vunpack.c.h.b16 %v429
        %v747 = vunpack.c.l.b16 %v430
        %v748 = vunpack.c.h.b16 %v430
        %v749 = vunpack.c.l.b16 %v431
        %v750 = vunpack.c.h.b16 %v431
        %v751 = vunpack.c.l.b16 %v432
        %v752 = vunpack.c.h.b16 %v432
        %v753 = vpack.c.b16 %v567, %v561
        %v754 = vpack.c.b16 %v568, %v562
        %v755 = vpack.c.b16 %v569, %v563
        %v756 = vpack.c.b16 %v570, %v564
        %v757 = vpack.c.b16 %v571, %v565
        %v758 = vpack.c.b16 %v572, %v566
        %v759 = vpack.c.b16 %v579, %v573
        %v760 = vpack.c.b16 %v580, %v574
        %v761 = vpack.c.b16 %v581, %v575
        %v762 = vpack.c.b16 %v582, %v576
        %v763 = vpack.c.b16 %v583, %v577
        %v764 = vpack.c.b16 %v584, %v578
        %v765 = vpack.c.b16 %v591, %v585
        %v766 = vpack.c.b16 %v592, %v586
        %v767 = vpack.c.b16 %v593, %v587
        %v768 = vpack.c.b16 %v594, %v588
        %v769 = vpack.c.b16 %v595, %v589
        %v770 = vpack.c.b16 %v596, %v590
        %v771 = vpack.c.b16 %v603, %v597
        %v772 = vpack.c.b16 %v604, %v598
        %v773 = vpack.c.b16 %v605, %v599
        %v774 = vpack.c.b16 %v606, %v600
        %v775 = vpack.c.b16 %v607, %v601
        %v776 = vpack.c.b16 %v608, %v602
        %v777 = vpack.c.b16 %v615, %v609
        %v778 = vpack.c.b16 %v616, %v610
        %v779 = vpack.c.b16 %v617, %v611
        %v780 = vpack.c.b16 %v618, %v612
        %v781 = vpack.c.b16 %v619, %v613
        %v782 = vpack.c.b16 %v620, %v614
        %v783 = vpack.c.b16 %v627, %v621
        %v784 = vpack.c.b16 %v628, %v622
        %v785 = vpack.c.b16 %v629, %v623
        %v786 = vpack.c.b16 %v630, %v624
        %v787 = vpack.c.b16 %v631, %v625
        %v788 = vpack.c.b16 %v632, %v626
        %v789 = vpack.c.b16 %v639, %v633
        %v790 = vpack.c.b16 %v640, %v634
        %v791 = vpack.c.b16 %v641, %v635
        %v792 = vpack.c.b16 %v642, %v636
        %v793 = vpack.c.b16 %v643, %v637
        %v794 = vpack.c.b16 %v644, %v638
        %v795 = vpack.c.b16 %v651, %v645
        %v796 = vpack.c.b16 %v652, %v646
        %v797 = vpack.c.b16 %v653, %v647
        %v798 = vpack.c.b16 %v654, %v648
        %v799 = vpack.c.b16 %v655, %v649
        %v800 = vpack.c.b16 %v656, %v650
        %v801 = vpack.c.b16 %v663, %v657
        %v802 = vpack.c.b16 %v664, %v658
        %v803 = vpack.c.b16 %v665, %v659
        %v804 = vpack.c.b16 %v666, %v660
        %v805 = vpack.c.b16 %v667, %v661
        %v806 = vpack.c.b16 %v668, %v662
        %v807 = vpack.c.b16 %v675, %v669
        %v808 = vpack.c.b16 %v676, %v670
        %v809 = vpack.c.b16 %v677, %v671
        %v810 = vpack.c.b16 %v678, %v672
        %v811 = vpack.c.b16 %v679, %v673
        %v812 = vpack.c.b16 %v680, %v674
        %v813 = vpack.c.b16 %v687, %v681
        %v814 = vpack.c.b16 %v688, %v682
        %v815 = vpack.c.b16 %v689, %v683
        %v816 = vpack.c.b16 %v690, %v684
        %v817 = vpack.c.b16 %v691, %v685
        %v818 = vpack.c.b16 %v692, %v686
        %v819 = vpack.c.b16 %v699, %v693
        %v820 = vpack.c.b16 %v700, %v694
        %v821 = vpack.c.b16 %v701, %v695
        %v822 = vpack.c.b16 %v702, %v696
        %v823 = vpack.c.b16 %v703, %v697
        %v824 = vpack.c.b16 %v704, %v698
        %v825 = vpack.c.b16 %v711, %v705
        %v826 = vpack.c.b16 %v712, %v706
        %v827 = vpack.c.b16 %v713, %v707
        %v828 = vpack.c.b16 %v714, %v708
        %v829 = vpack.c.b16 %v715, %v709
        %v830 = vpack.c.b16 %v716, %v710
        %v831 = vpack.c.b16 %v723, %v717
        %v832 = vpack.c.b16 %v724, %v718
        %v833 = vpack.c.b16 %v725, %v719
        %v834 = vpack.c.b16 %v726, %v720
        %v835 = vpack.c.b16 %v727, %v721
        %v836 = vpack.c.b16 %v728, %v722
        %v837 = vpack.c.b16 %v735, %v729
        %v838 = vpack.c.b16 %v736, %v730
        %v839 = vpack.c.b16 %v737, %v731
        %v840 = vpack.c.b16 %v738, %v732
        %v841 = vpack.c.b16 %v739, %v733
        %v842 = vpack.c.b16 %v740, %v734
        %v843 = vpack.c.b16 %v747, %v741
        %v844 = vpack.c.b16 %v748, %v742
        %v845 = vpack.c.b16 %v749, %v743
        %v846 = vpack.c.b16 %v750, %v744
        %v847 = vpack.c.b16 %v751, %v745
        %v848 = vpack.c.b16 %v752, %v746
        %945 = vmatprep.subr.bf16.mxu0 %v754
        %946 = vmatpush1.bf16.msra.mxu0 %v753
        %947 = vmatprep.subr.bf16.mxu0 %v760
        %948 = vmatpush1.bf16.msra.mxu0 %v759
        %949 = vmatprep.subr.bf16.mxu0 %v766
        %950 = vmatpush1.bf16.msra.mxu0 %v765
        %951 = vmatprep.subr.bf16.mxu0 %v772
        %952 = vmatpush1.bf16.msra.mxu0 %v771
        %953 = vmatprep.subr.bf16.mxu0 %v778
        %954 = vmatpush1.bf16.msra.mxu0 %v777
        %955 = vmatprep.subr.bf16.mxu0 %v784
        %956 = vmatpush1.bf16.msra.mxu0 %v783
        %957 = vmatprep.subr.bf16.mxu0 %v790
        %958 = vmatpush1.bf16.msra.mxu0 %v789
        %959 = vmatprep.subr.bf16.mxu0 %v796
        %960 = vmatpush1.bf16.msra.mxu0 %v795
        %961 = vmatprep.subr.bf16.mxu0 %v802
        %962 = vmatpush1.bf16.msra.mxu0 %v801
        %963 = vmatprep.subr.bf16.mxu0 %v808
        %964 = vmatpush1.bf16.msra.mxu0 %v807
        %965 = vmatprep.subr.bf16.mxu0 %v814
        %966 = vmatpush1.bf16.msra.mxu0 %v813
        %967 = vmatprep.subr.bf16.mxu0 %v820
        %968 = vmatpush1.bf16.msra.mxu0 %v819
        %969 = vmatprep.subr.bf16.mxu0 %v826
        %970 = vmatpush1.bf16.msra.mxu0 %v825
        %971 = vmatprep.subr.bf16.mxu0 %v832
        %972 = vmatpush1.bf16.msra.mxu0 %v831
        %973 = vmatprep.subr.bf16.mxu0 %v838
        %974 = vmatpush1.bf16.msra.mxu0 %v837
        %975 = vmatprep.subr.bf16.mxu0 %v844
        %976 = vmatpush1.bf16.msra.mxu0 %v843
        %977 = vmatprep.mubr.bf16.mxu0 %v336
        %978 = vmatmul.mubr.bf16.gmra.mrb[0].mxu0 %v335
        %v979 = vpop.f32.mrb[0].mxu0
        %v980 = vadd.f32 %v438, %v979
        %v981 = vpop.f32.mrb[0].mxu0
        %v982 = vadd.f32 %v442, %v981
        %v983 = vpop.f32.mrb[0].mxu0
        %v984 = vpop.f32.mrb[0].mxu0
        %985 = vdwg.mxu0
        %986 = vmatprep.subr.bf16.mxu0 %v756
        %987 = vmatpush1.bf16.msra.mxu0 %v755
        %988 = vmatprep.subr.bf16.mxu0 %v762
        %989 = vmatpush1.bf16.msra.mxu0 %v761
        %990 = vmatprep.subr.bf16.mxu0 %v768
        %991 = vmatpush1.bf16.msra.mxu0 %v767
        %992 = vmatprep.subr.bf16.mxu0 %v774
        %993 = vmatpush1.bf16.msra.mxu0 %v773
        %994 = vmatprep.subr.bf16.mxu0 %v780
        %995 = vmatpush1.bf16.msra.mxu0 %v779
        %996 = vmatprep.subr.bf16.mxu0 %v786
        %997 = vmatpush1.bf16.msra.mxu0 %v785
        %998 = vmatprep.subr.bf16.mxu0 %v792
        %999 = vmatpush1.bf16.msra.mxu0 %v791
        %1000 = vmatprep.subr.bf16.mxu0 %v798
        %1001 = vmatpush1.bf16.msra.mxu0 %v797
        %1002 = vmatprep.subr.bf16.mxu0 %v804
        %1003 = vmatpush1.bf16.msra.mxu0 %v803
        %1004 = vmatprep.subr.bf16.mxu0 %v810
        %1005 = vmatpush1.bf16.msra.mxu0 %v809
        %1006 = vmatprep.subr.bf16.mxu0 %v816
        %1007 = vmatpush1.bf16.msra.mxu0 %v815
        %1008 = vmatprep.subr.bf16.mxu0 %v822
        %1009 = vmatpush1.bf16.msra.mxu0 %v821
        %1010 = vmatprep.subr.bf16.mxu0 %v828
        %1011 = vmatpush1.bf16.msra.mxu0 %v827
        %1012 = vmatprep.subr.bf16.mxu0 %v834
        %1013 = vmatpush1.bf16.msra.mxu0 %v833
        %1014 = vmatprep.subr.bf16.mxu0 %v840
        %1015 = vmatpush1.bf16.msra.mxu0 %v839
        %1016 = vmatprep.subr.bf16.mxu0 %v846
        %1017 = vmatpush1.bf16.msra.mxu0 %v845
        %1018 = vmatprep.mubr.bf16.mxu0 %v336
        %1019 = vmatmul.mubr.bf16.gmra.mrb[0].mxu0 %v335
        %v1020 = vpop.f32.mrb[0].mxu0
        %v1021 = vadd.f32 %v446, %v1020
        %v1022 = vpop.f32.mrb[0].mxu0
        %v1023 = vadd.f32 %v450, %v1022
        %v1024 = vpop.f32.mrb[0].mxu0
        %v1025 = vpop.f32.mrb[0].mxu0
        %1026 = vdwg.mxu0
        %1027 = vmatprep.subr.bf16.mxu0 %v758
        %1028 = vmatpush1.bf16.msra.mxu0 %v757
        %1029 = vmatprep.subr.bf16.mxu0 %v764
        %1030 = vmatpush1.bf16.msra.mxu0 %v763
        %1031 = vmatprep.subr.bf16.mxu0 %v770
        %1032 = vmatpush1.bf16.msra.mxu0 %v769
        %1033 = vmatprep.subr.bf16.mxu0 %v776
        %1034 = vmatpush1.bf16.msra.mxu0 %v775
        %1035 = vmatprep.subr.bf16.mxu0 %v782
        %1036 = vmatpush1.bf16.msra.mxu0 %v781
        %1037 = vmatprep.subr.bf16.mxu0 %v788
        %1038 = vmatpush1.bf16.msra.mxu0 %v787
        %1039 = vmatprep.subr.bf16.mxu0 %v794
        %1040 = vmatpush1.bf16.msra.mxu0 %v793
        %1041 = vmatprep.subr.bf16.mxu0 %v800
        %1042 = vmatpush1.bf16.msra.mxu0 %v799
        %1043 = vmatprep.subr.bf16.mxu0 %v806
        %1044 = vmatpush1.bf16.msra.mxu0 %v805
        %1045 = vmatprep.subr.bf16.mxu0 %v812
        %1046 = vmatpush1.bf16.msra.mxu0 %v811
        %1047 = vmatprep.subr.bf16.mxu0 %v818
        %1048 = vmatpush1.bf16.msra.mxu0 %v817
        %1049 = vmatprep.subr.bf16.mxu0 %v824
        %1050 = vmatpush1.bf16.msra.mxu0 %v823
        %1051 = vmatprep.subr.bf16.mxu0 %v830
        %1052 = vmatpush1.bf16.msra.mxu0 %v829
        %1053 = vmatprep.subr.bf16.mxu0 %v836
        %1054 = vmatpush1.bf16.msra.mxu0 %v835
        %1055 = vmatprep.subr.bf16.mxu0 %v842
        %1056 = vmatpush1.bf16.msra.mxu0 %v841
        %1057 = vmatprep.subr.bf16.mxu0 %v848
        %1058 = vmatpush1.bf16.msra.mxu0 %v847
        %1059 = vmatprep.mubr.bf16.mxu0 %v336
        %1060 = vmatmul.mubr.bf16.gmra.mrb[0].mxu0 %v335
        %v1061 = vpop.f32.mrb[0].mxu0
        %v1062 = vadd.f32 %v454, %v1061
        %v1063 = vpop.f32.mrb[0].mxu0
        %v1064 = vadd.f32 %v458, %v1063
        %v1065 = vpop.f32.mrb[0].mxu0
        %v1066 = vpop.f32.mrb[0].mxu0
        %1067 = vdwg.mxu0
        %v1068 = vlaneseq
        %v1069 = vshrl.u32 %v1068, 7
        %v1070 = vlaneseq
        %v1071 = vand.u32 %v1070, 127
        %vm1072 = vcmp.gt.s32.totalorder %v1071, %v1069
        %v1073 = vpack.c.bf16 %v980, %v980
        %v1074 = vpack.c.bf16 %v1021, %v1021
        %vm1075 = vcmask 523264
        %v1077 = vsel %vm1075, %v1073, 0
        %v1080 = vsel %vm1075, %v1074, 0
        %1082 = vmatprep.subr.bf16.mxu0 0
        %1083 = vmatpush1.bf16.xpose.msra.mxu0 %v1080
        %1084 = vmatprep.subr.bf16.mxu0 0
        %1085 = vmatpush1.bf16.xpose.msra.mxu0 0
        %1086 = vmatprep.subr.bf16.mxu0 0
        %1087 = vmatpush1.bf16.xpose.msra.mxu0 0
        %1088 = vmatprep.subr.bf16.mxu0 0
        %1089 = vmatpush1.bf16.xpose.msra.mxu0 0
        %1090 = vmatprep.subr.bf16.mxu0 0
        %1091 = vmatpush1.bf16.xpose.msra.mxu0 0
        %1092 = vmatprep.subr.bf16.mxu0 0
        %1093 = vmatpush1.bf16.xpose.msra.mxu0 0
        %1094 = vmatprep.subr.bf16.mxu0 0
        %1095 = vmatpush1.bf16.xpose.msra.mxu0 0
        %1096 = vmatprep.subr.bf16.mxu0 0
        %1097 = vmatpush1.bf16.xpose.msra.mxu0 0
        %1098 = vmatprep.subr.bf16.mxu0 0
        %1099 = vmatpush1.bf16.xpose.msra.mxu0 0
        %1100 = vmatprep.subr.bf16.mxu0 0
        %1101 = vmatpush1.bf16.xpose.msra.mxu0 0
        %1102 = vmatprep.subr.bf16.mxu0 0
        %1103 = vmatpush1.bf16.xpose.msra.mxu0 0
        %1104 = vmatprep.subr.bf16.mxu0 0
        %1105 = vmatpush1.bf16.xpose.msra.mxu0 0
        %1106 = vmatprep.subr.bf16.mxu0 0
        %1107 = vmatpush1.bf16.xpose.msra.mxu0 0
        %1108 = vmatprep.subr.bf16.mxu0 0
        %1109 = vmatpush1.bf16.xpose.msra.mxu0 0
        %1110 = vmatprep.subr.bf16.mxu0 0
        %1111 = vmatpush1.bf16.xpose.msra.mxu0 0
        %1112 = vmatprep.subr.bf16.mxu0 0
        %1113 = vmatpush1.bf16.xpose.msra.mxu0 0
        %1114 = vmatprep.mubr.bf16.mxu0 0
        %1115 = vmatmul.mubr.bf16.gmra.mrb[0].mxu0 %v1077
        %v1116 = vpop.f32.mrb[0].mxu0
        %v1117 = vadd.f32 0.0, %v1116
        %v1118 = vpop.f32.mrb[0].mxu0
        %v1119 = vpop.f32.mrb[0].mxu0
        %v1120 = vpop.f32.mrb[0].mxu0
        %1121 = vdwg.mxu0
        %v1122 = vmul.f32 %v1117, 0.125
        %v1123 = vsel %vm1072, -1e+30, %v1122
        %vm1124 = vcmask 64512
        %v1125 = vsel %vm1124, %v1123, -inf
        %1126 = vmax.xlane.f32.xlu0 %v1125
        %v1127 = vpop.xlane.xlu0 %1126
        %v1128 = vsub.f32 %v1123, %v1127
        %v1129 = vmul.f32 %v1128, 1.442695
        %v1130 = vpow.pop %v1129
        %v1131 = vsel %vm1124, %v1130, 0.0
        %1132 = vadd.xlane.f32.xlu0 %v1131
        %v1133 = vpop.xlane.xlu0 %1132
        %v1134 = vrcp.pop %v1133
        %v1135 = vmul.f32 %v1130, %v1134
        %v1136 = vpack.c.bf16 %v1135, %v1135
        %v1137 = vpack.c.bf16 %v1062, %v1062
        %v1139 = vsel %vm1124, %v1136, 0
        %vm1141 = vcmask 1043456
        %v1143 = vsel %vm1141, %v1137, 0
        %1145 = vmatprep.subr.bf16.mxu0 0
        %1146 = vmatpush1.bf16.msra.mxu0 %v1143
        %1147 = vmatprep.subr.bf16.mxu0 0
        %1148 = vmatpush1.bf16.msra.mxu0 0
        %1149 = vmatprep.subr.bf16.mxu0 0
        %1150 = vmatpush1.bf16.msra.mxu0 0
        %1151 = vmatprep.subr.bf16.mxu0 0
        %1152 = vmatpush1.bf16.msra.mxu0 0
        %1153 = vmatprep.subr.bf16.mxu0 0
        %1154 = vmatpush1.bf16.msra.mxu0 0
        %1155 = vmatprep.subr.bf16.mxu0 0
        %1156 = vmatpush1.bf16.msra.mxu0 0
        %1157 = vmatprep.subr.bf16.mxu0 0
        %1158 = vmatpush1.bf16.msra.mxu0 0
        %1159 = vmatprep.subr.bf16.mxu0 0
        %1160 = vmatpush1.bf16.msra.mxu0 0
        %1161 = vmatprep.subr.bf16.mxu0 0
        %1162 = vmatpush1.bf16.msra.mxu0 0
        %1163 = vmatprep.subr.bf16.mxu0 0
        %1164 = vmatpush1.bf16.msra.mxu0 0
        %1165 = vmatprep.subr.bf16.mxu0 0
        %1166 = vmatpush1.bf16.msra.mxu0 0
        %1167 = vmatprep.subr.bf16.mxu0 0
        %1168 = vmatpush1.bf16.msra.mxu0 0
        %1169 = vmatprep.subr.bf16.mxu0 0
        %1170 = vmatpush1.bf16.msra.mxu0 0
        %1171 = vmatprep.subr.bf16.mxu0 0
        %1172 = vmatpush1.bf16.msra.mxu0 0
        %1173 = vmatprep.subr.bf16.mxu0 0
        %1174 = vmatpush1.bf16.msra.mxu0 0
        %1175 = vmatprep.subr.bf16.mxu0 0
        %1176 = vmatpush1.bf16.msra.mxu0 0
        %1177 = vmatprep.mubr.bf16.mxu0 0
        %1178 = vmatmul.mubr.bf16.gmra.mrb[0].mxu0 %v1139
        %v1179 = vpop.f32.mrb[0].mxu0
        %v1180 = vadd.f32 0.0, %v1179
        %v1181 = vpop.f32.mrb[0].mxu0
        %v1182 = vpop.f32.mrb[0].mxu0
        %v1183 = vpop.f32.mrb[0].mxu0
        %1184 = vdwg.mxu0
        %1186 = vrot.lane.b32.xlu0 %v1073, 64
        %v1187 = vpop.permute.xlu0 %1186
        %1189 = vrot.lane.b32.xlu0 %v1074, 64
        %v1190 = vpop.permute.xlu0 %1189
        %v1192 = vsel %vm1075, %v1187, 0
        %v1195 = vsel %vm1075, %v1190, 0
        %1197 = vmatprep.subr.bf16.mxu0 0
        %1198 = vmatpush1.bf16.xpose.msra.mxu0 %v1195
        %1199 = vmatprep.subr.bf16.mxu0 0
        %1200 = vmatpush1.bf16.xpose.msra.mxu0 0
        %1201 = vmatprep.subr.bf16.mxu0 0
        %1202 = vmatpush1.bf16.xpose.msra.mxu0 0
        %1203 = vmatprep.subr.bf16.mxu0 0
        %1204 = vmatpush1.bf16.xpose.msra.mxu0 0
        %1205 = vmatprep.subr.bf16.mxu0 0
        %1206 = vmatpush1.bf16.xpose.msra.mxu0 0
        %1207 = vmatprep.subr.bf16.mxu0 0
        %1208 = vmatpush1.bf16.xpose.msra.mxu0 0
        %1209 = vmatprep.subr.bf16.mxu0 0
        %1210 = vmatpush1.bf16.xpose.msra.mxu0 0
        %1211 = vmatprep.subr.bf16.mxu0 0
        %1212 = vmatpush1.bf16.xpose.msra.mxu0 0
        %1213 = vmatprep.subr.bf16.mxu0 0
        %1214 = vmatpush1.bf16.xpose.msra.mxu0 0
        %1215 = vmatprep.subr.bf16.mxu0 0
        %1216 = vmatpush1.bf16.xpose.msra.mxu0 0
        %1217 = vmatprep.subr.bf16.mxu0 0
        %1218 = vmatpush1.bf16.xpose.msra.mxu0 0
        %1219 = vmatprep.subr.bf16.mxu0 0
        %1220 = vmatpush1.bf16.xpose.msra.mxu0 0
        %1221 = vmatprep.subr.bf16.mxu0 0
        %1222 = vmatpush1.bf16.xpose.msra.mxu0 0
        %1223 = vmatprep.subr.bf16.mxu0 0
        %1224 = vmatpush1.bf16.xpose.msra.mxu0 0
        %1225 = vmatprep.subr.bf16.mxu0 0
        %1226 = vmatpush1.bf16.xpose.msra.mxu0 0
        %1227 = vmatprep.subr.bf16.mxu0 0
        %1228 = vmatpush1.bf16.xpose.msra.mxu0 0
        %1229 = vmatprep.mubr.bf16.mxu0 0
        %1230 = vmatmul.mubr.bf16.gmra.mrb[0].mxu0 %v1192
        %v1231 = vpop.f32.mrb[0].mxu0
        %v1232 = vadd.f32 0.0, %v1231
        %v1233 = vpop.f32.mrb[0].mxu0
        %v1234 = vpop.f32.mrb[0].mxu0
        %v1235 = vpop.f32.mrb[0].mxu0
        %1236 = vdwg.mxu0
        %v1237 = vmul.f32 %v1232, 0.125
        %v1238 = vsel %vm1072, -1e+30, %v1237
        %v1239 = vsel %vm1124, %v1238, -inf
        %1240 = vmax.xlane.f32.xlu0 %v1239
        %v1241 = vpop.xlane.xlu0 %1240
        %v1242 = vsub.f32 %v1238, %v1241
        %v1243 = vmul.f32 %v1242, 1.442695
        %v1244 = vpow.pop %v1243
        %v1245 = vsel %vm1124, %v1244, 0.0
        %1246 = vadd.xlane.f32.xlu0 %v1245
        %v1247 = vpop.xlane.xlu0 %1246
        %v1248 = vrcp.pop %v1247
        %v1249 = vmul.f32 %v1244, %v1248
        %v1250 = vpack.c.bf16 %v1249, %v1249
        %1252 = vrot.lane.b32.xlu0 %v1137, 64
        %v1253 = vpop.permute.xlu0 %1252
        %v1255 = vsel %vm1124, %v1250, 0
        %v1258 = vsel %vm1141, %v1253, 0
        %1260 = vmatprep.subr.bf16.mxu0 0
        %1261 = vmatpush1.bf16.msra.mxu0 %v1258
        %1262 = vmatprep.subr.bf16.mxu0 0
        %1263 = vmatpush1.bf16.msra.mxu0 0
        %1264 = vmatprep.subr.bf16.mxu0 0
        %1265 = vmatpush1.bf16.msra.mxu0 0
        %1266 = vmatprep.subr.bf16.mxu0 0
        %1267 = vmatpush1.bf16.msra.mxu0 0
        %1268 = vmatprep.subr.bf16.mxu0 0
        %1269 = vmatpush1.bf16.msra.mxu0 0
        %1270 = vmatprep.subr.bf16.mxu0 0
        %1271 = vmatpush1.bf16.msra.mxu0 0
        %1272 = vmatprep.subr.bf16.mxu0 0
        %1273 = vmatpush1.bf16.msra.mxu0 0
        %1274 = vmatprep.subr.bf16.mxu0 0
        %1275 = vmatpush1.bf16.msra.mxu0 0
        %1276 = vmatprep.subr.bf16.mxu0 0
        %1277 = vmatpush1.bf16.msra.mxu0 0
        %1278 = vmatprep.subr.bf16.mxu0 0
        %1279 = vmatpush1.bf16.msra.mxu0 0
        %1280 = vmatprep.subr.bf16.mxu0 0
        %1281 = vmatpush1.bf16.msra.mxu0 0
        %1282 = vmatprep.subr.bf16.mxu0 0
        %1283 = vmatpush1.bf16.msra.mxu0 0
        %1284 = vmatprep.subr.bf16.mxu0 0
        %1285 = vmatpush1.bf16.msra.mxu0 0
        %1286 = vmatprep.subr.bf16.mxu0 0
        %1287 = vmatpush1.bf16.msra.mxu0 0
        %1288 = vmatprep.subr.bf16.mxu0 0
        %1289 = vmatpush1.bf16.msra.mxu0 0
        %1290 = vmatprep.subr.bf16.mxu0 0
        %1291 = vmatpush1.bf16.msra.mxu0 0
        %1292 = vmatprep.mubr.bf16.mxu0 0
        %1293 = vmatmul.mubr.bf16.gmra.mrb[0].mxu0 %v1255
        %v1294 = vpop.f32.mrb[0].mxu0
        %v1295 = vadd.f32 0.0, %v1294
        %v1296 = vpop.f32.mrb[0].mxu0
        %v1297 = vpop.f32.mrb[0].mxu0
        %v1298 = vpop.f32.mrb[0].mxu0
        %1299 = vdwg.mxu0
        %v1300 = vpack.c.bf16 %v982, %v982
        %v1301 = vpack.c.bf16 %v1023, %v1023
        %v1303 = vsel %vm1075, %v1300, 0
        %v1306 = vsel %vm1075, %v1301, 0
        %1308 = vmatprep.subr.bf16.mxu0 0
        %1309 = vmatpush1.bf16.xpose.msra.mxu0 %v1306
        %1310 = vmatprep.subr.bf16.mxu0 0
        %1311 = vmatpush1.bf16.xpose.msra.mxu0 0
        %1312 = vmatprep.subr.bf16.mxu0 0
        %1313 = vmatpush1.bf16.xpose.msra.mxu0 0
        %1314 = vmatprep.subr.bf16.mxu0 0
        %1315 = vmatpush1.bf16.xpose.msra.mxu0 0
        %1316 = vmatprep.subr.bf16.mxu0 0
        %1317 = vmatpush1.bf16.xpose.msra.mxu0 0
        %1318 = vmatprep.subr.bf16.mxu0 0
        %1319 = vmatpush1.bf16.xpose.msra.mxu0 0
        %1320 = vmatprep.subr.bf16.mxu0 0
        %1321 = vmatpush1.bf16.xpose.msra.mxu0 0
        %1322 = vmatprep.subr.bf16.mxu0 0
        %1323 = vmatpush1.bf16.xpose.msra.mxu0 0
        %1324 = vmatprep.subr.bf16.mxu0 0
        %1325 = vmatpush1.bf16.xpose.msra.mxu0 0
        %1326 = vmatprep.subr.bf16.mxu0 0
        %1327 = vmatpush1.bf16.xpose.msra.mxu0 0
        %1328 = vmatprep.subr.bf16.mxu0 0
        %1329 = vmatpush1.bf16.xpose.msra.mxu0 0
        %1330 = vmatprep.subr.bf16.mxu0 0
        %1331 = vmatpush1.bf16.xpose.msra.mxu0 0
        %1332 = vmatprep.subr.bf16.mxu0 0
        %1333 = vmatpush1.bf16.xpose.msra.mxu0 0
        %1334 = vmatprep.subr.bf16.mxu0 0
        %1335 = vmatpush1.bf16.xpose.msra.mxu0 0
        %1336 = vmatprep.subr.bf16.mxu0 0
        %1337 = vmatpush1.bf16.xpose.msra.mxu0 0
        %1338 = vmatprep.subr.bf16.mxu0 0
        %1339 = vmatpush1.bf16.xpose.msra.mxu0 0
        %1340 = vmatprep.mubr.bf16.mxu0 0
        %1341 = vmatmul.mubr.bf16.gmra.mrb[0].mxu0 %v1303
        %v1342 = vpop.f32.mrb[0].mxu0
        %v1343 = vadd.f32 0.0, %v1342
        %v1344 = vpop.f32.mrb[0].mxu0
        %v1345 = vpop.f32.mrb[0].mxu0
        %v1346 = vpop.f32.mrb[0].mxu0
        %1347 = vdwg.mxu0
        %v1348 = vmul.f32 %v1343, 0.125
        %v1349 = vsel %vm1072, -1e+30, %v1348
        %v1350 = vsel %vm1124, %v1349, -inf
        %1351 = vmax.xlane.f32.xlu0 %v1350
        %v1352 = vpop.xlane.xlu0 %1351
        %v1353 = vsub.f32 %v1349, %v1352
        %v1354 = vmul.f32 %v1353, 1.442695
        %v1355 = vpow.pop %v1354
        %v1356 = vsel %vm1124, %v1355, 0.0
        %1357 = vadd.xlane.f32.xlu0 %v1356
        %v1358 = vpop.xlane.xlu0 %1357
        %v1359 = vrcp.pop %v1358
        %v1360 = vmul.f32 %v1355, %v1359
        %v1361 = vpack.c.bf16 %v1360, %v1360
        %v1362 = vpack.c.bf16 %v1064, %v1064
        %v1364 = vsel %vm1124, %v1361, 0
        %v1367 = vsel %vm1141, %v1362, 0
        %1369 = vmatprep.subr.bf16.mxu0 0
        %1370 = vmatpush1.bf16.msra.mxu0 %v1367
        %1371 = vmatprep.subr.bf16.mxu0 0
        %1372 = vmatpush1.bf16.msra.mxu0 0
        %1373 = vmatprep.subr.bf16.mxu0 0
        %1374 = vmatpush1.bf16.msra.mxu0 0
        %1375 = vmatprep.subr.bf16.mxu0 0
        %1376 = vmatpush1.bf16.msra.mxu0 0
        %1377 = vmatprep.subr.bf16.mxu0 0
        %1378 = vmatpush1.bf16.msra.mxu0 0
        %1379 = vmatprep.subr.bf16.mxu0 0
        %1380 = vmatpush1.bf16.msra.mxu0 0
        %1381 = vmatprep.subr.bf16.mxu0 0
        %1382 = vmatpush1.bf16.msra.mxu0 0
        %1383 = vmatprep.subr.bf16.mxu0 0
        %1384 = vmatpush1.bf16.msra.mxu0 0
        %1385 = vmatprep.subr.bf16.mxu0 0
        %1386 = vmatpush1.bf16.msra.mxu0 0
        %1387 = vmatprep.subr.bf16.mxu0 0
        %1388 = vmatpush1.bf16.msra.mxu0 0
        %1389 = vmatprep.subr.bf16.mxu0 0
        %1390 = vmatpush1.bf16.msra.mxu0 0
        %1391 = vmatprep.subr.bf16.mxu0 0
        %1392 = vmatpush1.bf16.msra.mxu0 0
        %1393 = vmatprep.subr.bf16.mxu0 0
        %1394 = vmatpush1.bf16.msra.mxu0 0
        %1395 = vmatprep.subr.bf16.mxu0 0
        %1396 = vmatpush1.bf16.msra.mxu0 0
        %1397 = vmatprep.subr.bf16.mxu0 0
        %1398 = vmatpush1.bf16.msra.mxu0 0
        %1399 = vmatprep.subr.bf16.mxu0 0
        %1400 = vmatpush1.bf16.msra.mxu0 0
        %1401 = vmatprep.mubr.bf16.mxu0 0
        %1402 = vmatmul.mubr.bf16.gmra.mrb[0].mxu0 %v1364
        %v1403 = vpop.f32.mrb[0].mxu0
        %v1404 = vadd.f32 0.0, %v1403
        %v1405 = vpop.f32.mrb[0].mxu0
        %v1406 = vpop.f32.mrb[0].mxu0
        %v1407 = vpop.f32.mrb[0].mxu0
        %1408 = vdwg.mxu0
        %1410 = vrot.lane.b32.xlu0 %v1300, 64
        %v1411 = vpop.permute.xlu0 %1410
        %1413 = vrot.lane.b32.xlu0 %v1301, 64
        %v1414 = vpop.permute.xlu0 %1413
        %v1416 = vsel %vm1075, %v1411, 0
        %v1419 = vsel %vm1075, %v1414, 0
        %1421 = vmatprep.subr.bf16.mxu0 0
        %1422 = vmatpush1.bf16.xpose.msra.mxu0 %v1419
        %1423 = vmatprep.subr.bf16.mxu0 0
        %1424 = vmatpush1.bf16.xpose.msra.mxu0 0
        %1425 = vmatprep.subr.bf16.mxu0 0
        %1426 = vmatpush1.bf16.xpose.msra.mxu0 0
        %1427 = vmatprep.subr.bf16.mxu0 0
        %1428 = vmatpush1.bf16.xpose.msra.mxu0 0
        %1429 = vmatprep.subr.bf16.mxu0 0
        %1430 = vmatpush1.bf16.xpose.msra.mxu0 0
        %1431 = vmatprep.subr.bf16.mxu0 0
        %1432 = vmatpush1.bf16.xpose.msra.mxu0 0
        %1433 = vmatprep.subr.bf16.mxu0 0
        %1434 = vmatpush1.bf16.xpose.msra.mxu0 0
        %1435 = vmatprep.subr.bf16.mxu0 0
        %1436 = vmatpush1.bf16.xpose.msra.mxu0 0
        %1437 = vmatprep.subr.bf16.mxu0 0
        %1438 = vmatpush1.bf16.xpose.msra.mxu0 0
        %1439 = vmatprep.subr.bf16.mxu0 0
        %1440 = vmatpush1.bf16.xpose.msra.mxu0 0
        %1441 = vmatprep.subr.bf16.mxu0 0
        %1442 = vmatpush1.bf16.xpose.msra.mxu0 0
        %1443 = vmatprep.subr.bf16.mxu0 0
        %1444 = vmatpush1.bf16.xpose.msra.mxu0 0
        %1445 = vmatprep.subr.bf16.mxu0 0
        %1446 = vmatpush1.bf16.xpose.msra.mxu0 0
        %1447 = vmatprep.subr.bf16.mxu0 0
        %1448 = vmatpush1.bf16.xpose.msra.mxu0 0
        %1449 = vmatprep.subr.bf16.mxu0 0
        %1450 = vmatpush1.bf16.xpose.msra.mxu0 0
        %1451 = vmatprep.subr.bf16.mxu0 0
        %1452 = vmatpush1.bf16.xpose.msra.mxu0 0
        %1453 = vmatprep.mubr.bf16.mxu0 0
        %1454 = vmatmul.mubr.bf16.gmra.mrb[0].mxu0 %v1416
        %v1455 = vpop.f32.mrb[0].mxu0
        %v1456 = vadd.f32 0.0, %v1455
        %v1457 = vpop.f32.mrb[0].mxu0
        %v1458 = vpop.f32.mrb[0].mxu0
        %v1459 = vpop.f32.mrb[0].mxu0
        %1460 = vdwg.mxu0
        %v1461 = vmul.f32 %v1456, 0.125
        %v1462 = vsel %vm1072, -1e+30, %v1461
        %v1463 = vsel %vm1124, %v1462, -inf
        %1464 = vmax.xlane.f32.xlu0 %v1463
        %v1465 = vpop.xlane.xlu0 %1464
        %v1466 = vsub.f32 %v1462, %v1465
        %v1467 = vmul.f32 %v1466, 1.442695
        %v1468 = vpow.pop %v1467
        %v1469 = vsel %vm1124, %v1468, 0.0
        %1470 = vadd.xlane.f32.xlu0 %v1469
        %v1471 = vpop.xlane.xlu0 %1470
        %v1472 = vrcp.pop %v1471
        %v1473 = vmul.f32 %v1468, %v1472
        %v1474 = vpack.c.bf16 %v1473, %v1473
        %1476 = vrot.lane.b32.xlu0 %v1362, 64
        %v1477 = vpop.permute.xlu0 %1476
        %v1479 = vsel %vm1124, %v1474, 0
        %v1482 = vsel %vm1141, %v1477, 0
        %1484 = vmatprep.subr.bf16.mxu0 0
        %1485 = vmatpush1.bf16.msra.mxu0 %v1482
        %1486 = vmatprep.subr.bf16.mxu0 0
        %1487 = vmatpush1.bf16.msra.mxu0 0
        %1488 = vmatprep.subr.bf16.mxu0 0
        %1489 = vmatpush1.bf16.msra.mxu0 0
        %1490 = vmatprep.subr.bf16.mxu0 0
        %1491 = vmatpush1.bf16.msra.mxu0 0
        %1492 = vmatprep.subr.bf16.mxu0 0
        %1493 = vmatpush1.bf16.msra.mxu0 0
        %1494 = vmatprep.subr.bf16.mxu0 0
        %1495 = vmatpush1.bf16.msra.mxu0 0
        %1496 = vmatprep.subr.bf16.mxu0 0
        %1497 = vmatpush1.bf16.msra.mxu0 0
        %1498 = vmatprep.subr.bf16.mxu0 0
        %1499 = vmatpush1.bf16.msra.mxu0 0
        %1500 = vmatprep.subr.bf16.mxu0 0
        %1501 = vmatpush1.bf16.msra.mxu0 0
        %1502 = vmatprep.subr.bf16.mxu0 0
        %1503 = vmatpush1.bf16.msra.mxu0 0
        %1504 = vmatprep.subr.bf16.mxu0 0
        %1505 = vmatpush1.bf16.msra.mxu0 0
        %1506 = vmatprep.subr.bf16.mxu0 0
        %1507 = vmatpush1.bf16.msra.mxu0 0
        %1508 = vmatprep.subr.bf16.mxu0 0
        %1509 = vmatpush1.bf16.msra.mxu0 0
        %1510 = vmatprep.subr.bf16.mxu0 0
        %1511 = vmatpush1.bf16.msra.mxu0 0
        %1512 = vmatprep.subr.bf16.mxu0 0
        %1513 = vmatpush1.bf16.msra.mxu0 0
        %1514 = vmatprep.subr.bf16.mxu0 0
        %1515 = vmatpush1.bf16.msra.mxu0 0
        %1516 = vmatprep.mubr.bf16.mxu0 0
        %1517 = vmatmul.mubr.bf16.gmra.mrb[0].mxu0 %v1479
        %v1518 = vpop.f32.mrb[0].mxu0
        %v1519 = vadd.f32 0.0, %v1518
        %v1520 = vpop.f32.mrb[0].mxu0
        %v1521 = vpop.f32.mrb[0].mxu0
        %v1522 = vpop.f32.mrb[0].mxu0
        %1523 = vdwg.mxu0
        %1525 = vrot.lane.b32.xlu0 %v1295, 64
        %v1526 = vpop.permute.xlu0 %1525
        %1529 = vrot.lane.b32.xlu0 %v1519, 64
        %v1530 = vpop.permute.xlu0 %1529
        %v1532 = vsel %vm1075, %v1180, %v1526
        %v1533 = vsel %vm1075, %v1404, %v1530
        %v1534 = vpack.c.bf16 %v1532, %v1532
        %v1535 = vpack.c.bf16 %v1533, %v1533
        %v1536 = vld [vmem:[#allocation2] sm:$0xff]
        %v1537 = vld [vmem:[#allocation2 + $0x8] sm:$0xff]
        %v1538 = vld [vmem:[#allocation2 + $0x10] sm:$0xff]
        %v1539 = vld [vmem:[#allocation2 + $0x18] sm:$0xff]
        %v1540 = vld [vmem:[#allocation2 + $0x20] sm:$0xff]
        %v1541 = vld [vmem:[#allocation2 + $0x28] sm:$0xff]
        %v1542 = vld [vmem:[#allocation2 + $0x30] sm:$0xff]
        %v1543 = vld [vmem:[#allocation2 + $0x38] sm:$0xff]
        %v1544 = vld [vmem:[#allocation2 + $0x40] sm:$0xff]
        %v1545 = vld [vmem:[#allocation2 + $0x48] sm:$0xff]
        %v1546 = vld [vmem:[#allocation2 + $0x50] sm:$0xff]
        %v1547 = vld [vmem:[#allocation2 + $0x58] sm:$0xff]
        %v1548 = vld [vmem:[#allocation2 + $0x60] sm:$0xff]
        %v1549 = vld [vmem:[#allocation2 + $0x68] sm:$0xff]
        %v1550 = vld [vmem:[#allocation2 + $0x70] sm:$0xff]
        %v1551 = vld [vmem:[#allocation2 + $0x78] sm:$0xff]
        %v1552 = vld [vmem:[#allocation2 + $0x80] sm:$0xff]
        %v1553 = vld [vmem:[#allocation2 + $0x88] sm:$0xff]
        %v1554 = vld [vmem:[#allocation2 + $0x90] sm:$0xff]
        %v1555 = vld [vmem:[#allocation2 + $0x98] sm:$0xff]
        %v1556 = vld [vmem:[#allocation2 + $0xa0] sm:$0xff]
        %v1557 = vld [vmem:[#allocation2 + $0xa8] sm:$0xff]
        %v1558 = vld [vmem:[#allocation2 + $0xb0] sm:$0xff]
        %v1559 = vld [vmem:[#allocation2 + $0xb8] sm:$0xff]
        %v1560 = vld [vmem:[#allocation2 + $0xc0] sm:$0xff]
        %v1561 = vld [vmem:[#allocation2 + $0xc8] sm:$0xff]
        %v1562 = vld [vmem:[#allocation2 + $0xd0] sm:$0xff]
        %v1563 = vld [vmem:[#allocation2 + $0xd8] sm:$0xff]
        %v1564 = vld [vmem:[#allocation2 + $0xe0] sm:$0xff]
        %v1565 = vld [vmem:[#allocation2 + $0xe8] sm:$0xff]
        %v1566 = vld [vmem:[#allocation2 + $0xf0] sm:$0xff]
        %v1567 = vld [vmem:[#allocation2 + $0xf8] sm:$0xff]
        %v1568 = vld [vmem:[#allocation4] sm:$0x3]
        %v1570 = vlaneseq
        %v1571 = vshrl.u32 %v1570, 7
        %v1572 = vsub.s32 0, %v1571
        %v1573 = vrot.slane %v1568, %v1572
        %v1574 = vlaneseq
        %v1575 = vshrl.u32 %v1574, 7
        %v1576 = vsub.s32 1, %v1575
        %v1577 = vrot.slane %v1568, %v1576
        %v1612 = vunpack.c.l.b16 %v1536
        %v1613 = vunpack.c.h.b16 %v1536
        %v1614 = vunpack.c.l.b16 %v1537
        %v1615 = vunpack.c.h.b16 %v1537
        %v1616 = vunpack.c.l.b16 %v1538
        %v1617 = vunpack.c.h.b16 %v1538
        %v1618 = vunpack.c.l.b16 %v1539
        %v1619 = vunpack.c.h.b16 %v1539
        %v1620 = vunpack.c.l.b16 %v1540
        %v1621 = vunpack.c.h.b16 %v1540
        %v1622 = vunpack.c.l.b16 %v1541
        %v1623 = vunpack.c.h.b16 %v1541
        %v1624 = vunpack.c.l.b16 %v1542
        %v1625 = vunpack.c.h.b16 %v1542
        %v1626 = vunpack.c.l.b16 %v1543
        %v1627 = vunpack.c.h.b16 %v1543
        %v1628 = vunpack.c.l.b16 %v1544
        %v1629 = vunpack.c.h.b16 %v1544
        %v1630 = vunpack.c.l.b16 %v1545
        %v1631 = vunpack.c.h.b16 %v1545
        %v1632 = vunpack.c.l.b16 %v1546
        %v1633 = vunpack.c.h.b16 %v1546
        %v1634 = vunpack.c.l.b16 %v1547
        %v1635 = vunpack.c.h.b16 %v1547
        %v1636 = vunpack.c.l.b16 %v1548
        %v1637 = vunpack.c.h.b16 %v1548
        %v1638 = vunpack.c.l.b16 %v1549
        %v1639 = vunpack.c.h.b16 %v1549
        %v1640 = vunpack.c.l.b16 %v1550
        %v1641 = vunpack.c.h.b16 %v1550
        %v1642 = vunpack.c.l.b16 %v1551
        %v1643 = vunpack.c.h.b16 %v1551
        %v1644 = vunpack.c.l.b16 %v1552
        %v1645 = vunpack.c.h.b16 %v1552
        %v1646 = vunpack.c.l.b16 %v1553
        %v1647 = vunpack.c.h.b16 %v1553
        %v1648 = vunpack.c.l.b16 %v1554
        %v1649 = vunpack.c.h.b16 %v1554
        %v1650 = vunpack.c.l.b16 %v1555
        %v1651 = vunpack.c.h.b16 %v1555
        %v1652 = vunpack.c.l.b16 %v1556
        %v1653 = vunpack.c.h.b16 %v1556
        %v1654 = vunpack.c.l.b16 %v1557
        %v1655 = vunpack.c.h.b16 %v1557
        %v1656 = vunpack.c.l.b16 %v1558
        %v1657 = vunpack.c.h.b16 %v1558
        %v1658 = vunpack.c.l.b16 %v1559
        %v1659 = vunpack.c.h.b16 %v1559
        %v1660 = vunpack.c.l.b16 %v1560
        %v1661 = vunpack.c.h.b16 %v1560
        %v1662 = vunpack.c.l.b16 %v1561
        %v1663 = vunpack.c.h.b16 %v1561
        %v1664 = vunpack.c.l.b16 %v1562
        %v1665 = vunpack.c.h.b16 %v1562
        %v1666 = vunpack.c.l.b16 %v1563
        %v1667 = vunpack.c.h.b16 %v1563
        %v1668 = vunpack.c.l.b16 %v1564
        %v1669 = vunpack.c.h.b16 %v1564
        %v1670 = vunpack.c.l.b16 %v1565
        %v1671 = vunpack.c.h.b16 %v1565
        %v1672 = vunpack.c.l.b16 %v1566
        %v1673 = vunpack.c.h.b16 %v1566
        %v1674 = vunpack.c.l.b16 %v1567
        %v1675 = vunpack.c.h.b16 %v1567
        %v1676 = vpack.c.b16 %v1614, %v1612
        %v1677 = vpack.c.b16 %v1615, %v1613
        %v1678 = vpack.c.b16 %v1618, %v1616
        %v1679 = vpack.c.b16 %v1619, %v1617
        %v1680 = vpack.c.b16 %v1622, %v1620
        %v1681 = vpack.c.b16 %v1623, %v1621
        %v1682 = vpack.c.b16 %v1626, %v1624
        %v1683 = vpack.c.b16 %v1627, %v1625
        %v1684 = vpack.c.b16 %v1630, %v1628
        %v1685 = vpack.c.b16 %v1631, %v1629
        %v1686 = vpack.c.b16 %v1634, %v1632
        %v1687 = vpack.c.b16 %v1635, %v1633
        %v1688 = vpack.c.b16 %v1638, %v1636
        %v1689 = vpack.c.b16 %v1639, %v1637
        %v1690 = vpack.c.b16 %v1642, %v1640
        %v1691 = vpack.c.b16 %v1643, %v1641
        %v1692 = vpack.c.b16 %v1646, %v1644
        %v1693 = vpack.c.b16 %v1647, %v1645
        %v1694 = vpack.c.b16 %v1650, %v1648
        %v1695 = vpack.c.b16 %v1651, %v1649
        %v1696 = vpack.c.b16 %v1654, %v1652
        %v1697 = vpack.c.b16 %v1655, %v1653
        %v1698 = vpack.c.b16 %v1658, %v1656
        %v1699 = vpack.c.b16 %v1659, %v1657
        %v1700 = vpack.c.b16 %v1662, %v1660
        %v1701 = vpack.c.b16 %v1663, %v1661
        %v1702 = vpack.c.b16 %v1666, %v1664
        %v1703 = vpack.c.b16 %v1667, %v1665
        %v1704 = vpack.c.b16 %v1670, %v1668
        %v1705 = vpack.c.b16 %v1671, %v1669
        %v1706 = vpack.c.b16 %v1674, %v1672
        %v1707 = vpack.c.b16 %v1675, %v1673
        %1740 = vmatprep.subr.bf16.mxu0 %v1677
        %1741 = vmatpush1.bf16.msra.mxu0 %v1676
        %1742 = vmatprep.subr.bf16.mxu0 %v1679
        %1743 = vmatpush1.bf16.msra.mxu0 %v1678
        %1744 = vmatprep.subr.bf16.mxu0 %v1681
        %1745 = vmatpush1.bf16.msra.mxu0 %v1680
        %1746 = vmatprep.subr.bf16.mxu0 %v1683
        %1747 = vmatpush1.bf16.msra.mxu0 %v1682
        %1748 = vmatprep.subr.bf16.mxu0 %v1685
        %1749 = vmatpush1.bf16.msra.mxu0 %v1684
        %1750 = vmatprep.subr.bf16.mxu0 %v1687
        %1751 = vmatpush1.bf16.msra.mxu0 %v1686
        %1752 = vmatprep.subr.bf16.mxu0 %v1689
        %1753 = vmatpush1.bf16.msra.mxu0 %v1688
        %1754 = vmatprep.subr.bf16.mxu0 %v1691
        %1755 = vmatpush1.bf16.msra.mxu0 %v1690
        %1756 = vmatprep.subr.bf16.mxu0 %v1693
        %1757 = vmatpush1.bf16.msra.mxu0 %v1692
        %1758 = vmatprep.subr.bf16.mxu0 %v1695
        %1759 = vmatpush1.bf16.msra.mxu0 %v1694
        %1760 = vmatprep.subr.bf16.mxu0 %v1697
        %1761 = vmatpush1.bf16.msra.mxu0 %v1696
        %1762 = vmatprep.subr.bf16.mxu0 %v1699
        %1763 = vmatpush1.bf16.msra.mxu0 %v1698
        %1764 = vmatprep.subr.bf16.mxu0 %v1701
        %1765 = vmatpush1.bf16.msra.mxu0 %v1700
        %1766 = vmatprep.subr.bf16.mxu0 %v1703
        %1767 = vmatpush1.bf16.msra.mxu0 %v1702
        %1768 = vmatprep.subr.bf16.mxu0 %v1705
        %1769 = vmatpush1.bf16.msra.mxu0 %v1704
        %1770 = vmatprep.subr.bf16.mxu0 %v1707
        %1771 = vmatpush1.bf16.msra.mxu0 %v1706
        %1772 = vmatprep.mubr.bf16.mxu0 %v1535
        %1773 = vmatmul.mubr.bf16.gmra.mrb[0].mxu0 %v1534
        %v1774 = vpop.f32.mrb[0].mxu0
        %v1775 = vadd.f32 %v1573, %v1774
        %v1776 = vpop.f32.mrb[0].mxu0
        %v1777 = vadd.f32 %v1577, %v1776
        %v1778 = vpop.f32.mrb[0].mxu0
        %v1779 = vpop.f32.mrb[0].mxu0
        %1780 = vdwg.mxu0
        %v1781 = vadd.f32 %v333, %v1775
        %v1782 = vadd.f32 %v334, %v1777
        %v1783 = vadd.f32 %v1781, %v1782
        %1784 = vadd.xlane.f32.xlu0 %v1783
        %v1785 = vpop.xlane.xlu0 %1784
        %v1786 = vrcp.pop 256.0
        %v1787 = vmul.f32 %v1785, %v1786
        %v1788 = vsub.f32 %v1781, %v1787
        %v1789 = vsub.f32 %v1782, %v1787
        %v1790 = vmul.f32 %v1788, %v1788
        %v1791 = vmul.f32 %v1789, %v1789
        %v1792 = vadd.f32 %v1790, %v1791
        %1793 = vadd.xlane.f32.xlu0 %v1792
        %v1794 = vpop.xlane.xlu0 %1793
        %v1795 = vmul.f32 %v1794, %v1786
        %v1796 = vadd.f32 %v1795, 1e-05
        %v1797 = vrsqrt.pop %v1796
        %v1798 = vmul.f32 %v1788, %v1797
        %v1799 = vmul.f32 %v1789, %v1797
        %v1800 = vld [vmem:[#allocation6] sm:$0x3]
        %v1802 = vlaneseq
        %v1803 = vshrl.u32 %v1802, 7
        %v1804 = vsub.s32 0, %v1803
        %v1805 = vrot.slane %v1800, %v1804
        %v1806 = vlaneseq
        %v1807 = vshrl.u32 %v1806, 7
        %v1808 = vsub.s32 1, %v1807
        %v1809 = vrot.slane %v1800, %v1808
        %v1812 = vmul.f32 %v1798, %v1805
        %v1813 = vmul.f32 %v1799, %v1809
        %v1814 = vld [vmem:[#allocation7] sm:$0x3]
        %v1816 = vlaneseq
        %v1817 = vshrl.u32 %v1816, 7
        %v1818 = vsub.s32 0, %v1817
        %v1819 = vrot.slane %v1814, %v1818
        %v1820 = vlaneseq
        %v1821 = vshrl.u32 %v1820, 7
        %v1822 = vsub.s32 1, %v1821
        %v1823 = vrot.slane %v1814, %v1822
        %v1826 = vadd.f32 %v1812, %v1819
        %v1827 = vadd.f32 %v1813, %v1823
        %1828 = vst [vmem:[%s331] sm:$0xff] %v1826
        %1829 = vst [vmem:[%s331 + $0x8] sm:$0xff] %v1827
        %p1830 = scmp.lt.s32.totalorder %s21, 1
        %s1831 = scalar_select %p1830, %s21, 1
        %s1832 = smul.addr %s1831, 2
        %s1833 = smul.addr %s1832, 8
        %s1834 = scalar_lea.vmem %s7, %s1833
        // Predicated region
        $region65: #{transformer_lm_forward.11} parent=47 // pred_check
          %p1835 = pneg %p191
        $region66: #{transformer_lm_forward.11} parent=47 // pred_check_branch
          %1837 = sbr.rel (%p1835) target = $region68
        $region67: #{transformer_lm_forward.11} parent=47 // pred_region
          _
        $region68: #{transformer_lm_forward.11} parent=47 // pred_fallthru
          _
      $region48: #{transformer_lm_forward.11} parent=5 // pred_fallthru
        _
      %p1838 = scmp.le.s32.totalorder 2, %s16
      // Predicated region
      $region69: #{transformer_lm_forward.11} parent=5 // pred_check
        %p1839 = pneg %p1838
      $region70: #{transformer_lm_forward.11} parent=5 // pred_check_branch
        %1841 = sbr.rel (%p1839) target = $region72
      $region71: #{transformer_lm_forward.11} parent=5 // pred_region
        %s1842 = ssub.s32 %s16, 2
        // Predicated region
        $region73: #{transformer_lm_forward.11} parent=71 // pred_check
          %p1843 = pneg %p197
        $region74: #{transformer_lm_forward.11} parent=71 // pred_check_branch
          %1845 = sbr.rel (%p1843) target = $region76
        $region75: #{transformer_lm_forward.11} parent=71 // pred_region
          %p1846 = scmp.lt.s32.totalorder %s22, 1
          %s1847 = scalar_select %p1846, %s22, 1
          %s1848 = smul.addr %s1847, 2
          %s1849 = smul.addr %s1848, 8
          %s1850 = scalar_lea.vmem %s7, %s1849
        $region76: #{transformer_lm_forward.11} parent=71 // pred_fallthru
          _
      $region72: #{transformer_lm_forward.11} parent=5 // pred_fallthru
        _
    $region6: #{transformer_lm_forward.11} parent=1 // loop_footer
      %s20 = sadd.s32 1, %s16
    $region7: #{transformer_lm_forward.11} parent=1 // loop_footer_branch
      %15 = sbr.rel target = $region3
    $region8: #{transformer_lm_forward.11} parent=1 // loop_exit
      _
    %1851 = vsyncpa [#allocation3], 1
    %s1852 = scalar_lea.sflag [#allocation3], 1
    %1853 = vsyncpa %s1852, 1
    %1854 = vsyncpa [#allocation5], 1
    %1855 = vsyncpa [#allocation8], 1

// kernel: transformer_lm_forward.13
$region0: #{transformer_lm_forward.13}
  #allocation0 [shape = 'u32[]', space=smem, size = 0x4, offset = 0x4, fixed_abs, tag = 'smem constant byte address 0x4 - core index']
  #allocation1 [shape = 'u32[144,128]{1,0:T(1,128)}', space=vmem, size = 0x12000, scoped, tag = 'internal scratch']
  %s0 = inlined_call_operand.vmem [shape: f32[2,8,256], index: 0, kind: input, shape index: {}]
  %s1 = inlined_call_operand.vmem [shape: bf16[256,768], index: 1, kind: input, shape index: {}]
  %s2 = inlined_call_operand.vmem [shape: f32[1,768], index: 2, kind: input, shape index: {}]
  %s3 = inlined_call_operand.vmem [shape: bf16[256,256], index: 3, kind: input, shape index: {}]
  %s4 = inlined_call_operand.vmem [shape: f32[1,256], index: 4, kind: input, shape index: {}]
  %s5 = inlined_call_operand.vmem [shape: f32[1,256], index: 5, kind: input, shape index: {}]
  %s6 = inlined_call_operand.vmem [shape: f32[1,256], index: 6, kind: input, shape index: {}]
  %s7 = inlined_call_operand.vmem [shape: f32[2,8,256], index: 7, kind: output, shape index: {}]
  %s8 = sld [smem:[#allocation0]]
  $region61: #{transformer_lm_forward.13} parent=0
    _
  %s10 = ssub.s32 1, %s8
  %s11 = scalar_select 0, %s10, %s8
  loop: start=0, step=1, limit=4
  $region2: #{transformer_lm_forward.13} parent=0 // loop_pre_header
    _
  $region3: #{transformer_lm_forward.13} parent=0 // loop_header
    %s13 = sphi 0, %s17
    %p14 = scmp.ge.s32.totalorder %s13, 4
    %s23 = sphi 0, %s25
    %s26 = sphi 0, %s23
    %s27 = sphi 0, %s26
    %s43 = sphi 0, %s27
    %s47 = sphi 0, %s47
    %s49 = sphi 0, %s47
    %s50 = sphi 0, %s49
    %s64 = sphi 0, %s50
    %s68 = sphi 0, %s68
    %s70 = sphi 0, %s68
    %s71 = sphi 0, %s70
    %s85 = sphi 0, %s71
    %s89 = sphi 0, %s89
    %s91 = sphi 0, %s89
    %s92 = sphi 0, %s91
    %s106 = sphi 0, %s92
    %s110 = sphi 0, %s110
    %s112 = sphi 0, %s110
    %s113 = sphi 0, %s112
    %s127 = sphi 0, %s113
    %s131 = sphi 0, %s131
    %s133 = sphi 0, %s131
    %s134 = sphi 0, %s133
    %s148 = sphi 0, %s134
    %s152 = sphi 0, %s152
    %s154 = sphi 0, %s152
    %s155 = sphi 0, %s154
    %s169 = sphi 0, %s155
    %s175 = sphi 0, %s177
    %s178 = sphi 0, %s175
    %s179 = sphi 0, %s178
    %s195 = sphi 0, %s179
  $region4: #{transformer_lm_forward.13} parent=0 // loop_header_branch
    %16 = sbr.rel (%p14) target = $region8
  $region5: #{transformer_lm_forward.13} parent=0 // loop_body
    %s18 = ssub.s32 %s13, 1
    %s19 = ssub.s32 %s13, 2
    %s20 = sadd.s32 %s13, 1
    %s21 = ssub.s32 %s13, %s20
    %p22 = scmp.eq.s32.totalorder %s21, 0
    %s24 = sadd.s32 %s23, 1
    %s25 = scalar_select %p22, %s23, %s24
    %p28 = pneg %p22
    %p29 = scmp.eq.s32.totalorder %s13, 1
    %p30 = por %p28, %p29
    %p31 = scmp.ne.s32.totalorder %s23, %s26
    %p32 = scmp.eq.s32.totalorder %s13, 0
    %p33 = por %p31, %p32
    %p34 = scmp.ne.s32.totalorder %s23, %s26
    %p35 = scmp.eq.s32.totalorder %s18, 1
    %p36 = por %p34, %p35
    %p37 = scmp.ne.s32.totalorder %s26, %s27
    %p38 = scmp.eq.s32.totalorder %s18, 0
    %p39 = por %p37, %p38
    %p40 = scmp.ne.s32.totalorder %s26, %s27
    %p41 = scmp.eq.s32.totalorder %s19, 1
    %p42 = por %p40, %p41
    %p44 = scmp.ne.s32.totalorder %s27, %s43
    %p45 = scmp.eq.s32.totalorder %s19, 0
    %p46 = por %p44, %p45
    %s48 = sadd.s32 %s47, 1
    %p51 = scmp.eq.s32.totalorder %s13, 1
    %p52 = scmp.ne.s32.totalorder %s47, %s49
    %p53 = scmp.eq.s32.totalorder %s13, 0
    %p54 = por %p52, %p53
    %p55 = scmp.ne.s32.totalorder %s47, %s49
    %p56 = scmp.eq.s32.totalorder %s18, 1
    %p57 = por %p55, %p56
    %p58 = scmp.ne.s32.totalorder %s49, %s50
    %p59 = scmp.eq.s32.totalorder %s18, 0
    %p60 = por %p58, %p59
    %p61 = scmp.ne.s32.totalorder %s49, %s50
    %p62 = scmp.eq.s32.totalorder %s19, 1
    %p63 = por %p61, %p62
    %p65 = scmp.ne.s32.totalorder %s50, %s64
    %p66 = scmp.eq.s32.totalorder %s19, 0
    %p67 = por %p65, %p66
    %s69 = sadd.s32 %s68, 1
    %p72 = scmp.eq.s32.totalorder %s13, 1
    %p73 = scmp.ne.s32.totalorder %s68, %s70
    %p74 = scmp.eq.s32.totalorder %s13, 0
    %p75 = por %p73, %p74
    %p76 = scmp.ne.s32.totalorder %s68, %s70
    %p77 = scmp.eq.s32.totalorder %s18, 1
    %p78 = por %p76, %p77
    %p79 = scmp.ne.s32.totalorder %s70, %s71
    %p80 = scmp.eq.s32.totalorder %s18, 0
    %p81 = por %p79, %p80
    %p82 = scmp.ne.s32.totalorder %s70, %s71
    %p83 = scmp.eq.s32.totalorder %s19, 1
    %p84 = por %p82, %p83
    %p86 = scmp.ne.s32.totalorder %s71, %s85
    %p87 = scmp.eq.s32.totalorder %s19, 0
    %p88 = por %p86, %p87
    %s90 = sadd.s32 %s89, 1
    %p93 = scmp.eq.s32.totalorder %s13, 1
    %p94 = scmp.ne.s32.totalorder %s89, %s91
    %p95 = scmp.eq.s32.totalorder %s13, 0
    %p96 = por %p94, %p95
    %p97 = scmp.ne.s32.totalorder %s89, %s91
    %p98 = scmp.eq.s32.totalorder %s18, 1
    %p99 = por %p97, %p98
    %p100 = scmp.ne.s32.totalorder %s91, %s92
    %p101 = scmp.eq.s32.totalorder %s18, 0
    %p102 = por %p100, %p101
    %p103 = scmp.ne.s32.totalorder %s91, %s92
    %p104 = scmp.eq.s32.totalorder %s19, 1
    %p105 = por %p103, %p104
    %p107 = scmp.ne.s32.totalorder %s92, %s106
    %p108 = scmp.eq.s32.totalorder %s19, 0
    %p109 = por %p107, %p108
    %s111 = sadd.s32 %s110, 1
    %p114 = scmp.eq.s32.totalorder %s13, 1
    %p115 = scmp.ne.s32.totalorder %s110, %s112
    %p116 = scmp.eq.s32.totalorder %s13, 0
    %p117 = por %p115, %p116
    %p118 = scmp.ne.s32.totalorder %s110, %s112
    %p119 = scmp.eq.s32.totalorder %s18, 1
    %p120 = por %p118, %p119
    %p121 = scmp.ne.s32.totalorder %s112, %s113
    %p122 = scmp.eq.s32.totalorder %s18, 0
    %p123 = por %p121, %p122
    %p124 = scmp.ne.s32.totalorder %s112, %s113
    %p125 = scmp.eq.s32.totalorder %s19, 1
    %p126 = por %p124, %p125
    %p128 = scmp.ne.s32.totalorder %s113, %s127
    %p129 = scmp.eq.s32.totalorder %s19, 0
    %p130 = por %p128, %p129
    %s132 = sadd.s32 %s131, 1
    %p135 = scmp.eq.s32.totalorder %s13, 1
    %p136 = scmp.ne.s32.totalorder %s131, %s133
    %p137 = scmp.eq.s32.totalorder %s13, 0
    %p138 = por %p136, %p137
    %p139 = scmp.ne.s32.totalorder %s131, %s133
    %p140 = scmp.eq.s32.totalorder %s18, 1
    %p141 = por %p139, %p140
    %p142 = scmp.ne.s32.totalorder %s133, %s134
    %p143 = scmp.eq.s32.totalorder %s18, 0
    %p144 = por %p142, %p143
    %p145 = scmp.ne.s32.totalorder %s133, %s134
    %p146 = scmp.eq.s32.totalorder %s19, 1
    %p147 = por %p145, %p146
    %p149 = scmp.ne.s32.totalorder %s134, %s148
    %p150 = scmp.eq.s32.totalorder %s19, 0
    %p151 = por %p149, %p150
    %s153 = sadd.s32 %s152, 1
    %p156 = scmp.eq.s32.totalorder %s13, 1
    %p157 = scmp.ne.s32.totalorder %s152, %s154
    %p158 = scmp.eq.s32.totalorder %s13, 0
    %p159 = por %p157, %p158
    %p160 = scmp.ne.s32.totalorder %s152, %s154
    %p161 = scmp.eq.s32.totalorder %s18, 1
    %p162 = por %p160, %p161
    %p163 = scmp.ne.s32.totalorder %s154, %s155
    %p164 = scmp.eq.s32.totalorder %s18, 0
    %p165 = por %p163, %p164
    %p166 = scmp.ne.s32.totalorder %s154, %s155
    %p167 = scmp.eq.s32.totalorder %s19, 1
    %p168 = por %p166, %p167
    %p170 = scmp.ne.s32.totalorder %s155, %s169
    %p171 = scmp.eq.s32.totalorder %s19, 0
    %p172 = por %p170, %p171
    %s173 = ssub.s32 %s13, %s20
    %p174 = scmp.eq.s32.totalorder %s173, 0
    %s176 = sadd.s32 %s175, 1
    %s177 = scalar_select %p174, %s175, %s176
    %p180 = pneg %p174
    %p181 = scmp.eq.s32.totalorder %s13, 1
    %p182 = por %p180, %p181
    %p183 = scmp.ne.s32.totalorder %s175, %s178
    %p184 = scmp.eq.s32.totalorder %s13, 0
    %p185 = por %p183, %p184
    %p186 = scmp.ne.s32.totalorder %s175, %s178
    %p187 = scmp.eq.s32.totalorder %s18, 1
    %p188 = por %p186, %p187
    %p189 = scmp.ne.s32.totalorder %s178, %s179
    %p190 = scmp.eq.s32.totalorder %s18, 0
    %p191 = por %p189, %p190
    %p192 = scmp.ne.s32.totalorder %s178, %s179
    %p193 = scmp.eq.s32.totalorder %s19, 1
    %p194 = por %p192, %p193
    %p196 = scmp.ne.s32.totalorder %s179, %s195
    %p197 = scmp.eq.s32.totalorder %s19, 0
    %p198 = por %p196, %p197
    %p199 = scmp.le.s32.totalorder 1, %s13
    %p200 = scmp.lt.s32.totalorder %s13, 3
    %p201 = pnand %p199, %p200
    %p202 = pneg %p201
    // Predicated region
    $region9: #{transformer_lm_forward.13} parent=5 // pred_check
      _
    $region10: #{transformer_lm_forward.13} parent=5 // pred_check_branch
      %204 = sbr.rel (%p201) target = $region12
    $region11: #{transformer_lm_forward.13} parent=5 // pred_region
      %s205 = ssub.s32 %s13, 1
      // Predicated region
      $region13: #{transformer_lm_forward.13} parent=11 // pred_check
        %p206 = pneg %p60
      $region14: #{transformer_lm_forward.13} parent=11 // pred_check_branch
        %208 = sbr.rel (%p206) target = $region16
      $region15: #{transformer_lm_forward.13} parent=11 // pred_region
        _
      $region16: #{transformer_lm_forward.13} parent=11 // pred_fallthru
        _
      // Predicated region
      $region17: #{transformer_lm_forward.13} parent=11 // pred_check
        %p209 = pneg %p81
      $region18: #{transformer_lm_forward.13} parent=11 // pred_check_branch
        %211 = sbr.rel (%p209) target = $region20
      $region19: #{transformer_lm_forward.13} parent=11 // pred_region
        _
      $region20: #{transformer_lm_forward.13} parent=11 // pred_fallthru
        _
      // Predicated region
      $region21: #{transformer_lm_forward.13} parent=11 // pred_check
        %p212 = pneg %p102
      $region22: #{transformer_lm_forward.13} parent=11 // pred_check_branch
        %214 = sbr.rel (%p212) target = $region24
      $region23: #{transformer_lm_forward.13} parent=11 // pred_region
        _
      $region24: #{transformer_lm_forward.13} parent=11 // pred_fallthru
        _
      // Predicated region
      $region25: #{transformer_lm_forward.13} parent=11 // pred_check
        %p215 = pneg %p123
      $region26: #{transformer_lm_forward.13} parent=11 // pred_check_branch
        %217 = sbr.rel (%p215) target = $region28
      $region27: #{transformer_lm_forward.13} parent=11 // pred_region
        _
      $region28: #{transformer_lm_forward.13} parent=11 // pred_fallthru
        _
      // Predicated region
      $region29: #{transformer_lm_forward.13} parent=11 // pred_check
        %p218 = pneg %p144
      $region30: #{transformer_lm_forward.13} parent=11 // pred_check_branch
        %220 = sbr.rel (%p218) target = $region32
      $region31: #{transformer_lm_forward.13} parent=11 // pred_region
        _
      $region32: #{transformer_lm_forward.13} parent=11 // pred_fallthru
        _
      // Predicated region
      $region33: #{transformer_lm_forward.13} parent=11 // pred_check
        %p221 = pneg %p165
      $region34: #{transformer_lm_forward.13} parent=11 // pred_check_branch
        %223 = sbr.rel (%p221) target = $region36
      $region35: #{transformer_lm_forward.13} parent=11 // pred_region
        _
      $region36: #{transformer_lm_forward.13} parent=11 // pred_fallthru
        _
    $region12: #{transformer_lm_forward.13} parent=5 // pred_fallthru
      _
    %p224 = scmp.lt.s32.totalorder %s13, 2
    // Predicated region
    $region37: #{transformer_lm_forward.13} parent=5 // pred_check
      %p225 = pneg %p224
    $region38: #{transformer_lm_forward.13} parent=5 // pred_check_branch
      %227 = sbr.rel (%p225) target = $region40
    $region39: #{transformer_lm_forward.13} parent=5 // pred_region
      // Predicated region
      $region41: #{transformer_lm_forward.13} parent=39 // pred_check
        %p228 = pneg %p33
      $region42: #{transformer_lm_forward.13} parent=39 // pred_check_branch
        %230 = sbr.rel (%p228) target = $region44
      $region43: #{transformer_lm_forward.13} parent=39 // pred_region
        %p231 = scmp.lt.s32.totalorder %s13, 1
        %s232 = scalar_select %p231, %s13, 1
        %s233 = smul.addr %s232, 2
        %s234 = smul.addr %s233, 8
        %s235 = scalar_lea.vmem %s0, %s234
      $region44: #{transformer_lm_forward.13} parent=39 // pred_fallthru
        _
    $region40: #{transformer_lm_forward.13} parent=5 // pred_fallthru
      _
    %p236 = scmp.le.s32.totalorder 1, %s13
    %p237 = scmp.lt.s32.totalorder %s13, 3
    %p238 = pnand %p236, %p237
    %p239 = pneg %p238
    // Predicated region
    $region45: #{transformer_lm_forward.13} parent=5 // pred_check
      _
    $region46: #{transformer_lm_forward.13} parent=5 // pred_check_branch
      %241 = sbr.rel (%p238) target = $region48
    $region47: #{transformer_lm_forward.13} parent=5 // pred_region
      %s242 = ssub.s32 %s13, 1
      %p243 = scmp.lt.s32.totalorder %s18, 1
      %s244 = scalar_select %p243, %s18, 1
      %s245 = smul.addr %s244, 2
      %s246 = smul.addr %s245, 8
      %s247 = scalar_lea.vmem %s0, %s246
      %p248 = pneg %p39
      %p249 = pneg %p36
      %p250 = pneg %p60
      %p251 = pneg %p57
      %p252 = pneg %p81
      %p253 = pneg %p78
      %p254 = pneg %p102
      %p255 = pneg %p99
      %p256 = pneg %p123
      %p257 = pneg %p120
      %p258 = pneg %p144
      %p259 = pneg %p141
      %p260 = pneg %p165
      %p261 = pneg %p162
      %p262 = pneg %p191
      %p263 = pneg %p188
      %p264 = scmp.lt.s32.totalorder %s18, 1
      %s265 = scalar_select %p264, %s18, 1
      %s266 = smul.addr %s265, 2
      %s267 = smul.addr %s266, 8
      %s268 = scalar_lea.vmem %s7, %s267
      %p269 = scmp.lt.s32.totalorder %s18, 1
      %s270 = scalar_select %p269, %s18, 1
      %s271 = smul.addr %s270, 2
      %s272 = smul.addr %s271, 8
      %s273 = scalar_lea.vmem %s0, %s272
      %p274 = scmp.lt.s32.totalorder %s18, 1
      %s275 = scalar_select %p274, %s18, 1
      %s276 = smul.addr %s275, 2
      %s277 = smul.addr %s276, 8
      %s278 = scalar_lea.vmem %s7, %s277
      %v280 = vld [vmem:[%s273] sm:$0xff]
      %v281 = vld [vmem:[%s273 + $0x8] sm:$0xff]
      %v282 = vpack.c.bf16 %v280, %v280
      %v283 = vpack.c.bf16 %v281, %v281
      %v284 = vld [vmem:[%s1] sm:$0xff]
      %v285 = vld [vmem:[%s1 + $0x8] sm:$0xff]
      %v286 = vld [vmem:[%s1 + $0x10] sm:$0xff]
      %v287 = vld [vmem:[%s1 + $0x18] sm:$0xff]
      %v288 = vld [vmem:[%s1 + $0x20] sm:$0xff]
      %v289 = vld [vmem:[%s1 + $0x28] sm:$0xff]
      %v290 = vld [vmem:[%s1 + $0x30] sm:$0xff]
      %v291 = vld [vmem:[%s1 + $0x38] sm:$0xff]
      %v292 = vld [vmem:[%s1 + $0x40] sm:$0xff]
      %v293 = vld [vmem:[%s1 + $0x48] sm:$0xff]
      %v294 = vld [vmem:[%s1 + $0x50] sm:$0xff]
      %v295 = vld [vmem:[%s1 + $0x58] sm:$0xff]
      %v296 = vld [vmem:[%s1 + $0x60] sm:$0xff]
      %v297 = vld [vmem:[%s1 + $0x68] sm:$0xff]
      %v298 = vld [vmem:[%s1 + $0x70] sm:$0xff]
      %v299 = vld [vmem:[%s1 + $0x78] sm:$0xff]
      %v300 = vld [vmem:[%s1 + $0x80] sm:$0xff]
      %v301 = vld [vmem:[%s1 + $0x88] sm:$0xff]
      %v302 = vld [vmem:[%s1 + $0x90] sm:$0xff]
      %v303 = vld [vmem:[%s1 + $0x98] sm:$0xff]
      %v304 = vld [vmem:[%s1 + $0xa0] sm:$0xff]
      %v305 = vld [vmem:[%s1 + $0xa8] sm:$0xff]
      %v306 = vld [vmem:[%s1 + $0xb0] sm:$0xff]
      %v307 = vld [vmem:[%s1 + $0xb8] sm:$0xff]
      %v308 = vld [vmem:[%s1 + $0xc0] sm:$0xff]
      %v309 = vld [vmem:[%s1 + $0xc8] sm:$0xff]
      %v310 = vld [vmem:[%s1 + $0xd0] sm:$0xff]
      %v311 = vld [vmem:[%s1 + $0xd8] sm:$0xff]
      %v312 = vld [vmem:[%s1 + $0xe0] sm:$0xff]
      %v313 = vld [vmem:[%s1 + $0xe8] sm:$0xff]
      %v314 = vld [vmem:[%s1 + $0xf0] sm:$0xff]
      %v315 = vld [vmem:[%s1 + $0xf8] sm:$0xff]
      %v316 = vld [vmem:[%s1 + $0x100] sm:$0xff]
      %v317 = vld [vmem:[%s1 + $0x108] sm:$0xff]
      %v318 = vld [vmem:[%s1 + $0x110] sm:$0xff]
      %v319 = vld [vmem:[%s1 + $0x118] sm:$0xff]
      %v320 = vld [vmem:[%s1 + $0x120] sm:$0xff]
      %v321 = vld [vmem:[%s1 + $0x128] sm:$0xff]
      %v322 = vld [vmem:[%s1 + $0x130] sm:$0xff]
      %v323 = vld [vmem:[%s1 + $0x138] sm:$0xff]
      %v324 = vld [vmem:[%s1 + $0x140] sm:$0xff]
      %v325 = vld [vmem:[%s1 + $0x148] sm:$0xff]
      %v326 = vld [vmem:[%s1 + $0x150] sm:$0xff]
      %v327 = vld [vmem:[%s1 + $0x158] sm:$0xff]
      %v328 = vld [vmem:[%s1 + $0x160] sm:$0xff]
      %v329 = vld [vmem:[%s1 + $0x168] sm:$0xff]
      %v330 = vld [vmem:[%s1 + $0x170] sm:$0xff]
      %v331 = vld [vmem:[%s1 + $0x178] sm:$0xff]
      %v332 = vld [vmem:[%s1 + $0x180] sm:$0xff]
      %v333 = vld [vmem:[%s1 + $0x188] sm:$0xff]
      %v334 = vld [vmem:[%s1 + $0x190] sm:$0xff]
      %v335 = vld [vmem:[%s1 + $0x198] sm:$0xff]
      %v336 = vld [vmem:[%s1 + $0x1a0] sm:$0xff]
      %v337 = vld [vmem:[%s1 + $0x1a8] sm:$0xff]
      %v338 = vld [vmem:[%s1 + $0x1b0] sm:$0xff]
      %v339 = vld [vmem:[%s1 + $0x1b8] sm:$0xff]
      %v340 = vld [vmem:[%s1 + $0x1c0] sm:$0xff]
      %v341 = vld [vmem:[%s1 + $0x1c8] sm:$0xff]
      %v342 = vld [vmem:[%s1 + $0x1d0] sm:$0xff]
      %v343 = vld [vmem:[%s1 + $0x1d8] sm:$0xff]
      %v344 = vld [vmem:[%s1 + $0x1e0] sm:$0xff]
      %v345 = vld [vmem:[%s1 + $0x1e8] sm:$0xff]
      %v346 = vld [vmem:[%s1 + $0x1f0] sm:$0xff]
      %v347 = vld [vmem:[%s1 + $0x1f8] sm:$0xff]
      %v348 = vld [vmem:[%s1 + $0x200] sm:$0xff]
      %v349 = vld [vmem:[%s1 + $0x208] sm:$0xff]
      %v350 = vld [vmem:[%s1 + $0x210] sm:$0xff]
      %v351 = vld [vmem:[%s1 + $0x218] sm:$0xff]
      %v352 = vld [vmem:[%s1 + $0x220] sm:$0xff]
      %v353 = vld [vmem:[%s1 + $0x228] sm:$0xff]
      %v354 = vld [vmem:[%s1 + $0x230] sm:$0xff]
      %v355 = vld [vmem:[%s1 + $0x238] sm:$0xff]
      %v356 = vld [vmem:[%s1 + $0x240] sm:$0xff]
      %v357 = vld [vmem:[%s1 + $0x248] sm:$0xff]
      %v358 = vld [vmem:[%s1 + $0x250] sm:$0xff]
      %v359 = vld [vmem:[%s1 + $0x258] sm:$0xff]
      %v360 = vld [vmem:[%s1 + $0x260] sm:$0xff]
      %v361 = vld [vmem:[%s1 + $0x268] sm:$0xff]
      %v362 = vld [vmem:[%s1 + $0x270] sm:$0xff]
      %v363 = vld [vmem:[%s1 + $0x278] sm:$0xff]
      %v364 = vld [vmem:[%s1 + $0x280] sm:$0xff]
      %v365 = vld [vmem:[%s1 + $0x288] sm:$0xff]
      %v366 = vld [vmem:[%s1 + $0x290] sm:$0xff]
      %v367 = vld [vmem:[%s1 + $0x298] sm:$0xff]
      %v368 = vld [vmem:[%s1 + $0x2a0] sm:$0xff]
      %v369 = vld [vmem:[%s1 + $0x2a8] sm:$0xff]
      %v370 = vld [vmem:[%s1 + $0x2b0] sm:$0xff]
      %v371 = vld [vmem:[%s1 + $0x2b8] sm:$0xff]
      %v372 = vld [vmem:[%s1 + $0x2c0] sm:$0xff]
      %v373 = vld [vmem:[%s1 + $0x2c8] sm:$0xff]
      %v374 = vld [vmem:[%s1 + $0x2d0] sm:$0xff]
      %v375 = vld [vmem:[%s1 + $0x2d8] sm:$0xff]
      %v376 = vld [vmem:[%s1 + $0x2e0] sm:$0xff]
      %v377 = vld [vmem:[%s1 + $0x2e8] sm:$0xff]
      %v378 = vld [vmem:[%s1 + $0x2f0] sm:$0xff]
      %v379 = vld [vmem:[%s1 + $0x2f8] sm:$0xff]
      %v380 = vld [vmem:[%s2] sm:$0x3f]
      %v382 = vlaneseq
      %v383 = vshrl.u32 %v382, 7
      %v384 = vsub.s32 0, %v383
      %v385 = vrot.slane %v380, %v384
      %v386 = vlaneseq
      %v387 = vshrl.u32 %v386, 7
      %v388 = vsub.s32 1, %v387
      %v389 = vrot.slane %v380, %v388
      %v390 = vlaneseq
      %v391 = vshrl.u32 %v390, 7
      %v392 = vsub.s32 2, %v391
      %v393 = vrot.slane %v380, %v392
      %v394 = vlaneseq
      %v395 = vshrl.u32 %v394, 7
      %v396 = vsub.s32 3, %v395
      %v397 = vrot.slane %v380, %v396
      %v398 = vlaneseq
      %v399 = vshrl.u32 %v398, 7
      %v400 = vsub.s32 4, %v399
      %v401 = vrot.slane %v380, %v400
      %v402 = vlaneseq
      %v403 = vshrl.u32 %v402, 7
      %v404 = vsub.s32 5, %v403
      %v405 = vrot.slane %v380, %v404
      %v508 = vunpack.c.l.b16 %v284
      %v509 = vunpack.c.h.b16 %v284
      %v510 = vunpack.c.l.b16 %v285
      %v511 = vunpack.c.h.b16 %v285
      %v512 = vunpack.c.l.b16 %v286
      %v513 = vunpack.c.h.b16 %v286
      %v514 = vunpack.c.l.b16 %v287
      %v515 = vunpack.c.h.b16 %v287
      %v516 = vunpack.c.l.b16 %v288
      %v517 = vunpack.c.h.b16 %v288
      %v518 = vunpack.c.l.b16 %v289
      %v519 = vunpack.c.h.b16 %v289
      %v520 = vunpack.c.l.b16 %v290
      %v521 = vunpack.c.h.b16 %v290
      %v522 = vunpack.c.l.b16 %v291
      %v523 = vunpack.c.h.b16 %v291
      %v524 = vunpack.c.l.b16 %v292
      %v525 = vunpack.c.h.b16 %v292
      %v526 = vunpack.c.l.b16 %v293
      %v527 = vunpack.c.h.b16 %v293
      %v528 = vunpack.c.l.b16 %v294
      %v529 = vunpack.c.h.b16 %v294
      %v530 = vunpack.c.l.b16 %v295
      %v531 = vunpack.c.h.b16 %v295
      %v532 = vunpack.c.l.b16 %v296
      %v533 = vunpack.c.h.b16 %v296
      %v534 = vunpack.c.l.b16 %v297
      %v535 = vunpack.c.h.b16 %v297
      %v536 = vunpack.c.l.b16 %v298
      %v537 = vunpack.c.h.b16 %v298
      %v538 = vunpack.c.l.b16 %v299
      %v539 = vunpack.c.h.b16 %v299
      %v540 = vunpack.c.l.b16 %v300
      %v541 = vunpack.c.h.b16 %v300
      %v542 = vunpack.c.l.b16 %v301
      %v543 = vunpack.c.h.b16 %v301
      %v544 = vunpack.c.l.b16 %v302
      %v545 = vunpack.c.h.b16 %v302
      %v546 = vunpack.c.l.b16 %v303
      %v547 = vunpack.c.h.b16 %v303
      %v548 = vunpack.c.l.b16 %v304
      %v549 = vunpack.c.h.b16 %v304
      %v550 = vunpack.c.l.b16 %v305
      %v551 = vunpack.c.h.b16 %v305
      %v552 = vunpack.c.l.b16 %v306
      %v553 = vunpack.c.h.b16 %v306
      %v554 = vunpack.c.l.b16 %v307
      %v555 = vunpack.c.h.b16 %v307
      %v556 = vunpack.c.l.b16 %v308
      %v557 = vunpack.c.h.b16 %v308
      %v558 = vunpack.c.l.b16 %v309
      %v559 = vunpack.c.h.b16 %v309
      %v560 = vunpack.c.l.b16 %v310
      %v561 = vunpack.c.h.b16 %v310
      %v562 = vunpack.c.l.b16 %v311
      %v563 = vunpack.c.h.b16 %v311
      %v564 = vunpack.c.l.b16 %v312
      %v565 = vunpack.c.h.b16 %v312
      %v566 = vunpack.c.l.b16 %v313
      %v567 = vunpack.c.h.b16 %v313
      %v568 = vunpack.c.l.b16 %v314
      %v569 = vunpack.c.h.b16 %v314
      %v570 = vunpack.c.l.b16 %v315
      %v571 = vunpack.c.h.b16 %v315
      %v572 = vunpack.c.l.b16 %v316
      %v573 = vunpack.c.h.b16 %v316
      %v574 = vunpack.c.l.b16 %v317
      %v575 = vunpack.c.h.b16 %v317
      %v576 = vunpack.c.l.b16 %v318
      %v577 = vunpack.c.h.b16 %v318
      %v578 = vunpack.c.l.b16 %v319
      %v579 = vunpack.c.h.b16 %v319
      %v580 = vunpack.c.l.b16 %v320
      %v581 = vunpack.c.h.b16 %v320
      %v582 = vunpack.c.l.b16 %v321
      %v583 = vunpack.c.h.b16 %v321
      %v584 = vunpack.c.l.b16 %v322
      %v585 = vunpack.c.h.b16 %v322
      %v586 = vunpack.c.l.b16 %v323
      %v587 = vunpack.c.h.b16 %v323
      %v588 = vunpack.c.l.b16 %v324
      %v589 = vunpack.c.h.b16 %v324
      %v590 = vunpack.c.l.b16 %v325
      %v591 = vunpack.c.h.b16 %v325
      %v592 = vunpack.c.l.b16 %v326
      %v593 = vunpack.c.h.b16 %v326
      %v594 = vunpack.c.l.b16 %v327
      %v595 = vunpack.c.h.b16 %v327
      %v596 = vunpack.c.l.b16 %v328
      %v597 = vunpack.c.h.b16 %v328
      %v598 = vunpack.c.l.b16 %v329
      %v599 = vunpack.c.h.b16 %v329
      %v600 = vunpack.c.l.b16 %v330
      %v601 = vunpack.c.h.b16 %v330
      %v602 = vunpack.c.l.b16 %v331
      %v603 = vunpack.c.h.b16 %v331
      %v604 = vunpack.c.l.b16 %v332
      %v605 = vunpack.c.h.b16 %v332
      %v606 = vunpack.c.l.b16 %v333
      %v607 = vunpack.c.h.b16 %v333
      %v608 = vunpack.c.l.b16 %v334
      %v609 = vunpack.c.h.b16 %v334
      %v610 = vunpack.c.l.b16 %v335
      %v611 = vunpack.c.h.b16 %v335
      %v612 = vunpack.c.l.b16 %v336
      %v613 = vunpack.c.h.b16 %v336
      %v614 = vunpack.c.l.b16 %v337
      %v615 = vunpack.c.h.b16 %v337
      %v616 = vunpack.c.l.b16 %v338
      %v617 = vunpack.c.h.b16 %v338
      %v618 = vunpack.c.l.b16 %v339
      %v619 = vunpack.c.h.b16 %v339
      %v620 = vunpack.c.l.b16 %v340
      %v621 = vunpack.c.h.b16 %v340
      %v622 = vunpack.c.l.b16 %v341
      %v623 = vunpack.c.h.b16 %v341
      %v624 = vunpack.c.l.b16 %v342
      %v625 = vunpack.c.h.b16 %v342
      %v626 = vunpack.c.l.b16 %v343
      %v627 = vunpack.c.h.b16 %v343
      %v628 = vunpack.c.l.b16 %v344
      %v629 = vunpack.c.h.b16 %v344
      %v630 = vunpack.c.l.b16 %v345
      %v631 = vunpack.c.h.b16 %v345
      %v632 = vunpack.c.l.b16 %v346
      %v633 = vunpack.c.h.b16 %v346
      %v634 = vunpack.c.l.b16 %v347
      %v635 = vunpack.c.h.b16 %v347
      %v636 = vunpack.c.l.b16 %v348
      %v637 = vunpack.c.h.b16 %v348
      %v638 = vunpack.c.l.b16 %v349
      %v639 = vunpack.c.h.b16 %v349
      %v640 = vunpack.c.l.b16 %v350
      %v641 = vunpack.c.h.b16 %v350
      %v642 = vunpack.c.l.b16 %v351
      %v643 = vunpack.c.h.b16 %v351
      %v644 = vunpack.c.l.b16 %v352
      %v645 = vunpack.c.h.b16 %v352
      %v646 = vunpack.c.l.b16 %v353
      %v647 = vunpack.c.h.b16 %v353
      %v648 = vunpack.c.l.b16 %v354
      %v649 = vunpack.c.h.b16 %v354
      %v650 = vunpack.c.l.b16 %v355
      %v651 = vunpack.c.h.b16 %v355
      %v652 = vunpack.c.l.b16 %v356
      %v653 = vunpack.c.h.b16 %v356
      %v654 = vunpack.c.l.b16 %v357
      %v655 = vunpack.c.h.b16 %v357
      %v656 = vunpack.c.l.b16 %v358
      %v657 = vunpack.c.h.b16 %v358
      %v658 = vunpack.c.l.b16 %v359
      %v659 = vunpack.c.h.b16 %v359
      %v660 = vunpack.c.l.b16 %v360
      %v661 = vunpack.c.h.b16 %v360
      %v662 = vunpack.c.l.b16 %v361
      %v663 = vunpack.c.h.b16 %v361
      %v664 = vunpack.c.l.b16 %v362
      %v665 = vunpack.c.h.b16 %v362
      %v666 = vunpack.c.l.b16 %v363
      %v667 = vunpack.c.h.b16 %v363
      %v668 = vunpack.c.l.b16 %v364
      %v669 = vunpack.c.h.b16 %v364
      %v670 = vunpack.c.l.b16 %v365
      %v671 = vunpack.c.h.b16 %v365
      %v672 = vunpack.c.l.b16 %v366
      %v673 = vunpack.c.h.b16 %v366
      %v674 = vunpack.c.l.b16 %v367
      %v675 = vunpack.c.h.b16 %v367
      %v676 = vunpack.c.l.b16 %v368
      %v677 = vunpack.c.h.b16 %v368
      %v678 = vunpack.c.l.b16 %v369
      %v679 = vunpack.c.h.b16 %v369
      %v680 = vunpack.c.l.b16 %v370
      %v681 = vunpack.c.h.b16 %v370
      %v682 = vunpack.c.l.b16 %v371
      %v683 = vunpack.c.h.b16 %v371
      %v684 = vunpack.c.l.b16 %v372
      %v685 = vunpack.c.h.b16 %v372
      %v686 = vunpack.c.l.b16 %v373
      %v687 = vunpack.c.h.b16 %v373
      %v688 = vunpack.c.l.b16 %v374
      %v689 = vunpack.c.h.b16 %v374
      %v690 = vunpack.c.l.b16 %v375
      %v691 = vunpack.c.h.b16 %v375
      %v692 = vunpack.c.l.b16 %v376
      %v693 = vunpack.c.h.b16 %v376
      %v694 = vunpack.c.l.b16 %v377
      %v695 = vunpack.c.h.b16 %v377
      %v696 = vunpack.c.l.b16 %v378
      %v697 = vunpack.c.h.b16 %v378
      %v698 = vunpack.c.l.b16 %v379
      %v699 = vunpack.c.h.b16 %v379
      %v700 = vpack.c.b16 %v514, %v508
      %v701 = vpack.c.b16 %v515, %v509
      %v702 = vpack.c.b16 %v516, %v510
      %v703 = vpack.c.b16 %v517, %v511
      %v704 = vpack.c.b16 %v518, %v512
      %v705 = vpack.c.b16 %v519, %v513
      %v706 = vpack.c.b16 %v526, %v520
      %v707 = vpack.c.b16 %v527, %v521
      %v708 = vpack.c.b16 %v528, %v522
      %v709 = vpack.c.b16 %v529, %v523
      %v710 = vpack.c.b16 %v530, %v524
      %v711 = vpack.c.b16 %v531, %v525
      %v712 = vpack.c.b16 %v538, %v532
      %v713 = vpack.c.b16 %v539, %v533
      %v714 = vpack.c.b16 %v540, %v534
      %v715 = vpack.c.b16 %v541, %v535
      %v716 = vpack.c.b16 %v542, %v536
      %v717 = vpack.c.b16 %v543, %v537
      %v718 = vpack.c.b16 %v550, %v544
      %v719 = vpack.c.b16 %v551, %v545
      %v720 = vpack.c.b16 %v552, %v546
      %v721 = vpack.c.b16 %v553, %v547
      %v722 = vpack.c.b16 %v554, %v548
      %v723 = vpack.c.b16 %v555, %v549
      %v724 = vpack.c.b16 %v562, %v556
      %v725 = vpack.c.b16 %v563, %v557
      %v726 = vpack.c.b16 %v564, %v558
      %v727 = vpack.c.b16 %v565, %v559
      %v728 = vpack.c.b16 %v566, %v560
      %v729 = vpack.c.b16 %v567, %v561
      %v730 = vpack.c.b16 %v574, %v568
      %v731 = vpack.c.b16 %v575, %v569
      %v732 = vpack.c.b16 %v576, %v570
      %v733 = vpack.c.b16 %v577, %v571
      %v734 = vpack.c.b16 %v578, %v572
      %v735 = vpack.c.b16 %v579, %v573
      %v736 = vpack.c.b16 %v586, %v580
      %v737 = vpack.c.b16 %v587, %v581
      %v738 = vpack.c.b16 %v588, %v582
      %v739 = vpack.c.b16 %v589, %v583
      %v740 = vpack.c.b16 %v590, %v584
      %v741 = vpack.c.b16 %v591, %v585
      %v742 = vpack.c.b16 %v598, %v592
      %v743 = vpack.c.b16 %v599, %v593
      %v744 = vpack.c.b16 %v600, %v594
      %v745 = vpack.c.b16 %v601, %v595
      %v746 = vpack.c.b16 %v602, %v596
      %v747 = vpack.c.b16 %v603, %v597
      %v748 = vpack.c.b16 %v610, %v604
      %v749 = vpack.c.b16 %v611, %v605
      %v750 = vpack.c.b16 %v612, %v606
      %v751 = vpack.c.b16 %v613, %v607
      %v752 = vpack.c.b16 %v614, %v608
      %v753 = vpack.c.b16 %v615, %v609
      %v754 = vpack.c.b16 %v622, %v616
      %v755 = vpack.c.b16 %v623, %v617
      %v756 = vpack.c.b16 %v624, %v618
      %v757 = vpack.c.b16 %v625, %v619
      %v758 = vpack.c.b16 %v626, %v620
      %v759 = vpack.c.b16 %v627, %v621
      %v760 = vpack.c.b16 %v634, %v628
      %v761 = vpack.c.b16 %v635, %v629
      %v762 = vpack.c.b16 %v636, %v630
      %v763 = vpack.c.b16 %v637, %v631
      %v764 = vpack.c.b16 %v638, %v632
      %v765 = vpack.c.b16 %v639, %v633
      %v766 = vpack.c.b16 %v646, %v640
      %v767 = vpack.c.b16 %v647, %v641
      %v768 = vpack.c.b16 %v648, %v642
      %v769 = vpack.c.b16 %v649, %v643
      %v770 = vpack.c.b16 %v650, %v644
      %v771 = vpack.c.b16 %v651, %v645
      %v772 = vpack.c.b16 %v658, %v652
      %v773 = vpack.c.b16 %v659, %v653
      %v774 = vpack.c.b16 %v660, %v654
      %v775 = vpack.c.b16 %v661, %v655
      %v776 = vpack.c.b16 %v662, %v656
      %v777 = vpack.c.b16 %v663, %v657
      %v778 = vpack.c.b16 %v670, %v664
      %v779 = vpack.c.b16 %v671, %v665
      %v780 = vpack.c.b16 %v672, %v666
      %v781 = vpack.c.b16 %v673, %v667
      %v782 = vpack.c.b16 %v674, %v668
      %v783 = vpack.c.b16 %v675, %v669
      %v784 = vpack.c.b16 %v682, %v676
      %v785 = vpack.c.b16 %v683, %v677
      %v786 = vpack.c.b16 %v684, %v678
      %v787 = vpack.c.b16 %v685, %v679
      %v788 = vpack.c.b16 %v686, %v680
      %v789 = vpack.c.b16 %v687, %v681
      %v790 = vpack.c.b16 %v694, %v688
      %v791 = vpack.c.b16 %v695, %v689
      %v792 = vpack.c.b16 %v696, %v690
      %v793 = vpack.c.b16 %v697, %v691
      %v794 = vpack.c.b16 %v698, %v692
      %v795 = vpack.c.b16 %v699, %v693
      %892 = vmatprep.subr.bf16.mxu0 %v701
      %893 = vmatpush1.bf16.msra.mxu0 %v700
      %894 = vmatprep.subr.bf16.mxu0 %v707
      %895 = vmatpush1.bf16.msra.mxu0 %v706
      %896 = vmatprep.subr.bf16.mxu0 %v713
      %897 = vmatpush1.bf16.msra.mxu0 %v712
      %898 = vmatprep.subr.bf16.mxu0 %v719
      %899 = vmatpush1.bf16.msra.mxu0 %v718
      %900 = vmatprep.subr.bf16.mxu0 %v725
      %901 = vmatpush1.bf16.msra.mxu0 %v724
      %902 = vmatprep.subr.bf16.mxu0 %v731
      %903 = vmatpush1.bf16.msra.mxu0 %v730
      %904 = vmatprep.subr.bf16.mxu0 %v737
      %905 = vmatpush1.bf16.msra.mxu0 %v736
      %906 = vmatprep.subr.bf16.mxu0 %v743
      %907 = vmatpush1.bf16.msra.mxu0 %v742
      %908 = vmatprep.subr.bf16.mxu0 %v749
      %909 = vmatpush1.bf16.msra.mxu0 %v748
      %910 = vmatprep.subr.bf16.mxu0 %v755
      %911 = vmatpush1.bf16.msra.mxu0 %v754
      %912 = vmatprep.subr.bf16.mxu0 %v761
      %913 = vmatpush1.bf16.msra.mxu0 %v760
      %914 = vmatprep.subr.bf16.mxu0 %v767
      %915 = vmatpush1.bf16.msra.mxu0 %v766
      %916 = vmatprep.subr.bf16.mxu0 %v773
      %917 = vmatpush1.bf16.msra.mxu0 %v772
      %918 = vmatprep.subr.bf16.mxu0 %v779
      %919 = vmatpush1.bf16.msra.mxu0 %v778
      %920 = vmatprep.subr.bf16.mxu0 %v785
      %921 = vmatpush1.bf16.msra.mxu0 %v784
      %922 = vmatprep.subr.bf16.mxu0 %v791
      %923 = vmatpush1.bf16.msra.mxu0 %v790
      %924 = vmatprep.mubr.bf16.mxu0 %v283
      %925 = vmatmul.mubr.bf16.gmra.mrb[0].mxu0 %v282
      %v926 = vpop.f32.mrb[0].mxu0
      %v927 = vadd.f32 %v385, %v926
      %v928 = vpop.f32.mrb[0].mxu0
      %v929 = vadd.f32 %v389, %v928
      %v930 = vpop.f32.mrb[0].mxu0
      %v931 = vpop.f32.mrb[0].mxu0
      %932 = vdwg.mxu0
      %933 = vmatprep.subr.bf16.mxu0 %v703
      %934 = vmatpush1.bf16.msra.mxu0 %v702
      %935 = vmatprep.subr.bf16.mxu0 %v709
      %936 = vmatpush1.bf16.msra.mxu0 %v708
      %937 = vmatprep.subr.bf16.mxu0 %v715
      %938 = vmatpush1.bf16.msra.mxu0 %v714
      %939 = vmatprep.subr.bf16.mxu0 %v721
      %940 = vmatpush1.bf16.msra.mxu0 %v720
      %941 = vmatprep.subr.bf16.mxu0 %v727
      %942 = vmatpush1.bf16.msra.mxu0 %v726
      %943 = vmatprep.subr.bf16.mxu0 %v733
      %944 = vmatpush1.bf16.msra.mxu0 %v732
      %945 = vmatprep.subr.bf16.mxu0 %v739
      %946 = vmatpush1.bf16.msra.mxu0 %v738
      %947 = vmatprep.subr.bf16.mxu0 %v745
      %948 = vmatpush1.bf16.msra.mxu0 %v744
      %949 = vmatprep.subr.bf16.mxu0 %v751
      %950 = vmatpush1.bf16.msra.mxu0 %v750
      %951 = vmatprep.subr.bf16.mxu0 %v757
      %952 = vmatpush1.bf16.msra.mxu0 %v756
      %953 = vmatprep.subr.bf16.mxu0 %v763
      %954 = vmatpush1.bf16.msra.mxu0 %v762
      %955 = vmatprep.subr.bf16.mxu0 %v769
      %956 = vmatpush1.bf16.msra.mxu0 %v768
      %957 = vmatprep.subr.bf16.mxu0 %v775
      %958 = vmatpush1.bf16.msra.mxu0 %v774
      %959 = vmatprep.subr.bf16.mxu0 %v781
      %960 = vmatpush1.bf16.msra.mxu0 %v780
      %961 = vmatprep.subr.bf16.mxu0 %v787
      %962 = vmatpush1.bf16.msra.mxu0 %v786
      %963 = vmatprep.subr.bf16.mxu0 %v793
      %964 = vmatpush1.bf16.msra.mxu0 %v792
      %965 = vmatprep.mubr.bf16.mxu0 %v283
      %966 = vmatmul.mubr.bf16.gmra.mrb[0].mxu0 %v282
      %v967 = vpop.f32.mrb[0].mxu0
      %v968 = vadd.f32 %v393, %v967
      %v969 = vpop.f32.mrb[0].mxu0
      %v970 = vadd.f32 %v397, %v969
      %v971 = vpop.f32.mrb[0].mxu0
      %v972 = vpop.f32.mrb[0].mxu0
      %973 = vdwg.mxu0
      %974 = vmatprep.subr.bf16.mxu0 %v705
      %975 = vmatpush1.bf16.msra.mxu0 %v704
      %976 = vmatprep.subr.bf16.mxu0 %v711
      %977 = vmatpush1.bf16.msra.mxu0 %v710
      %978 = vmatprep.subr.bf16.mxu0 %v717
      %979 = vmatpush1.bf16.msra.mxu0 %v716
      %980 = vmatprep.subr.bf16.mxu0 %v723
      %981 = vmatpush1.bf16.msra.mxu0 %v722
      %982 = vmatprep.subr.bf16.mxu0 %v729
      %983 = vmatpush1.bf16.msra.mxu0 %v728
      %984 = vmatprep.subr.bf16.mxu0 %v735
      %985 = vmatpush1.bf16.msra.mxu0 %v734
      %986 = vmatprep.subr.bf16.mxu0 %v741
      %987 = vmatpush1.bf16.msra.mxu0 %v740
      %988 = vmatprep.subr.bf16.mxu0 %v747
      %989 = vmatpush1.bf16.msra.mxu0 %v746
      %990 = vmatprep.subr.bf16.mxu0 %v753
      %991 = vmatpush1.bf16.msra.mxu0 %v752
      %992 = vmatprep.subr.bf16.mxu0 %v759
      %993 = vmatpush1.bf16.msra.mxu0 %v758
      %994 = vmatprep.subr.bf16.mxu0 %v765
      %995 = vmatpush1.bf16.msra.mxu0 %v764
      %996 = vmatprep.subr.bf16.mxu0 %v771
      %997 = vmatpush1.bf16.msra.mxu0 %v770
      %998 = vmatprep.subr.bf16.mxu0 %v777
      %999 = vmatpush1.bf16.msra.mxu0 %v776
      %1000 = vmatprep.subr.bf16.mxu0 %v783
      %1001 = vmatpush1.bf16.msra.mxu0 %v782
      %1002 = vmatprep.subr.bf16.mxu0 %v789
      %1003 = vmatpush1.bf16.msra.mxu0 %v788
      %1004 = vmatprep.subr.bf16.mxu0 %v795
      %1005 = vmatpush1.bf16.msra.mxu0 %v794
      %1006 = vmatprep.mubr.bf16.mxu0 %v283
      %1007 = vmatmul.mubr.bf16.gmra.mrb[0].mxu0 %v282
      %v1008 = vpop.f32.mrb[0].mxu0
      %v1009 = vadd.f32 %v401, %v1008
      %v1010 = vpop.f32.mrb[0].mxu0
      %v1011 = vadd.f32 %v405, %v1010
      %v1012 = vpop.f32.mrb[0].mxu0
      %v1013 = vpop.f32.mrb[0].mxu0
      %1014 = vdwg.mxu0
      %v1015 = vlaneseq
      %v1016 = vshrl.u32 %v1015, 7
      %v1017 = vlaneseq
      %v1018 = vand.u32 %v1017, 127
      %vm1019 = vcmp.gt.s32.totalorder %v1018, %v1016
      %v1020 = vpack.c.bf16 %v927, %v927
      %v1021 = vpack.c.bf16 %v968, %v968
      %vm1022 = vcmask 523264
      %v1024 = vsel %vm1022, %v1020, 0
      %v1027 = vsel %vm1022, %v1021, 0
      %1029 = vmatprep.subr.bf16.mxu0 0
      %1030 = vmatpush1.bf16.xpose.msra.mxu0 %v1027
      %1031 = vmatprep.subr.bf16.mxu0 0
      %1032 = vmatpush1.bf16.xpose.msra.mxu0 0
      %1033 = vmatprep.subr.bf16.mxu0 0
      %1034 = vmatpush1.bf16.xpose.msra.mxu0 0
      %1035 = vmatprep.subr.bf16.mxu0 0
      %1036 = vmatpush1.bf16.xpose.msra.mxu0 0
      %1037 = vmatprep.subr.bf16.mxu0 0
      %1038 = vmatpush1.bf16.xpose.msra.mxu0 0
      %1039 = vmatprep.subr.bf16.mxu0 0
      %1040 = vmatpush1.bf16.xpose.msra.mxu0 0
      %1041 = vmatprep.subr.bf16.mxu0 0
      %1042 = vmatpush1.bf16.xpose.msra.mxu0 0
      %1043 = vmatprep.subr.bf16.mxu0 0
      %1044 = vmatpush1.bf16.xpose.msra.mxu0 0
      %1045 = vmatprep.subr.bf16.mxu0 0
      %1046 = vmatpush1.bf16.xpose.msra.mxu0 0
      %1047 = vmatprep.subr.bf16.mxu0 0
      %1048 = vmatpush1.bf16.xpose.msra.mxu0 0
      %1049 = vmatprep.subr.bf16.mxu0 0
      %1050 = vmatpush1.bf16.xpose.msra.mxu0 0
      %1051 = vmatprep.subr.bf16.mxu0 0
      %1052 = vmatpush1.bf16.xpose.msra.mxu0 0
      %1053 = vmatprep.subr.bf16.mxu0 0
      %1054 = vmatpush1.bf16.xpose.msra.mxu0 0
      %1055 = vmatprep.subr.bf16.mxu0 0
      %1056 = vmatpush1.bf16.xpose.msra.mxu0 0
      %1057 = vmatprep.subr.bf16.mxu0 0
      %1058 = vmatpush1.bf16.xpose.msra.mxu0 0
      %1059 = vmatprep.subr.bf16.mxu0 0
      %1060 = vmatpush1.bf16.xpose.msra.mxu0 0
      %1061 = vmatprep.mubr.bf16.mxu0 0
      %1062 = vmatmul.mubr.bf16.gmra.mrb[0].mxu0 %v1024
      %v1063 = vpop.f32.mrb[0].mxu0
      %v1064 = vadd.f32 0.0, %v1063
      %v1065 = vpop.f32.mrb[0].mxu0
      %v1066 = vpop.f32.mrb[0].mxu0
      %v1067 = vpop.f32.mrb[0].mxu0
      %1068 = vdwg.mxu0
      %v1069 = vmul.f32 %v1064, 0.125
      %v1070 = vsel %vm1019, -1e+30, %v1069
      %vm1071 = vcmask 64512
      %v1072 = vsel %vm1071, %v1070, -inf
      %1073 = vmax.xlane.f32.xlu0 %v1072
      %v1074 = vpop.xlane.xlu0 %1073
      %v1075 = vsub.f32 %v1070, %v1074
      %v1076 = vmul.f32 %v1075, 1.442695
      %v1077 = vpow.pop %v1076
      %v1078 = vsel %vm1071, %v1077, 0.0
      %1079 = vadd.xlane.f32.xlu0 %v1078
      %v1080 = vpop.xlane.xlu0 %1079
      %v1081 = vrcp.pop %v1080
      %v1082 = vmul.f32 %v1077, %v1081
      %v1083 = vpack.c.bf16 %v1082, %v1082
      %v1084 = vpack.c.bf16 %v1009, %v1009
      %v1086 = vsel %vm1071, %v1083, 0
      %vm1088 = vcmask 1043456
      %v1090 = vsel %vm1088, %v1084, 0
      %1092 = vmatprep.subr.bf16.mxu0 0
      %1093 = vmatpush1.bf16.msra.mxu0 %v1090
      %1094 = vmatprep.subr.bf16.mxu0 0
      %1095 = vmatpush1.bf16.msra.mxu0 0
      %1096 = vmatprep.subr.bf16.mxu0 0
      %1097 = vmatpush1.bf16.msra.mxu0 0
      %1098 = vmatprep.subr.bf16.mxu0 0
      %1099 = vmatpush1.bf16.msra.mxu0 0
      %1100 = vmatprep.subr.bf16.mxu0 0
      %1101 = vmatpush1.bf16.msra.mxu0 0
      %1102 = vmatprep.subr.bf16.mxu0 0
      %1103 = vmatpush1.bf16.msra.mxu0 0
      %1104 = vmatprep.subr.bf16.mxu0 0
      %1105 = vmatpush1.bf16.msra.mxu0 0
      %1106 = vmatprep.subr.bf16.mxu0 0
      %1107 = vmatpush1.bf16.msra.mxu0 0
      %1108 = vmatprep.subr.bf16.mxu0 0
      %1109 = vmatpush1.bf16.msra.mxu0 0
      %1110 = vmatprep.subr.bf16.mxu0 0
      %1111 = vmatpush1.bf16.msra.mxu0 0
      %1112 = vmatprep.subr.bf16.mxu0 0
      %1113 = vmatpush1.bf16.msra.mxu0 0
      %1114 = vmatprep.subr.bf16.mxu0 0
      %1115 = vmatpush1.bf16.msra.mxu0 0
      %1116 = vmatprep.subr.bf16.mxu0 0
      %1117 = vmatpush1.bf16.msra.mxu0 0
      %1118 = vmatprep.subr.bf16.mxu0 0
      %1119 = vmatpush1.bf16.msra.mxu0 0
      %1120 = vmatprep.subr.bf16.mxu0 0
      %1121 = vmatpush1.bf16.msra.mxu0 0
      %1122 = vmatprep.subr.bf16.mxu0 0
      %1123 = vmatpush1.bf16.msra.mxu0 0
      %1124 = vmatprep.mubr.bf16.mxu0 0
      %1125 = vmatmul.mubr.bf16.gmra.mrb[0].mxu0 %v1086
      %v1126 = vpop.f32.mrb[0].mxu0
      %v1127 = vadd.f32 0.0, %v1126
      %v1128 = vpop.f32.mrb[0].mxu0
      %v1129 = vpop.f32.mrb[0].mxu0
      %v1130 = vpop.f32.mrb[0].mxu0
      %1131 = vdwg.mxu0
      %1133 = vrot.lane.b32.xlu0 %v1020, 64
      %v1134 = vpop.permute.xlu0 %1133
      %1136 = vrot.lane.b32.xlu0 %v1021, 64
      %v1137 = vpop.permute.xlu0 %1136
      %v1139 = vsel %vm1022, %v1134, 0
      %v1142 = vsel %vm1022, %v1137, 0
      %1144 = vmatprep.subr.bf16.mxu0 0
      %1145 = vmatpush1.bf16.xpose.msra.mxu0 %v1142
      %1146 = vmatprep.subr.bf16.mxu0 0
      %1147 = vmatpush1.bf16.xpose.msra.mxu0 0
      %1148 = vmatprep.subr.bf16.mxu0 0
      %1149 = vmatpush1.bf16.xpose.msra.mxu0 0
      %1150 = vmatprep.subr.bf16.mxu0 0
      %1151 = vmatpush1.bf16.xpose.msra.mxu0 0
      %1152 = vmatprep.subr.bf16.mxu0 0
      %1153 = vmatpush1.bf16.xpose.msra.mxu0 0
      %1154 = vmatprep.subr.bf16.mxu0 0
      %1155 = vmatpush1.bf16.xpose.msra.mxu0 0
      %1156 = vmatprep.subr.bf16.mxu0 0
      %1157 = vmatpush1.bf16.xpose.msra.mxu0 0
      %1158 = vmatprep.subr.bf16.mxu0 0
      %1159 = vmatpush1.bf16.xpose.msra.mxu0 0
      %1160 = vmatprep.subr.bf16.mxu0 0
      %1161 = vmatpush1.bf16.xpose.msra.mxu0 0
      %1162 = vmatprep.subr.bf16.mxu0 0
      %1163 = vmatpush1.bf16.xpose.msra.mxu0 0
      %1164 = vmatprep.subr.bf16.mxu0 0
      %1165 = vmatpush1.bf16.xpose.msra.mxu0 0
      %1166 = vmatprep.subr.bf16.mxu0 0
      %1167 = vmatpush1.bf16.xpose.msra.mxu0 0
      %1168 = vmatprep.subr.bf16.mxu0 0
      %1169 = vmatpush1.bf16.xpose.msra.mxu0 0
      %1170 = vmatprep.subr.bf16.mxu0 0
      %1171 = vmatpush1.bf16.xpose.msra.mxu0 0
      %1172 = vmatprep.subr.bf16.mxu0 0
      %1173 = vmatpush1.bf16.xpose.msra.mxu0 0
      %1174 = vmatprep.subr.bf16.mxu0 0
      %1175 = vmatpush1.bf16.xpose.msra.mxu0 0
      %1176 = vmatprep.mubr.bf16.mxu0 0
      %1177 = vmatmul.mubr.bf16.gmra.mrb[0].mxu0 %v1139
      %v1178 = vpop.f32.mrb[0].mxu0
      %v1179 = vadd.f32 0.0, %v1178
      %v1180 = vpop.f32.mrb[0].mxu0
      %v1181 = vpop.f32.mrb[0].mxu0
      %v1182 = vpop.f32.mrb[0].mxu0
      %1183 = vdwg.mxu0
      %v1184 = vmul.f32 %v1179, 0.125
      %v1185 = vsel %vm1019, -1e+30, %v1184
      %v1186 = vsel %vm1071, %v1185, -inf
      %1187 = vmax.xlane.f32.xlu0 %v1186
      %v1188 = vpop.xlane.xlu0 %1187
      %v1189 = vsub.f32 %v1185, %v1188
      %v1190 = vmul.f32 %v1189, 1.442695
      %v1191 = vpow.pop %v1190
      %v1192 = vsel %vm1071, %v1191, 0.0
      %1193 = vadd.xlane.f32.xlu0 %v1192
      %v1194 = vpop.xlane.xlu0 %1193
      %v1195 = vrcp.pop %v1194
      %v1196 = vmul.f32 %v1191, %v1195
      %v1197 = vpack.c.bf16 %v1196, %v1196
      %1199 = vrot.lane.b32.xlu0 %v1084, 64
      %v1200 = vpop.permute.xlu0 %1199
      %v1202 = vsel %vm1071, %v1197, 0
      %v1205 = vsel %vm1088, %v1200, 0
      %1207 = vmatprep.subr.bf16.mxu0 0
      %1208 = vmatpush1.bf16.msra.mxu0 %v1205
      %1209 = vmatprep.subr.bf16.mxu0 0
      %1210 = vmatpush1.bf16.msra.mxu0 0
      %1211 = vmatprep.subr.bf16.mxu0 0
      %1212 = vmatpush1.bf16.msra.mxu0 0
      %1213 = vmatprep.subr.bf16.mxu0 0
      %1214 = vmatpush1.bf16.msra.mxu0 0
      %1215 = vmatprep.subr.bf16.mxu0 0
      %1216 = vmatpush1.bf16.msra.mxu0 0
      %1217 = vmatprep.subr.bf16.mxu0 0
      %1218 = vmatpush1.bf16.msra.mxu0 0
      %1219 = vmatprep.subr.bf16.mxu0 0
      %1220 = vmatpush1.bf16.msra.mxu0 0
      %1221 = vmatprep.subr.bf16.mxu0 0
      %1222 = vmatpush1.bf16.msra.mxu0 0
      %1223 = vmatprep.subr.bf16.mxu0 0
      %1224 = vmatpush1.bf16.msra.mxu0 0
      %1225 = vmatprep.subr.bf16.mxu0 0
      %1226 = vmatpush1.bf16.msra.mxu0 0
      %1227 = vmatprep.subr.bf16.mxu0 0
      %1228 = vmatpush1.bf16.msra.mxu0 0
      %1229 = vmatprep.subr.bf16.mxu0 0
      %1230 = vmatpush1.bf16.msra.mxu0 0
      %1231 = vmatprep.subr.bf16.mxu0 0
      %1232 = vmatpush1.bf16.msra.mxu0 0
      %1233 = vmatprep.subr.bf16.mxu0 0
      %1234 = vmatpush1.bf16.msra.mxu0 0
      %1235 = vmatprep.subr.bf16.mxu0 0
      %1236 = vmatpush1.bf16.msra.mxu0 0
      %1237 = vmatprep.subr.bf16.mxu0 0
      %1238 = vmatpush1.bf16.msra.mxu0 0
      %1239 = vmatprep.mubr.bf16.mxu0 0
      %1240 = vmatmul.mubr.bf16.gmra.mrb[0].mxu0 %v1202
      %v1241 = vpop.f32.mrb[0].mxu0
      %v1242 = vadd.f32 0.0, %v1241
      %v1243 = vpop.f32.mrb[0].mxu0
      %v1244 = vpop.f32.mrb[0].mxu0
      %v1245 = vpop.f32.mrb[0].mxu0
      %1246 = vdwg.mxu0
      %v1247 = vpack.c.bf16 %v929, %v929
      %v1248 = vpack.c.bf16 %v970, %v970
      %v1250 = vsel %vm1022, %v1247, 0
      %v1253 = vsel %vm1022, %v1248, 0
      %1255 = vmatprep.subr.bf16.mxu0 0
      %1256 = vmatpush1.bf16.xpose.msra.mxu0 %v1253
      %1257 = vmatprep.subr.bf16.mxu0 0
      %1258 = vmatpush1.bf16.xpose.msra.mxu0 0
      %1259 = vmatprep.subr.bf16.mxu0 0
      %1260 = vmatpush1.bf16.xpose.msra.mxu0 0
      %1261 = vmatprep.subr.bf16.mxu0 0
      %1262 = vmatpush1.bf16.xpose.msra.mxu0 0
      %1263 = vmatprep.subr.bf16.mxu0 0
      %1264 = vmatpush1.bf16.xpose.msra.mxu0 0
      %1265 = vmatprep.subr.bf16.mxu0 0
      %1266 = vmatpush1.bf16.xpose.msra.mxu0 0
      %1267 = vmatprep.subr.bf16.mxu0 0
      %1268 = vmatpush1.bf16.xpose.msra.mxu0 0
      %1269 = vmatprep.subr.bf16.mxu0 0
      %1270 = vmatpush1.bf16.xpose.msra.mxu0 0
      %1271 = vmatprep.subr.bf16.mxu0 0
      %1272 = vmatpush1.bf16.xpose.msra.mxu0 0
      %1273 = vmatprep.subr.bf16.mxu0 0
      %1274 = vmatpush1.bf16.xpose.msra.mxu0 0
      %1275 = vmatprep.subr.bf16.mxu0 0
      %1276 = vmatpush1.bf16.xpose.msra.mxu0 0
      %1277 = vmatprep.subr.bf16.mxu0 0
      %1278 = vmatpush1.bf16.xpose.msra.mxu0 0
      %1279 = vmatprep.subr.bf16.mxu0 0
      %1280 = vmatpush1.bf16.xpose.msra.mxu0 0
      %1281 = vmatprep.subr.bf16.mxu0 0
      %1282 = vmatpush1.bf16.xpose.msra.mxu0 0
      %1283 = vmatprep.subr.bf16.mxu0 0
      %1284 = vmatpush1.bf16.xpose.msra.mxu0 0
      %1285 = vmatprep.subr.bf16.mxu0 0
      %1286 = vmatpush1.bf16.xpose.msra.mxu0 0
      %1287 = vmatprep.mubr.bf16.mxu0 0
      %1288 = vmatmul.mubr.bf16.gmra.mrb[0].mxu0 %v1250
      %v1289 = vpop.f32.mrb[0].mxu0
      %v1290 = vadd.f32 0.0, %v1289
      %v1291 = vpop.f32.mrb[0].mxu0
      %v1292 = vpop.f32.mrb[0].mxu0
      %v1293 = vpop.f32.mrb[0].mxu0
      %1294 = vdwg.mxu0
      %v1295 = vmul.f32 %v1290, 0.125
      %v1296 = vsel %vm1019, -1e+30, %v1295
      %v1297 = vsel %vm1071, %v1296, -inf
      %1298 = vmax.xlane.f32.xlu0 %v1297
      %v1299 = vpop.xlane.xlu0 %1298
      %v1300 = vsub.f32 %v1296, %v1299
      %v1301 = vmul.f32 %v1300, 1.442695
      %v1302 = vpow.pop %v1301
      %v1303 = vsel %vm1071, %v1302, 0.0
      %1304 = vadd.xlane.f32.xlu0 %v1303
      %v1305 = vpop.xlane.xlu0 %1304
      %v1306 = vrcp.pop %v1305
      %v1307 = vmul.f32 %v1302, %v1306
      %v1308 = vpack.c.bf16 %v1307, %v1307
      %v1309 = vpack.c.bf16 %v1011, %v1011
      %v1311 = vsel %vm1071, %v1308, 0
      %v1314 = vsel %vm1088, %v1309, 0
      %1316 = vmatprep.subr.bf16.mxu0 0
      %1317 = vmatpush1.bf16.msra.mxu0 %v1314
      %1318 = vmatprep.subr.bf16.mxu0 0
      %1319 = vmatpush1.bf16.msra.mxu0 0
      %1320 = vmatprep.subr.bf16.mxu0 0
      %1321 = vmatpush1.bf16.msra.mxu0 0
      %1322 = vmatprep.subr.bf16.mxu0 0
      %1323 = vmatpush1.bf16.msra.mxu0 0
      %1324 = vmatprep.subr.bf16.mxu0 0
      %1325 = vmatpush1.bf16.msra.mxu0 0
      %1326 = vmatprep.subr.bf16.mxu0 0
      %1327 = vmatpush1.bf16.msra.mxu0 0
      %1328 = vmatprep.subr.bf16.mxu0 0
      %1329 = vmatpush1.bf16.msra.mxu0 0
      %1330 = vmatprep.subr.bf16.mxu0 0
      %1331 = vmatpush1.bf16.msra.mxu0 0
      %1332 = vmatprep.subr.bf16.mxu0 0
      %1333 = vmatpush1.bf16.msra.mxu0 0
      %1334 = vmatprep.subr.bf16.mxu0 0
      %1335 = vmatpush1.bf16.msra.mxu0 0
      %1336 = vmatprep.subr.bf16.mxu0 0
      %1337 = vmatpush1.bf16.msra.mxu0 0
      %1338 = vmatprep.subr.bf16.mxu0 0
      %1339 = vmatpush1.bf16.msra.mxu0 0
      %1340 = vmatprep.subr.bf16.mxu0 0
      %1341 = vmatpush1.bf16.msra.mxu0 0
      %1342 = vmatprep.subr.bf16.mxu0 0
      %1343 = vmatpush1.bf16.msra.mxu0 0
      %1344 = vmatprep.subr.bf16.mxu0 0
      %1345 = vmatpush1.bf16.msra.mxu0 0
      %1346 = vmatprep.subr.bf16.mxu0 0
      %1347 = vmatpush1.bf16.msra.mxu0 0
      %1348 = vmatprep.mubr.bf16.mxu0 0
      %1349 = vmatmul.mubr.bf16.gmra.mrb[0].mxu0 %v1311
      %v1350 = vpop.f32.mrb[0].mxu0
      %v1351 = vadd.f32 0.0, %v1350
      %v1352 = vpop.f32.mrb[0].mxu0
      %v1353 = vpop.f32.mrb[0].mxu0
      %v1354 = vpop.f32.mrb[0].mxu0
      %1355 = vdwg.mxu0
      %1357 = vrot.lane.b32.xlu0 %v1247, 64
      %v1358 = vpop.permute.xlu0 %1357
      %1360 = vrot.lane.b32.xlu0 %v1248, 64
      %v1361 = vpop.permute.xlu0 %1360
      %v1363 = vsel %vm1022, %v1358, 0
      %v1366 = vsel %vm1022, %v1361, 0
      %1368 = vmatprep.subr.bf16.mxu0 0
      %1369 = vmatpush1.bf16.xpose.msra.mxu0 %v1366
      %1370 = vmatprep.subr.bf16.mxu0 0
      %1371 = vmatpush1.bf16.xpose.msra.mxu0 0
      %1372 = vmatprep.subr.bf16.mxu0 0
      %1373 = vmatpush1.bf16.xpose.msra.mxu0 0
      %1374 = vmatprep.subr.bf16.mxu0 0
      %1375 = vmatpush1.bf16.xpose.msra.mxu0 0
      %1376 = vmatprep.subr.bf16.mxu0 0
      %1377 = vmatpush1.bf16.xpose.msra.mxu0 0
      %1378 = vmatprep.subr.bf16.mxu0 0
      %1379 = vmatpush1.bf16.xpose.msra.mxu0 0
      %1380 = vmatprep.subr.bf16.mxu0 0
      %1381 = vmatpush1.bf16.xpose.msra.mxu0 0
      %1382 = vmatprep.subr.bf16.mxu0 0
      %1383 = vmatpush1.bf16.xpose.msra.mxu0 0
      %1384 = vmatprep.subr.bf16.mxu0 0
      %1385 = vmatpush1.bf16.xpose.msra.mxu0 0
      %1386 = vmatprep.subr.bf16.mxu0 0
      %1387 = vmatpush1.bf16.xpose.msra.mxu0 0
      %1388 = vmatprep.subr.bf16.mxu0 0
      %1389 = vmatpush1.bf16.xpose.msra.mxu0 0
      %1390 = vmatprep.subr.bf16.mxu0 0
      %1391 = vmatpush1.bf16.xpose.msra.mxu0 0
      %1392 = vmatprep.subr.bf16.mxu0 0
      %1393 = vmatpush1.bf16.xpose.msra.mxu0 0
      %1394 = vmatprep.subr.bf16.mxu0 0
      %1395 = vmatpush1.bf16.xpose.msra.mxu0 0
      %1396 = vmatprep.subr.bf16.mxu0 0
      %1397 = vmatpush1.bf16.xpose.msra.mxu0 0
      %1398 = vmatprep.subr.bf16.mxu0 0
      %1399 = vmatpush1.bf16.xpose.msra.mxu0 0
      %1400 = vmatprep.mubr.bf16.mxu0 0
      %1401 = vmatmul.mubr.bf16.gmra.mrb[0].mxu0 %v1363
      %v1402 = vpop.f32.mrb[0].mxu0
      %v1403 = vadd.f32 0.0, %v1402
      %v1404 = vpop.f32.mrb[0].mxu0
      %v1405 = vpop.f32.mrb[0].mxu0
      %v1406 = vpop.f32.mrb[0].mxu0
      %1407 = vdwg.mxu0
      %v1408 = vmul.f32 %v1403, 0.125
      %v1409 = vsel %vm1019, -1e+30, %v1408
      %v1410 = vsel %vm1071, %v1409, -inf
      %1411 = vmax.xlane.f32.xlu0 %v1410
      %v1412 = vpop.xlane.xlu0 %1411
      %v1413 = vsub.f32 %v1409, %v1412
      %v1414 = vmul.f32 %v1413, 1.442695
      %v1415 = vpow.pop %v1414
      %v1416 = vsel %vm1071, %v1415, 0.0
      %1417 = vadd.xlane.f32.xlu0 %v1416
      %v1418 = vpop.xlane.xlu0 %1417
      %v1419 = vrcp.pop %v1418
      %v1420 = vmul.f32 %v1415, %v1419
      %v1421 = vpack.c.bf16 %v1420, %v1420
      %1423 = vrot.lane.b32.xlu0 %v1309, 64
      %v1424 = vpop.permute.xlu0 %1423
      %v1426 = vsel %vm1071, %v1421, 0
      %v1429 = vsel %vm1088, %v1424, 0
      %1431 = vmatprep.subr.bf16.mxu0 0
      %1432 = vmatpush1.bf16.msra.mxu0 %v1429
      %1433 = vmatprep.subr.bf16.mxu0 0
      %1434 = vmatpush1.bf16.msra.mxu0 0
      %1435 = vmatprep.subr.bf16.mxu0 0
      %1436 = vmatpush1.bf16.msra.mxu0 0
      %1437 = vmatprep.subr.bf16.mxu0 0
      %1438 = vmatpush1.bf16.msra.mxu0 0
      %1439 = vmatprep.subr.bf16.mxu0 0
      %1440 = vmatpush1.bf16.msra.mxu0 0
      %1441 = vmatprep.subr.bf16.mxu0 0
      %1442 = vmatpush1.bf16.msra.mxu0 0
      %1443 = vmatprep.subr.bf16.mxu0 0
      %1444 = vmatpush1.bf16.msra.mxu0 0
      %1445 = vmatprep.subr.bf16.mxu0 0
      %1446 = vmatpush1.bf16.msra.mxu0 0
      %1447 = vmatprep.subr.bf16.mxu0 0
      %1448 = vmatpush1.bf16.msra.mxu0 0
      %1449 = vmatprep.subr.bf16.mxu0 0
      %1450 = vmatpush1.bf16.msra.mxu0 0
      %1451 = vmatprep.subr.bf16.mxu0 0
      %1452 = vmatpush1.bf16.msra.mxu0 0
      %1453 = vmatprep.subr.bf16.mxu0 0
      %1454 = vmatpush1.bf16.msra.mxu0 0
      %1455 = vmatprep.subr.bf16.mxu0 0
      %1456 = vmatpush1.bf16.msra.mxu0 0
      %1457 = vmatprep.subr.bf16.mxu0 0
      %1458 = vmatpush1.bf16.msra.mxu0 0
      %1459 = vmatprep.subr.bf16.mxu0 0
      %1460 = vmatpush1.bf16.msra.mxu0 0
      %1461 = vmatprep.subr.bf16.mxu0 0
      %1462 = vmatpush1.bf16.msra.mxu0 0
      %1463 = vmatprep.mubr.bf16.mxu0 0
      %1464 = vmatmul.mubr.bf16.gmra.mrb[0].mxu0 %v1426
      %v1465 = vpop.f32.mrb[0].mxu0
      %v1466 = vadd.f32 0.0, %v1465
      %v1467 = vpop.f32.mrb[0].mxu0
      %v1468 = vpop.f32.mrb[0].mxu0
      %v1469 = vpop.f32.mrb[0].mxu0
      %1470 = vdwg.mxu0
      %1472 = vrot.lane.b32.xlu0 %v1242, 64
      %v1473 = vpop.permute.xlu0 %1472
      %1476 = vrot.lane.b32.xlu0 %v1466, 64
      %v1477 = vpop.permute.xlu0 %1476
      %v1479 = vsel %vm1022, %v1127, %v1473
      %v1480 = vsel %vm1022, %v1351, %v1477
      %v1481 = vpack.c.bf16 %v1479, %v1479
      %v1482 = vpack.c.bf16 %v1480, %v1480
      %v1483 = vld [vmem:[%s3] sm:$0xff]
      %v1484 = vld [vmem:[%s3 + $0x8] sm:$0xff]
      %v1485 = vld [vmem:[%s3 + $0x10] sm:$0xff]
      %v1486 = vld [vmem:[%s3 + $0x18] sm:$0xff]
      %v1487 = vld [vmem:[%s3 + $0x20] sm:$0xff]
      %v1488 = vld [vmem:[%s3 + $0x28] sm:$0xff]
      %v1489 = vld [vmem:[%s3 + $0x30] sm:$0xff]
      %v1490 = vld [vmem:[%s3 + $0x38] sm:$0xff]
      %v1491 = vld [vmem:[%s3 + $0x40] sm:$0xff]
      %v1492 = vld [vmem:[%s3 + $0x48] sm:$0xff]
      %v1493 = vld [vmem:[%s3 + $0x50] sm:$0xff]
      %v1494 = vld [vmem:[%s3 + $0x58] sm:$0xff]
      %v1495 = vld [vmem:[%s3 + $0x60] sm:$0xff]
      %v1496 = vld [vmem:[%s3 + $0x68] sm:$0xff]
      %v1497 = vld [vmem:[%s3 + $0x70] sm:$0xff]
      %v1498 = vld [vmem:[%s3 + $0x78] sm:$0xff]
      %v1499 = vld [vmem:[%s3 + $0x80] sm:$0xff]
      %v1500 = vld [vmem:[%s3 + $0x88] sm:$0xff]
      %v1501 = vld [vmem:[%s3 + $0x90] sm:$0xff]
      %v1502 = vld [vmem:[%s3 + $0x98] sm:$0xff]
      %v1503 = vld [vmem:[%s3 + $0xa0] sm:$0xff]
      %v1504 = vld [vmem:[%s3 + $0xa8] sm:$0xff]
      %v1505 = vld [vmem:[%s3 + $0xb0] sm:$0xff]
      %v1506 = vld [vmem:[%s3 + $0xb8] sm:$0xff]
      %v1507 = vld [vmem:[%s3 + $0xc0] sm:$0xff]
      %v1508 = vld [vmem:[%s3 + $0xc8] sm:$0xff]
      %v1509 = vld [vmem:[%s3 + $0xd0] sm:$0xff]
      %v1510 = vld [vmem:[%s3 + $0xd8] sm:$0xff]
      %v1511 = vld [vmem:[%s3 + $0xe0] sm:$0xff]
      %v1512 = vld [vmem:[%s3 + $0xe8] sm:$0xff]
      %v1513 = vld [vmem:[%s3 + $0xf0] sm:$0xff]
      %v1514 = vld [vmem:[%s3 + $0xf8] sm:$0xff]
      %v1515 = vld [vmem:[%s4] sm:$0x3]
      %v1517 = vlaneseq
      %v1518 = vshrl.u32 %v1517, 7
      %v1519 = vsub.s32 0, %v1518
      %v1520 = vrot.slane %v1515, %v1519
      %v1521 = vlaneseq
      %v1522 = vshrl.u32 %v1521, 7
      %v1523 = vsub.s32 1, %v1522
      %v1524 = vrot.slane %v1515, %v1523
      %v1559 = vunpack.c.l.b16 %v1483
      %v1560 = vunpack.c.h.b16 %v1483
      %v1561 = vunpack.c.l.b16 %v1484
      %v1562 = vunpack.c.h.b16 %v1484
      %v1563 = vunpack.c.l.b16 %v1485
      %v1564 = vunpack.c.h.b16 %v1485
      %v1565 = vunpack.c.l.b16 %v1486
      %v1566 = vunpack.c.h.b16 %v1486
      %v1567 = vunpack.c.l.b16 %v1487
      %v1568 = vunpack.c.h.b16 %v1487
      %v1569 = vunpack.c.l.b16 %v1488
      %v1570 = vunpack.c.h.b16 %v1488
      %v1571 = vunpack.c.l.b16 %v1489
      %v1572 = vunpack.c.h.b16 %v1489
      %v1573 = vunpack.c.l.b16 %v1490
      %v1574 = vunpack.c.h.b16 %v1490
      %v1575 = vunpack.c.l.b16 %v1491
      %v1576 = vunpack.c.h.b16 %v1491
      %v1577 = vunpack.c.l.b16 %v1492
      %v1578 = vunpack.c.h.b16 %v1492
      %v1579 = vunpack.c.l.b16 %v1493
      %v1580 = vunpack.c.h.b16 %v1493
      %v1581 = vunpack.c.l.b16 %v1494
      %v1582 = vunpack.c.h.b16 %v1494
      %v1583 = vunpack.c.l.b16 %v1495
      %v1584 = vunpack.c.h.b16 %v1495
      %v1585 = vunpack.c.l.b16 %v1496
      %v1586 = vunpack.c.h.b16 %v1496
      %v1587 = vunpack.c.l.b16 %v1497
      %v1588 = vunpack.c.h.b16 %v1497
      %v1589 = vunpack.c.l.b16 %v1498
      %v1590 = vunpack.c.h.b16 %v1498
      %v1591 = vunpack.c.l.b16 %v1499
      %v1592 = vunpack.c.h.b16 %v1499
      %v1593 = vunpack.c.l.b16 %v1500
      %v1594 = vunpack.c.h.b16 %v1500
      %v1595 = vunpack.c.l.b16 %v1501
      %v1596 = vunpack.c.h.b16 %v1501
      %v1597 = vunpack.c.l.b16 %v1502
      %v1598 = vunpack.c.h.b16 %v1502
      %v1599 = vunpack.c.l.b16 %v1503
      %v1600 = vunpack.c.h.b16 %v1503
      %v1601 = vunpack.c.l.b16 %v1504
      %v1602 = vunpack.c.h.b16 %v1504
      %v1603 = vunpack.c.l.b16 %v1505
      %v1604 = vunpack.c.h.b16 %v1505
      %v1605 = vunpack.c.l.b16 %v1506
      %v1606 = vunpack.c.h.b16 %v1506
      %v1607 = vunpack.c.l.b16 %v1507
      %v1608 = vunpack.c.h.b16 %v1507
      %v1609 = vunpack.c.l.b16 %v1508
      %v1610 = vunpack.c.h.b16 %v1508
      %v1611 = vunpack.c.l.b16 %v1509
      %v1612 = vunpack.c.h.b16 %v1509
      %v1613 = vunpack.c.l.b16 %v1510
      %v1614 = vunpack.c.h.b16 %v1510
      %v1615 = vunpack.c.l.b16 %v1511
      %v1616 = vunpack.c.h.b16 %v1511
      %v1617 = vunpack.c.l.b16 %v1512
      %v1618 = vunpack.c.h.b16 %v1512
      %v1619 = vunpack.c.l.b16 %v1513
      %v1620 = vunpack.c.h.b16 %v1513
      %v1621 = vunpack.c.l.b16 %v1514
      %v1622 = vunpack.c.h.b16 %v1514
      %v1623 = vpack.c.b16 %v1561, %v1559
      %v1624 = vpack.c.b16 %v1562, %v1560
      %v1625 = vpack.c.b16 %v1565, %v1563
      %v1626 = vpack.c.b16 %v1566, %v1564
      %v1627 = vpack.c.b16 %v1569, %v1567
      %v1628 = vpack.c.b16 %v1570, %v1568
      %v1629 = vpack.c.b16 %v1573, %v1571
      %v1630 = vpack.c.b16 %v1574, %v1572
      %v1631 = vpack.c.b16 %v1577, %v1575
      %v1632 = vpack.c.b16 %v1578, %v1576
      %v1633 = vpack.c.b16 %v1581, %v1579
      %v1634 = vpack.c.b16 %v1582, %v1580
      %v1635 = vpack.c.b16 %v1585, %v1583
      %v1636 = vpack.c.b16 %v1586, %v1584
      %v1637 = vpack.c.b16 %v1589, %v1587
      %v1638 = vpack.c.b16 %v1590, %v1588
      %v1639 = vpack.c.b16 %v1593, %v1591
      %v1640 = vpack.c.b16 %v1594, %v1592
      %v1641 = vpack.c.b16 %v1597, %v1595
      %v1642 = vpack.c.b16 %v1598, %v1596
      %v1643 = vpack.c.b16 %v1601, %v1599
      %v1644 = vpack.c.b16 %v1602, %v1600
      %v1645 = vpack.c.b16 %v1605, %v1603
      %v1646 = vpack.c.b16 %v1606, %v1604
      %v1647 = vpack.c.b16 %v1609, %v1607
      %v1648 = vpack.c.b16 %v1610, %v1608
      %v1649 = vpack.c.b16 %v1613, %v1611
      %v1650 = vpack.c.b16 %v1614, %v1612
      %v1651 = vpack.c.b16 %v1617, %v1615
      %v1652 = vpack.c.b16 %v1618, %v1616
      %v1653 = vpack.c.b16 %v1621, %v1619
      %v1654 = vpack.c.b16 %v1622, %v1620
      %1687 = vmatprep.subr.bf16.mxu0 %v1624
      %1688 = vmatpush1.bf16.msra.mxu0 %v1623
      %1689 = vmatprep.subr.bf16.mxu0 %v1626
      %1690 = vmatpush1.bf16.msra.mxu0 %v1625
      %1691 = vmatprep.subr.bf16.mxu0 %v1628
      %1692 = vmatpush1.bf16.msra.mxu0 %v1627
      %1693 = vmatprep.subr.bf16.mxu0 %v1630
      %1694 = vmatpush1.bf16.msra.mxu0 %v1629
      %1695 = vmatprep.subr.bf16.mxu0 %v1632
      %1696 = vmatpush1.bf16.msra.mxu0 %v1631
      %1697 = vmatprep.subr.bf16.mxu0 %v1634
      %1698 = vmatpush1.bf16.msra.mxu0 %v1633
      %1699 = vmatprep.subr.bf16.mxu0 %v1636
      %1700 = vmatpush1.bf16.msra.mxu0 %v1635
      %1701 = vmatprep.subr.bf16.mxu0 %v1638
      %1702 = vmatpush1.bf16.msra.mxu0 %v1637
      %1703 = vmatprep.subr.bf16.mxu0 %v1640
      %1704 = vmatpush1.bf16.msra.mxu0 %v1639
      %1705 = vmatprep.subr.bf16.mxu0 %v1642
      %1706 = vmatpush1.bf16.msra.mxu0 %v1641
      %1707 = vmatprep.subr.bf16.mxu0 %v1644
      %1708 = vmatpush1.bf16.msra.mxu0 %v1643
      %1709 = vmatprep.subr.bf16.mxu0 %v1646
      %1710 = vmatpush1.bf16.msra.mxu0 %v1645
      %1711 = vmatprep.subr.bf16.mxu0 %v1648
      %1712 = vmatpush1.bf16.msra.mxu0 %v1647
      %1713 = vmatprep.subr.bf16.mxu0 %v1650
      %1714 = vmatpush1.bf16.msra.mxu0 %v1649
      %1715 = vmatprep.subr.bf16.mxu0 %v1652
      %1716 = vmatpush1.bf16.msra.mxu0 %v1651
      %1717 = vmatprep.subr.bf16.mxu0 %v1654
      %1718 = vmatpush1.bf16.msra.mxu0 %v1653
      %1719 = vmatprep.mubr.bf16.mxu0 %v1482
      %1720 = vmatmul.mubr.bf16.gmra.mrb[0].mxu0 %v1481
      %v1721 = vpop.f32.mrb[0].mxu0
      %v1722 = vadd.f32 %v1520, %v1721
      %v1723 = vpop.f32.mrb[0].mxu0
      %v1724 = vadd.f32 %v1524, %v1723
      %v1725 = vpop.f32.mrb[0].mxu0
      %v1726 = vpop.f32.mrb[0].mxu0
      %1727 = vdwg.mxu0
      %v1728 = vadd.f32 %v280, %v1722
      %v1729 = vadd.f32 %v281, %v1724
      %v1730 = vadd.f32 %v1728, %v1729
      %1731 = vadd.xlane.f32.xlu0 %v1730
      %v1732 = vpop.xlane.xlu0 %1731
      %v1733 = vrcp.pop 256.0
      %v1734 = vmul.f32 %v1732, %v1733
      %v1735 = vsub.f32 %v1728, %v1734
      %v1736 = vsub.f32 %v1729, %v1734
      %v1737 = vmul.f32 %v1735, %v1735
      %v1738 = vmul.f32 %v1736, %v1736
      %v1739 = vadd.f32 %v1737, %v1738
      %1740 = vadd.xlane.f32.xlu0 %v1739
      %v1741 = vpop.xlane.xlu0 %1740
      %v1742 = vmul.f32 %v1741, %v1733
      %v1743 = vadd.f32 %v1742, 1e-05
      %v1744 = vrsqrt.pop %v1743
      %v1745 = vmul.f32 %v1735, %v1744
      %v1746 = vmul.f32 %v1736, %v1744
      %v1747 = vld [vmem:[%s5] sm:$0x3]
      %v1749 = vlaneseq
      %v1750 = vshrl.u32 %v1749, 7
      %v1751 = vsub.s32 0, %v1750
      %v1752 = vrot.slane %v1747, %v1751
      %v1753 = vlaneseq
      %v1754 = vshrl.u32 %v1753, 7
      %v1755 = vsub.s32 1, %v1754
      %v1756 = vrot.slane %v1747, %v1755
      %v1759 = vmul.f32 %v1745, %v1752
      %v1760 = vmul.f32 %v1746, %v1756
      %v1761 = vld [vmem:[%s6] sm:$0x3]
      %v1763 = vlaneseq
      %v1764 = vshrl.u32 %v1763, 7
      %v1765 = vsub.s32 0, %v1764
      %v1766 = vrot.slane %v1761, %v1765
      %v1767 = vlaneseq
      %v1768 = vshrl.u32 %v1767, 7
      %v1769 = vsub.s32 1, %v1768
      %v1770 = vrot.slane %v1761, %v1769
      %v1773 = vadd.f32 %v1759, %v1766
      %v1774 = vadd.f32 %v1760, %v1770
      %1775 = vst [vmem:[%s278] sm:$0xff] %v1773
      %1776 = vst [vmem:[%s278 + $0x8] sm:$0xff] %v1774
      %p1777 = scmp.lt.s32.totalorder %s18, 1
      %s1778 = scalar_select %p1777, %s18, 1
      %s1779 = smul.addr %s1778, 2
      %s1780 = smul.addr %s1779, 8
      %s1781 = scalar_lea.vmem %s7, %s1780
      // Predicated region
      $region49: #{transformer_lm_forward.13} parent=47 // pred_check
        %p1782 = pneg %p188
      $region50: #{transformer_lm_forward.13} parent=47 // pred_check_branch
        %1784 = sbr.rel (%p1782) target = $region52
      $region51: #{transformer_lm_forward.13} parent=47 // pred_region
        _
      $region52: #{transformer_lm_forward.13} parent=47 // pred_fallthru
        _
    $region48: #{transformer_lm_forward.13} parent=5 // pred_fallthru
      _
    %p1785 = scmp.le.s32.totalorder 2, %s13
    // Predicated region
    $region53: #{transformer_lm_forward.13} parent=5 // pred_check
      %p1786 = pneg %p1785
    $region54: #{transformer_lm_forward.13} parent=5 // pred_check_branch
      %1788 = sbr.rel (%p1786) target = $region56
    $region55: #{transformer_lm_forward.13} parent=5 // pred_region
      %s1789 = ssub.s32 %s13, 2
      // Predicated region
      $region57: #{transformer_lm_forward.13} parent=55 // pred_check
        %p1790 = pneg %p194
      $region58: #{transformer_lm_forward.13} parent=55 // pred_check_branch
        %1792 = sbr.rel (%p1790) target = $region60
      $region59: #{transformer_lm_forward.13} parent=55 // pred_region
        %p1793 = scmp.lt.s32.totalorder %s19, 1
        %s1794 = scalar_select %p1793, %s19, 1
        %s1795 = smul.addr %s1794, 2
        %s1796 = smul.addr %s1795, 8
        %s1797 = scalar_lea.vmem %s7, %s1796
      $region60: #{transformer_lm_forward.13} parent=55 // pred_fallthru
        _
    $region56: #{transformer_lm_forward.13} parent=5 // pred_fallthru
      _
  $region6: #{transformer_lm_forward.13} parent=0 // loop_footer
    %s17 = sadd.s32 1, %s13
  $region7: #{transformer_lm_forward.13} parent=0 // loop_footer_branch
    %12 = sbr.rel target = $region3
  $region8: #{transformer_lm_forward.13} parent=0 // loop_exit
    _

// kernel: transformer_lm_forward.19
$region0: #{transformer_lm_forward.19}
  #allocation0 [shape = 'u32[]', space=smem, size = 0x4, offset = 0x4, fixed_abs, tag = 'smem constant byte address 0x4 - core index']
  #allocation1 [shape = 'u32[144,128]{1,0:T(1,128)}', space=vmem, size = 0x12000, scoped, tag = 'internal scratch']
  %s0 = inlined_call_operand.vmem [shape: bf16[16,256], index: 0, kind: input, shape index: {}]
  %s1 = inlined_call_operand.vmem [shape: bf16[256,1024], index: 1, kind: input, shape index: {}]
  %s2 = inlined_call_operand.vmem [shape: f32[1,1024], index: 2, kind: input, shape index: {}]
  %s3 = inlined_call_operand.hbm [shape: f32[16,1024], index: 3, kind: output, shape index: {}]
  %s4 = sld [smem:[#allocation0]]
  $region68: #{transformer_lm_forward.19} parent=0
    _
  %s6 = ssub.s32 1, %s4
  %s7 = scalar_select 0, %s6, %s4
  $region1: #{transformer_lm_forward.19} parent=0
    #allocation2 [shape = 'u8[524288]{0}', space=vmem, size = 0x80000, scoped, tag = 'input window, operand 1']
    #allocation3 [shape = 'u8[65536]{0}', space=vmem, size = 0x10000, scoped, tag = 'output window, operand 0']
    #allocation4 [shape = 's32[2]{0}', space=sflag, size = 0x8, scoped, tag = 'scoped memory for transformer_lm_forward.19']
    %8 = vsyncpa [#allocation4], 0
    %s9 = scalar_lea.sflag [#allocation4], 1
    %10 = vsyncpa %s9, 0
    loop: start=0, step=1, limit=4
    $region2: #{transformer_lm_forward.19} parent=1 // loop_pre_header
      _
    $region3: #{transformer_lm_forward.19} parent=1 // loop_header
      %s12 = sphi 0, %s16
      %p13 = scmp.ge.s32.totalorder %s12, 4
      %s19 = sphi 0, %s31
      %s20 = sphi 0, %s27
      %s21 = sphi 0, %s19
      %s22 = sphi 0, %s20
      %s23 = sphi 0, %s21
      %s24 = sphi 0, %s22
      %s34 = sphi 0, %s36
      %s37 = sphi 0, %s34
      %s38 = sphi 0, %s37
      %s54 = sphi 0, %s38
      %s60 = sphi 0, %s62
      %s63 = sphi 0, %s60
      %s64 = sphi 0, %s63
      %s80 = sphi 0, %s64
      %s86 = sphi 0, %s88
      %s89 = sphi 0, %s86
      %s90 = sphi 0, %s89
      %s106 = sphi 0, %s90
      %s114 = sphi 0, %s116
      %s117 = sphi 0, %s114
      %s118 = sphi 0, %s117
      %s134 = sphi 0, %s118
    $region4: #{transformer_lm_forward.19} parent=1 // loop_header_branch
      %15 = sbr.rel (%p13) target = $region8
    $region5: #{transformer_lm_forward.19} parent=1 // loop_body
      %s17 = ssub.s32 %s12, 1
      %s18 = ssub.s32 %s12, 2
      %s25 = sadd.s32 1, %s20
      %p26 = scmp.ge.s32.totalorder %s25, 2
      %s27 = scalar_select %p26, 0, %s25
      %s28 = sadd.s32 1, %s19
      %s29 = scalar_select %p26, %s28, %s19
      %p30 = scmp.ge.s32.totalorder %s29, 1
      %s31 = scalar_select %p30, 0, %s29
      %s32 = ssub.s32 %s19, %s31
      %p33 = scmp.eq.s32.totalorder %s32, 0
      %s35 = sadd.s32 %s34, 1
      %s36 = scalar_select %p33, %s34, %s35
      %p39 = pneg %p33
      %p40 = scmp.eq.s32.totalorder %s12, 1
      %p41 = por %p39, %p40
      %p42 = scmp.ne.s32.totalorder %s34, %s37
      %p43 = scmp.eq.s32.totalorder %s12, 0
      %p44 = por %p42, %p43
      %p45 = scmp.ne.s32.totalorder %s34, %s37
      %p46 = scmp.eq.s32.totalorder %s17, 1
      %p47 = por %p45, %p46
      %p48 = scmp.ne.s32.totalorder %s37, %s38
      %p49 = scmp.eq.s32.totalorder %s17, 0
      %p50 = por %p48, %p49
      %p51 = scmp.ne.s32.totalorder %s37, %s38
      %p52 = scmp.eq.s32.totalorder %s18, 1
      %p53 = por %p51, %p52
      %p55 = scmp.ne.s32.totalorder %s38, %s54
      %p56 = scmp.eq.s32.totalorder %s18, 0
      %p57 = por %p55, %p56
      %s58 = ssub.s32 %s20, %s27
      %p59 = scmp.eq.s32.totalorder %s58, 0
      %s61 = sadd.s32 %s60, 1
      %s62 = scalar_select %p59, %s60, %s61
      %p65 = pneg %p59
      %p66 = scmp.eq.s32.totalorder %s12, 1
      %p67 = por %p65, %p66
      %p68 = scmp.ne.s32.totalorder %s60, %s63
      %p69 = scmp.eq.s32.totalorder %s12, 0
      %p70 = por %p68, %p69
      %p71 = scmp.ne.s32.totalorder %s60, %s63
      %p72 = scmp.eq.s32.totalorder %s17, 1
      %p73 = por %p71, %p72
      %p74 = scmp.ne.s32.totalorder %s63, %s64
      %p75 = scmp.eq.s32.totalorder %s17, 0
      %p76 = por %p74, %p75
      %p77 = scmp.ne.s32.totalorder %s63, %s64
      %p78 = scmp.eq.s32.totalorder %s18, 1
      %p79 = por %p77, %p78
      %p81 = scmp.ne.s32.totalorder %s64, %s80
      %p82 = scmp.eq.s32.totalorder %s18, 0
      %p83 = por %p81, %p82
      %s84 = ssub.s32 %s20, %s27
      %p85 = scmp.eq.s32.totalorder %s84, 0
      %s87 = sadd.s32 %s86, 1
      %s88 = scalar_select %p85, %s86, %s87
      %p91 = pneg %p85
      %p92 = scmp.eq.s32.totalorder %s12, 1
      %p93 = por %p91, %p92
      %p94 = scmp.ne.s32.totalorder %s86, %s89
      %p95 = scmp.eq.s32.totalorder %s12, 0
      %p96 = por %p94, %p95
      %p97 = scmp.ne.s32.totalorder %s86, %s89
      %p98 = scmp.eq.s32.totalorder %s17, 1
      %p99 = por %p97, %p98
      %p100 = scmp.ne.s32.totalorder %s89, %s90
      %p101 = scmp.eq.s32.totalorder %s17, 0
      %p102 = por %p100, %p101
      %p103 = scmp.ne.s32.totalorder %s89, %s90
      %p104 = scmp.eq.s32.totalorder %s18, 1
      %p105 = por %p103, %p104
      %p107 = scmp.ne.s32.totalorder %s90, %s106
      %p108 = scmp.eq.s32.totalorder %s18, 0
      %p109 = por %p107, %p108
      %s110 = ssub.s32 %s19, %s31
      %s111 = ssub.s32 %s20, %s27
      %s112 = sor.u32 %s110, %s111
      %p113 = scmp.eq.s32.totalorder %s112, 0
      %s115 = sadd.s32 %s114, 1
      %s116 = scalar_select %p113, %s114, %s115
      %p119 = pneg %p113
      %p120 = scmp.eq.s32.totalorder %s12, 1
      %p121 = por %p119, %p120
      %p122 = scmp.ne.s32.totalorder %s114, %s117
      %p123 = scmp.eq.s32.totalorder %s12, 0
      %p124 = por %p122, %p123
      %p125 = scmp.ne.s32.totalorder %s114, %s117
      %p126 = scmp.eq.s32.totalorder %s17, 1
      %p127 = por %p125, %p126
      %p128 = scmp.ne.s32.totalorder %s117, %s118
      %p129 = scmp.eq.s32.totalorder %s17, 0
      %p130 = por %p128, %p129
      %p131 = scmp.ne.s32.totalorder %s117, %s118
      %p132 = scmp.eq.s32.totalorder %s18, 1
      %p133 = por %p131, %p132
      %p135 = scmp.ne.s32.totalorder %s118, %s134
      %p136 = scmp.eq.s32.totalorder %s18, 0
      %p137 = por %p135, %p136
      %p138 = scmp.le.s32.totalorder 1, %s12
      %p139 = scmp.lt.s32.totalorder %s12, 3
      %p140 = pnand %p138, %p139
      %p141 = pneg %p140
      // Predicated region
      $region9: #{transformer_lm_forward.19} parent=5 // pred_check
        _
      $region10: #{transformer_lm_forward.19} parent=5 // pred_check_branch
        %143 = sbr.rel (%p140) target = $region12
      $region11: #{transformer_lm_forward.19} parent=5 // pred_region
        %s144 = ssub.s32 %s12, 1
        // Predicated region
        $region13: #{transformer_lm_forward.19} parent=11 // pred_check
          %p145 = pneg %p50
        $region14: #{transformer_lm_forward.19} parent=11 // pred_check_branch
          %147 = sbr.rel (%p145) target = $region16
        $region15: #{transformer_lm_forward.19} parent=11 // pred_region
          %s148 = smul.u32 2, %s21
          %p149 = scmp.lt.s32.totalorder %s148, 1
          %s150 = scalar_select %p149, %s148, 1
          %s151 = smul.addr %s150, 2
          %s152 = smul.addr %s151, 4
          %s153 = scalar_lea.vmem %s0, %s152
          %s154 = smul.u32 2, %s21
        $region16: #{transformer_lm_forward.19} parent=11 // pred_fallthru
          _
      $region12: #{transformer_lm_forward.19} parent=5 // pred_fallthru
        _
      %p155 = scmp.lt.s32.totalorder %s12, 2
      // Predicated region
      $region17: #{transformer_lm_forward.19} parent=5 // pred_check
        %p156 = pneg %p155
      $region18: #{transformer_lm_forward.19} parent=5 // pred_check_branch
        %158 = sbr.rel (%p156) target = $region20
      $region19: #{transformer_lm_forward.19} parent=5 // pred_region
        // Predicated region
        $region21: #{transformer_lm_forward.19} parent=19 // pred_check
          %p159 = pneg %p70
        $region22: #{transformer_lm_forward.19} parent=19 // pred_check_branch
          %161 = sbr.rel (%p159) target = $region24
        $region23: #{transformer_lm_forward.19} parent=19 // pred_region
          %s162 = sand.u32 %s60, 1
          %s163 = sand.u32 %s60, 1
          %s164 = smul.addr %s163, 512
          %s165 = scalar_lea.vmem [#allocation2], %s164
          %s166 = smul.u32 4, %s20
          %s167 = smul.addr %s166, 4
          %s168 = scalar_lea.vmem %s1, %s167
          // Predicated region
          $region25: #{transformer_lm_forward.19} parent=23 // pred_check
            _
          $region26: #{transformer_lm_forward.19} parent=23 // pred_check_branch
            %170 = sbr.rel (0) target = $region28
          $region27: #{transformer_lm_forward.19} parent=23 // pred_region
            // Predicated region
            $region29: #{transformer_lm_forward.19} parent=27 // pred_check
              _
            $region30: #{transformer_lm_forward.19} parent=27 // pred_check_branch
              %172 = sbr.rel (0) target = $region32
            $region31: #{transformer_lm_forward.19} parent=27 // pred_region
              loop: start=0, step=1, limit=1
              $region33: #{transformer_lm_forward.19} parent=31 // loop_pre_header
                _
              $region34: #{transformer_lm_forward.19} parent=31 // loop_header
                %s174 = sphi 0, %s178
                %p175 = scmp.ge.s32.totalorder %s174, 1
                %s179 = sphi %s168, %s168
                %s180 = sphi %s165, %s165
              $region35: #{transformer_lm_forward.19} parent=31 // loop_header_branch
                %177 = sbr.rel (%p175) target = $region39
              $region36: #{transformer_lm_forward.19} parent=31 // loop_body
                %v181 = vld [vmem:[%s179] sm:$0xff]
                %182 = vst [vmem:[%s180] sm:$0xff] %v181
                %v183 = vld [vmem:[%s179 + $0x8] sm:$0xff]
                %184 = vst [vmem:[%s180 + $0x8] sm:$0xff] %v183
                %v185 = vld [vmem:[%s179 + $0x20] sm:$0xff]
                %186 = vst [vmem:[%s180 + $0x10] sm:$0xff] %v185
                %v187 = vld [vmem:[%s179 + $0x28] sm:$0xff]
                %188 = vst [vmem:[%s180 + $0x18] sm:$0xff] %v187
                %v189 = vld [vmem:[%s179 + $0x40] sm:$0xff]
                %190 = vst [vmem:[%s180 + $0x20] sm:$0xff] %v189
                %v191 = vld [vmem:[%s179 + $0x48] sm:$0xff]
                %192 = vst [vmem:[%s180 + $0x28] sm:$0xff] %v191
                %v193 = vld [vmem:[%s179 + $0x60] sm:$0xff]
                %194 = vst [vmem:[%s180 + $0x30] sm:$0xff] %v193
                %v195 = vld [vmem:[%s179 + $0x68] sm:$0xff]
                %196 = vst [vmem:[%s180 + $0x38] sm:$0xff] %v195
                %v197 = vld [vmem:[%s179 + $0x80] sm:$0xff]
                %198 = vst [vmem:[%s180 + $0x40] sm:$0xff] %v197
                %v199 = vld [vmem:[%s179 + $0x88] sm:$0xff]
                %200 = vst [vmem:[%s180 + $0x48] sm:$0xff] %v199
                %v201 = vld [vmem:[%s179 + $0xa0] sm:$0xff]
                %202 = vst [vmem:[%s180 + $0x50] sm:$0xff] %v201
                %v203 = vld [vmem:[%s179 + $0xa8] sm:$0xff]
                %204 = vst [vmem:[%s180 + $0x58] sm:$0xff] %v203
                %v205 = vld [vmem:[%s179 + $0xc0] sm:$0xff]
                %206 = vst [vmem:[%s180 + $0x60] sm:$0xff] %v205
                %v207 = vld [vmem:[%s179 + $0xc8] sm:$0xff]
                %208 = vst [vmem:[%s180 + $0x68] sm:$0xff] %v207
                %v209 = vld [vmem:[%s179 + $0xe0] sm:$0xff]
                %210 = vst [vmem:[%s180 + $0x70] sm:$0xff] %v209
                %v211 = vld [vmem:[%s179 + $0xe8] sm:$0xff]
                %212 = vst [vmem:[%s180 + $0x78] sm:$0xff] %v211
                %v213 = vld [vmem:[%s179 + $0x100] sm:$0xff]
                %214 = vst [vmem:[%s180 + $0x80] sm:$0xff] %v213
                %v215 = vld [vmem:[%s179 + $0x108] sm:$0xff]
                %216 = vst [vmem:[%s180 + $0x88] sm:$0xff] %v215
                %v217 = vld [vmem:[%s179 + $0x120] sm:$0xff]
                %218 = vst [vmem:[%s180 + $0x90] sm:$0xff] %v217
                %v219 = vld [vmem:[%s179 + $0x128] sm:$0xff]
                %220 = vst [vmem:[%s180 + $0x98] sm:$0xff] %v219
                %v221 = vld [vmem:[%s179 + $0x140] sm:$0xff]
                %222 = vst [vmem:[%s180 + $0xa0] sm:$0xff] %v221
                %v223 = vld [vmem:[%s179 + $0x148] sm:$0xff]
                %224 = vst [vmem:[%s180 + $0xa8] sm:$0xff] %v223
                %v225 = vld [vmem:[%s179 + $0x160] sm:$0xff]
                %226 = vst [vmem:[%s180 + $0xb0] sm:$0xff] %v225
                %v227 = vld [vmem:[%s179 + $0x168] sm:$0xff]
                %228 = vst [vmem:[%s180 + $0xb8] sm:$0xff] %v227
                %v229 = vld [vmem:[%s179 + $0x180] sm:$0xff]
                %230 = vst [vmem:[%s180 + $0xc0] sm:$0xff] %v229
                %v231 = vld [vmem:[%s179 + $0x188] sm:$0xff]
                %232 = vst [vmem:[%s180 + $0xc8] sm:$0xff] %v231
                %v233 = vld [vmem:[%s179 + $0x1a0] sm:$0xff]
                %234 = vst [vmem:[%s180 + $0xd0] sm:$0xff] %v233
                %v235 = vld [vmem:[%s179 + $0x1a8] sm:$0xff]
                %236 = vst [vmem:[%s180 + $0xd8] sm:$0xff] %v235
                %v237 = vld [vmem:[%s179 + $0x1c0] sm:$0xff]
                %238 = vst [vmem:[%s180 + $0xe0] sm:$0xff] %v237
                %v239 = vld [vmem:[%s179 + $0x1c8] sm:$0xff]
                %240 = vst [vmem:[%s180 + $0xe8] sm:$0xff] %v239
                %v241 = vld [vmem:[%s179 + $0x1e0] sm:$0xff]
                %242 = vst [vmem:[%s180 + $0xf0] sm:$0xff] %v241
                %v243 = vld [vmem:[%s179 + $0x1e8] sm:$0xff]
                %244 = vst [vmem:[%s180 + $0xf8] sm:$0xff] %v243
                %v245 = vld [vmem:[%s179 + $0x200] sm:$0xff]
                %246 = vst [vmem:[%s180 + $0x100] sm:$0xff] %v245
                %v247 = vld [vmem:[%s179 + $0x208] sm:$0xff]
                %248 = vst [vmem:[%s180 + $0x108] sm:$0xff] %v247
                %v249 = vld [vmem:[%s179 + $0x220] sm:$0xff]
                %250 = vst [vmem:[%s180 + $0x110] sm:$0xff] %v249
                %v251 = vld [vmem:[%s179 + $0x228] sm:$0xff]
                %252 = vst [vmem:[%s180 + $0x118] sm:$0xff] %v251
                %v253 = vld [vmem:[%s179 + $0x240] sm:$0xff]
                %254 = vst [vmem:[%s180 + $0x120] sm:$0xff] %v253
                %v255 = vld [vmem:[%s179 + $0x248] sm:$0xff]
                %256 = vst [vmem:[%s180 + $0x128] sm:$0xff] %v255
                %v257 = vld [vmem:[%s179 + $0x260] sm:$0xff]
                %258 = vst [vmem:[%s180 + $0x130] sm:$0xff] %v257
                %v259 = vld [vmem:[%s179 + $0x268] sm:$0xff]
                %260 = vst [vmem:[%s180 + $0x138] sm:$0xff] %v259
                %v261 = vld [vmem:[%s179 + $0x280] sm:$0xff]
                %262 = vst [vmem:[%s180 + $0x140] sm:$0xff] %v261
                %v263 = vld [vmem:[%s179 + $0x288] sm:$0xff]
                %264 = vst [vmem:[%s180 + $0x148] sm:$0xff] %v263
                %v265 = vld [vmem:[%s179 + $0x2a0] sm:$0xff]
                %266 = vst [vmem:[%s180 + $0x150] sm:$0xff] %v265
                %v267 = vld [vmem:[%s179 + $0x2a8] sm:$0xff]
                %268 = vst [vmem:[%s180 + $0x158] sm:$0xff] %v267
                %v269 = vld [vmem:[%s179 + $0x2c0] sm:$0xff]
                %270 = vst [vmem:[%s180 + $0x160] sm:$0xff] %v269
                %v271 = vld [vmem:[%s179 + $0x2c8] sm:$0xff]
                %272 = vst [vmem:[%s180 + $0x168] sm:$0xff] %v271
                %v273 = vld [vmem:[%s179 + $0x2e0] sm:$0xff]
                %274 = vst [vmem:[%s180 + $0x170] sm:$0xff] %v273
                %v275 = vld [vmem:[%s179 + $0x2e8] sm:$0xff]
                %276 = vst [vmem:[%s180 + $0x178] sm:$0xff] %v275
                %v277 = vld [vmem:[%s179 + $0x300] sm:$0xff]
                %278 = vst [vmem:[%s180 + $0x180] sm:$0xff] %v277
                %v279 = vld [vmem:[%s179 + $0x308] sm:$0xff]
                %280 = vst [vmem:[%s180 + $0x188] sm:$0xff] %v279
                %v281 = vld [vmem:[%s179 + $0x320] sm:$0xff]
                %282 = vst [vmem:[%s180 + $0x190] sm:$0xff] %v281
                %v283 = vld [vmem:[%s179 + $0x328] sm:$0xff]
                %284 = vst [vmem:[%s180 + $0x198] sm:$0xff] %v283
                %v285 = vld [vmem:[%s179 + $0x340] sm:$0xff]
                %286 = vst [vmem:[%s180 + $0x1a0] sm:$0xff] %v285
                %v287 = vld [vmem:[%s179 + $0x348] sm:$0xff]
                %288 = vst [vmem:[%s180 + $0x1a8] sm:$0xff] %v287
                %v289 = vld [vmem:[%s179 + $0x360] sm:$0xff]
                %290 = vst [vmem:[%s180 + $0x1b0] sm:$0xff] %v289
                %v291 = vld [vmem:[%s179 + $0x368] sm:$0xff]
                %292 = vst [vmem:[%s180 + $0x1b8] sm:$0xff] %v291
                %v293 = vld [vmem:[%s179 + $0x380] sm:$0xff]
                %294 = vst [vmem:[%s180 + $0x1c0] sm:$0xff] %v293
                %v295 = vld [vmem:[%s179 + $0x388] sm:$0xff]
                %296 = vst [vmem:[%s180 + $0x1c8] sm:$0xff] %v295
                %v297 = vld [vmem:[%s179 + $0x3a0] sm:$0xff]
                %298 = vst [vmem:[%s180 + $0x1d0] sm:$0xff] %v297
                %v299 = vld [vmem:[%s179 + $0x3a8] sm:$0xff]
                %300 = vst [vmem:[%s180 + $0x1d8] sm:$0xff] %v299
                %v301 = vld [vmem:[%s179 + $0x3c0] sm:$0xff]
                %302 = vst [vmem:[%s180 + $0x1e0] sm:$0xff] %v301
                %v303 = vld [vmem:[%s179 + $0x3c8] sm:$0xff]
                %304 = vst [vmem:[%s180 + $0x1e8] sm:$0xff] %v303
                %v305 = vld [vmem:[%s179 + $0x3e0] sm:$0xff]
                %306 = vst [vmem:[%s180 + $0x1f0] sm:$0xff] %v305
                %v307 = vld [vmem:[%s179 + $0x3e8] sm:$0xff]
                %308 = vst [vmem:[%s180 + $0x1f8] sm:$0xff] %v307
              $region37: #{transformer_lm_forward.19} parent=31 // loop_footer
                %s178 = sadd.s32 1, %s174
              $region38: #{transformer_lm_forward.19} parent=31 // loop_footer_branch
                %173 = sbr.rel target = $region34
              $region39: #{transformer_lm_forward.19} parent=31 // loop_exit
                _
            $region32: #{transformer_lm_forward.19} parent=27 // pred_fallthru
              _
            // Predicated region
            $region40: #{transformer_lm_forward.19} parent=27 // pred_check
              _
            $region41: #{transformer_lm_forward.19} parent=27 // pred_check_branch
              %310 = sbr.rel target = $region43
            $region42: #{transformer_lm_forward.19} parent=27 // pred_region
              _
            $region43: #{transformer_lm_forward.19} parent=27 // pred_fallthru
              _
          $region28: #{transformer_lm_forward.19} parent=23 // pred_fallthru
            _
          %311 = vnop
        $region24: #{transformer_lm_forward.19} parent=19 // pred_fallthru
          _
        // Predicated region
        $region44: #{transformer_lm_forward.19} parent=19 // pred_check
          %p312 = pneg %p96
        $region45: #{transformer_lm_forward.19} parent=19 // pred_check_branch
          %314 = sbr.rel (%p312) target = $region47
        $region46: #{transformer_lm_forward.19} parent=19 // pred_region
          %s315 = smul.u32 4, %s20
          %p316 = scmp.lt.s32.totalorder %s315, 7
          %s317 = scalar_select %p316, %s315, 7
          %s318 = scalar_lea.vmem %s2, %s317
          %s319 = smul.u32 4, %s20
        $region47: #{transformer_lm_forward.19} parent=19 // pred_fallthru
          _
      $region20: #{transformer_lm_forward.19} parent=5 // pred_fallthru
        _
      %p320 = scmp.le.s32.totalorder 1, %s12
      %p321 = scmp.lt.s32.totalorder %s12, 3
      %p322 = pnand %p320, %p321
      %p323 = pneg %p322
      // Predicated region
      $region48: #{transformer_lm_forward.19} parent=5 // pred_check
        _
      $region49: #{transformer_lm_forward.19} parent=5 // pred_check_branch
        %325 = sbr.rel (%p322) target = $region51
      $region50: #{transformer_lm_forward.19} parent=5 // pred_region
        %s326 = ssub.s32 %s12, 1
        %s327 = sand.u32 %s63, 1
        %s328 = sand.u32 %s63, 1
        %s329 = smul.addr %s328, 512
        %s330 = scalar_lea.vmem [#allocation2], %s329
        // Predicated region
        $region52: #{transformer_lm_forward.19} parent=50 // pred_check
          %p331 = pneg %p76
        $region53: #{transformer_lm_forward.19} parent=50 // pred_check_branch
          %333 = sbr.rel (%p331) target = $region55
        $region54: #{transformer_lm_forward.19} parent=50 // pred_region
          _
        $region55: #{transformer_lm_forward.19} parent=50 // pred_fallthru
          _
        %s334 = smul.u32 2, %s21
        %p335 = scmp.lt.s32.totalorder %s334, 1
        %s336 = scalar_select %p335, %s334, 1
        %s337 = smul.addr %s336, 2
        %s338 = smul.addr %s337, 4
        %s339 = scalar_lea.vmem %s0, %s338
        %p340 = pneg %p50
        %p341 = pneg %p47
        %s342 = sand.u32 %s63, 1
        %s343 = sand.u32 %s63, 1
        %s344 = smul.addr %s343, 512
        %s345 = scalar_lea.vmem [#allocation2], %s344
        %p346 = pneg %p76
        %p347 = pneg %p73
        %s348 = smul.u32 4, %s22
        %p349 = scmp.lt.s32.totalorder %s348, 7
        %s350 = scalar_select %p349, %s348, 7
        %s351 = scalar_lea.vmem %s2, %s350
        %p352 = pneg %p102
        %p353 = pneg %p99
        %p354 = pneg %p130
        %p355 = pneg %p127
        %s356 = sand.u32 %s117, 1
        %s357 = scalar_lea.sflag [#allocation4], %s356
        %s358 = sand.u32 %s117, 1
        %s359 = smul.addr %s358, 64
        %s360 = scalar_lea.vmem [#allocation3], %s359
        %s361 = smul.u32 2, %s21
        %p362 = scmp.lt.s32.totalorder %s361, 1
        %s363 = scalar_select %p362, %s361, 1
        %s364 = smul.addr %s363, 2
        %s365 = smul.addr %s364, 4
        %s366 = scalar_lea.vmem %s0, %s365
        %s367 = smul.u32 2, %s21
        %s368 = smul.u32 4, %s22
        %s369 = smul.u32 4, %s22
        %p370 = scmp.lt.s32.totalorder %s369, 7
        %s371 = scalar_select %p370, %s369, 7
        %s372 = scalar_lea.vmem %s2, %s371
        %s373 = smul.u32 4, %s22
        %s374 = smul.u32 2, %s21
        %s375 = smul.u32 4, %s22
        %v376 = vld [vmem:[%s366] sm:$0xff]
        %v377 = vld [vmem:[%s366 + $0x8] sm:$0xff]
        %v378 = vld [vmem:[%s330] sm:$0xff]
        %v379 = vld [vmem:[%s330 + $0x8] sm:$0xff]
        %v380 = vld [vmem:[%s330 + $0x10] sm:$0xff]
        %v381 = vld [vmem:[%s330 + $0x18] sm:$0xff]
        %v382 = vld [vmem:[%s330 + $0x20] sm:$0xff]
        %v383 = vld [vmem:[%s330 + $0x28] sm:$0xff]
        %v384 = vld [vmem:[%s330 + $0x30] sm:$0xff]
        %v385 = vld [vmem:[%s330 + $0x38] sm:$0xff]
        %v386 = vld [vmem:[%s330 + $0x40] sm:$0xff]
        %v387 = vld [vmem:[%s330 + $0x48] sm:$0xff]
        %v388 = vld [vmem:[%s330 + $0x50] sm:$0xff]
        %v389 = vld [vmem:[%s330 + $0x58] sm:$0xff]
        %v390 = vld [vmem:[%s330 + $0x60] sm:$0xff]
        %v391 = vld [vmem:[%s330 + $0x68] sm:$0xff]
        %v392 = vld [vmem:[%s330 + $0x70] sm:$0xff]
        %v393 = vld [vmem:[%s330 + $0x78] sm:$0xff]
        %v394 = vld [vmem:[%s330 + $0x80] sm:$0xff]
        %v395 = vld [vmem:[%s330 + $0x88] sm:$0xff]
        %v396 = vld [vmem:[%s330 + $0x90] sm:$0xff]
        %v397 = vld [vmem:[%s330 + $0x98] sm:$0xff]
        %v398 = vld [vmem:[%s330 + $0xa0] sm:$0xff]
        %v399 = vld [vmem:[%s330 + $0xa8] sm:$0xff]
        %v400 = vld [vmem:[%s330 + $0xb0] sm:$0xff]
        %v401 = vld [vmem:[%s330 + $0xb8] sm:$0xff]
        %v402 = vld [vmem:[%s330 + $0xc0] sm:$0xff]
        %v403 = vld [vmem:[%s330 + $0xc8] sm:$0xff]
        %v404 = vld [vmem:[%s330 + $0xd0] sm:$0xff]
        %v405 = vld [vmem:[%s330 + $0xd8] sm:$0xff]
        %v406 = vld [vmem:[%s330 + $0xe0] sm:$0xff]
        %v407 = vld [vmem:[%s330 + $0xe8] sm:$0xff]
        %v408 = vld [vmem:[%s330 + $0xf0] sm:$0xff]
        %v409 = vld [vmem:[%s330 + $0xf8] sm:$0xff]
        %v410 = vld [vmem:[%s330 + $0x100] sm:$0xff]
        %v411 = vld [vmem:[%s330 + $0x108] sm:$0xff]
        %v412 = vld [vmem:[%s330 + $0x110] sm:$0xff]
        %v413 = vld [vmem:[%s330 + $0x118] sm:$0xff]
        %v414 = vld [vmem:[%s330 + $0x120] sm:$0xff]
        %v415 = vld [vmem:[%s330 + $0x128] sm:$0xff]
        %v416 = vld [vmem:[%s330 + $0x130] sm:$0xff]
        %v417 = vld [vmem:[%s330 + $0x138] sm:$0xff]
        %v418 = vld [vmem:[%s330 + $0x140] sm:$0xff]
        %v419 = vld [vmem:[%s330 + $0x148] sm:$0xff]
        %v420 = vld [vmem:[%s330 + $0x150] sm:$0xff]
        %v421 = vld [vmem:[%s330 + $0x158] sm:$0xff]
        %v422 = vld [vmem:[%s330 + $0x160] sm:$0xff]
        %v423 = vld [vmem:[%s330 + $0x168] sm:$0xff]
        %v424 = vld [vmem:[%s330 + $0x170] sm:$0xff]
        %v425 = vld [vmem:[%s330 + $0x178] sm:$0xff]
        %v426 = vld [vmem:[%s330 + $0x180] sm:$0xff]
        %v427 = vld [vmem:[%s330 + $0x188] sm:$0xff]
        %v428 = vld [vmem:[%s330 + $0x190] sm:$0xff]
        %v429 = vld [vmem:[%s330 + $0x198] sm:$0xff]
        %v430 = vld [vmem:[%s330 + $0x1a0] sm:$0xff]
        %v431 = vld [vmem:[%s330 + $0x1a8] sm:$0xff]
        %v432 = vld [vmem:[%s330 + $0x1b0] sm:$0xff]
        %v433 = vld [vmem:[%s330 + $0x1b8] sm:$0xff]
        %v434 = vld [vmem:[%s330 + $0x1c0] sm:$0xff]
        %v435 = vld [vmem:[%s330 + $0x1c8] sm:$0xff]
        %v436 = vld [vmem:[%s330 + $0x1d0] sm:$0xff]
        %v437 = vld [vmem:[%s330 + $0x1d8] sm:$0xff]
        %v438 = vld [vmem:[%s330 + $0x1e0] sm:$0xff]
        %v439 = vld [vmem:[%s330 + $0x1e8] sm:$0xff]
        %v440 = vld [vmem:[%s330 + $0x1f0] sm:$0xff]
        %v441 = vld [vmem:[%s330 + $0x1f8] sm:$0xff]
        %v442 = vld [vmem:[%s372] sm:$0xf]
        %v444 = vlaneseq
        %v445 = vshrl.u32 %v444, 7
        %v446 = vsub.s32 0, %v445
        %v447 = vrot.slane %v442, %v446
        %v448 = vlaneseq
        %v449 = vshrl.u32 %v448, 7
        %v450 = vsub.s32 1, %v449
        %v451 = vrot.slane %v442, %v450
        %v452 = vlaneseq
        %v453 = vshrl.u32 %v452, 7
        %v454 = vsub.s32 2, %v453
        %v455 = vrot.slane %v442, %v454
        %v456 = vlaneseq
        %v457 = vshrl.u32 %v456, 7
        %v458 = vsub.s32 3, %v457
        %v459 = vrot.slane %v442, %v458
        %v466 = vunpack.c.l.b16 %v376
        %v467 = vunpack.c.h.b16 %v376
        %v468 = vunpack.c.l.b16 %v377
        %v469 = vunpack.c.h.b16 %v377
        %v470 = vpack.c.b16 %v468, %v466
        %v471 = vpack.c.b16 %v469, %v467
        %v538 = vunpack.c.l.b16 %v378
        %v539 = vunpack.c.h.b16 %v378
        %v540 = vunpack.c.l.b16 %v379
        %v541 = vunpack.c.h.b16 %v379
        %v542 = vunpack.c.l.b16 %v380
        %v543 = vunpack.c.h.b16 %v380
        %v544 = vunpack.c.l.b16 %v381
        %v545 = vunpack.c.h.b16 %v381
        %v546 = vunpack.c.l.b16 %v382
        %v547 = vunpack.c.h.b16 %v382
        %v548 = vunpack.c.l.b16 %v383
        %v549 = vunpack.c.h.b16 %v383
        %v550 = vunpack.c.l.b16 %v384
        %v551 = vunpack.c.h.b16 %v384
        %v552 = vunpack.c.l.b16 %v385
        %v553 = vunpack.c.h.b16 %v385
        %v554 = vunpack.c.l.b16 %v386
        %v555 = vunpack.c.h.b16 %v386
        %v556 = vunpack.c.l.b16 %v387
        %v557 = vunpack.c.h.b16 %v387
        %v558 = vunpack.c.l.b16 %v388
        %v559 = vunpack.c.h.b16 %v388
        %v560 = vunpack.c.l.b16 %v389
        %v561 = vunpack.c.h.b16 %v389
        %v562 = vunpack.c.l.b16 %v390
        %v563 = vunpack.c.h.b16 %v390
        %v564 = vunpack.c.l.b16 %v391
        %v565 = vunpack.c.h.b16 %v391
        %v566 = vunpack.c.l.b16 %v392
        %v567 = vunpack.c.h.b16 %v392
        %v568 = vunpack.c.l.b16 %v393
        %v569 = vunpack.c.h.b16 %v393
        %v570 = vunpack.c.l.b16 %v394
        %v571 = vunpack.c.h.b16 %v394
        %v572 = vunpack.c.l.b16 %v395
        %v573 = vunpack.c.h.b16 %v395
        %v574 = vunpack.c.l.b16 %v396
        %v575 = vunpack.c.h.b16 %v396
        %v576 = vunpack.c.l.b16 %v397
        %v577 = vunpack.c.h.b16 %v397
        %v578 = vunpack.c.l.b16 %v398
        %v579 = vunpack.c.h.b16 %v398
        %v580 = vunpack.c.l.b16 %v399
        %v581 = vunpack.c.h.b16 %v399
        %v582 = vunpack.c.l.b16 %v400
        %v583 = vunpack.c.h.b16 %v400
        %v584 = vunpack.c.l.b16 %v401
        %v585 = vunpack.c.h.b16 %v401
        %v586 = vunpack.c.l.b16 %v402
        %v587 = vunpack.c.h.b16 %v402
        %v588 = vunpack.c.l.b16 %v403
        %v589 = vunpack.c.h.b16 %v403
        %v590 = vunpack.c.l.b16 %v404
        %v591 = vunpack.c.h.b16 %v404
        %v592 = vunpack.c.l.b16 %v405
        %v593 = vunpack.c.h.b16 %v405
        %v594 = vunpack.c.l.b16 %v406
        %v595 = vunpack.c.h.b16 %v406
        %v596 = vunpack.c.l.b16 %v407
        %v597 = vunpack.c.h.b16 %v407
        %v598 = vunpack.c.l.b16 %v408
        %v599 = vunpack.c.h.b16 %v408
        %v600 = vunpack.c.l.b16 %v409
        %v601 = vunpack.c.h.b16 %v409
        %v602 = vunpack.c.l.b16 %v410
        %v603 = vunpack.c.h.b16 %v410
        %v604 = vunpack.c.l.b16 %v411
        %v605 = vunpack.c.h.b16 %v411
        %v606 = vunpack.c.l.b16 %v412
        %v607 = vunpack.c.h.b16 %v412
        %v608 = vunpack.c.l.b16 %v413
        %v609 = vunpack.c.h.b16 %v413
        %v610 = vunpack.c.l.b16 %v414
        %v611 = vunpack.c.h.b16 %v414
        %v612 = vunpack.c.l.b16 %v415
        %v613 = vunpack.c.h.b16 %v415
        %v614 = vunpack.c.l.b16 %v416
        %v615 = vunpack.c.h.b16 %v416
        %v616 = vunpack.c.l.b16 %v417
        %v617 = vunpack.c.h.b16 %v417
        %v618 = vunpack.c.l.b16 %v418
        %v619 = vunpack.c.h.b16 %v418
        %v620 = vunpack.c.l.b16 %v419
        %v621 = vunpack.c.h.b16 %v419
        %v622 = vunpack.c.l.b16 %v420
        %v623 = vunpack.c.h.b16 %v420
        %v624 = vunpack.c.l.b16 %v421
        %v625 = vunpack.c.h.b16 %v421
        %v626 = vunpack.c.l.b16 %v422
        %v627 = vunpack.c.h.b16 %v422
        %v628 = vunpack.c.l.b16 %v423
        %v629 = vunpack.c.h.b16 %v423
        %v630 = vunpack.c.l.b16 %v424
        %v631 = vunpack.c.h.b16 %v424
        %v632 = vunpack.c.l.b16 %v425
        %v633 = vunpack.c.h.b16 %v425
        %v634 = vunpack.c.l.b16 %v426
        %v635 = vunpack.c.h.b16 %v426
        %v636 = vunpack.c.l.b16 %v427
        %v637 = vunpack.c.h.b16 %v427
        %v638 = vunpack.c.l.b16 %v428
        %v639 = vunpack.c.h.b16 %v428
        %v640 = vunpack.c.l.b16 %v429
        %v641 = vunpack.c.h.b16 %v429
        %v642 = vunpack.c.l.b16 %v430
        %v643 = vunpack.c.h.b16 %v430
        %v644 = vunpack.c.l.b16 %v431
        %v645 = vunpack.c.h.b16 %v431
        %v646 = vunpack.c.l.b16 %v432
        %v647 = vunpack.c.h.b16 %v432
        %v648 = vunpack.c.l.b16 %v433
        %v649 = vunpack.c.h.b16 %v433
        %v650 = vunpack.c.l.b16 %v434
        %v651 = vunpack.c.h.b16 %v434
        %v652 = vunpack.c.l.b16 %v435
        %v653 = vunpack.c.h.b16 %v435
        %v654 = vunpack.c.l.b16 %v436
        %v655 = vunpack.c.h.b16 %v436
        %v656 = vunpack.c.l.b16 %v437
        %v657 = vunpack.c.h.b16 %v437
        %v658 = vunpack.c.l.b16 %v438
        %v659 = vunpack.c.h.b16 %v438
        %v660 = vunpack.c.l.b16 %v439
        %v661 = vunpack.c.h.b16 %v439
        %v662 = vunpack.c.l.b16 %v440
        %v663 = vunpack.c.h.b16 %v440
        %v664 = vunpack.c.l.b16 %v441
        %v665 = vunpack.c.h.b16 %v441
        %v666 = vpack.c.b16 %v542, %v538
        %v667 = vpack.c.b16 %v543, %v539
        %v668 = vpack.c.b16 %v544, %v540
        %v669 = vpack.c.b16 %v545, %v541
        %v670 = vpack.c.b16 %v550, %v546
        %v671 = vpack.c.b16 %v551, %v547
        %v672 = vpack.c.b16 %v552, %v548
        %v673 = vpack.c.b16 %v553, %v549
        %v674 = vpack.c.b16 %v558, %v554
        %v675 = vpack.c.b16 %v559, %v555
        %v676 = vpack.c.b16 %v560, %v556
        %v677 = vpack.c.b16 %v561, %v557
        %v678 = vpack.c.b16 %v566, %v562
        %v679 = vpack.c.b16 %v567, %v563
        %v680 = vpack.c.b16 %v568, %v564
        %v681 = vpack.c.b16 %v569, %v565
        %v682 = vpack.c.b16 %v574, %v570
        %v683 = vpack.c.b16 %v575, %v571
        %v684 = vpack.c.b16 %v576, %v572
        %v685 = vpack.c.b16 %v577, %v573
        %v686 = vpack.c.b16 %v582, %v578
        %v687 = vpack.c.b16 %v583, %v579
        %v688 = vpack.c.b16 %v584, %v580
        %v689 = vpack.c.b16 %v585, %v581
        %v690 = vpack.c.b16 %v590, %v586
        %v691 = vpack.c.b16 %v591, %v587
        %v692 = vpack.c.b16 %v592, %v588
        %v693 = vpack.c.b16 %v593, %v589
        %v694 = vpack.c.b16 %v598, %v594
        %v695 = vpack.c.b16 %v599, %v595
        %v696 = vpack.c.b16 %v600, %v596
        %v697 = vpack.c.b16 %v601, %v597
        %v698 = vpack.c.b16 %v606, %v602
        %v699 = vpack.c.b16 %v607, %v603
        %v700 = vpack.c.b16 %v608, %v604
        %v701 = vpack.c.b16 %v609, %v605
        %v702 = vpack.c.b16 %v614, %v610
        %v703 = vpack.c.b16 %v615, %v611
        %v704 = vpack.c.b16 %v616, %v612
        %v705 = vpack.c.b16 %v617, %v613
        %v706 = vpack.c.b16 %v622, %v618
        %v707 = vpack.c.b16 %v623, %v619
        %v708 = vpack.c.b16 %v624, %v620
        %v709 = vpack.c.b16 %v625, %v621
        %v710 = vpack.c.b16 %v630, %v626
        %v711 = vpack.c.b16 %v631, %v627
        %v712 = vpack.c.b16 %v632, %v628
        %v713 = vpack.c.b16 %v633, %v629
        %v714 = vpack.c.b16 %v638, %v634
        %v715 = vpack.c.b16 %v639, %v635
        %v716 = vpack.c.b16 %v640, %v636
        %v717 = vpack.c.b16 %v641, %v637
        %v718 = vpack.c.b16 %v646, %v642
        %v719 = vpack.c.b16 %v647, %v643
        %v720 = vpack.c.b16 %v648, %v644
        %v721 = vpack.c.b16 %v649, %v645
        %v722 = vpack.c.b16 %v654, %v650
        %v723 = vpack.c.b16 %v655, %v651
        %v724 = vpack.c.b16 %v656, %v652
        %v725 = vpack.c.b16 %v657, %v653
        %v726 = vpack.c.b16 %v662, %v658
        %v727 = vpack.c.b16 %v663, %v659
        %v728 = vpack.c.b16 %v664, %v660
        %v729 = vpack.c.b16 %v665, %v661
        %794 = vmatprep.subr.bf16.mxu0 %v667
        %795 = vmatpush1.bf16.msra.mxu0 %v666
        %796 = vmatprep.subr.bf16.mxu0 %v671
        %797 = vmatpush1.bf16.msra.mxu0 %v670
        %798 = vmatprep.subr.bf16.mxu0 %v675
        %799 = vmatpush1.bf16.msra.mxu0 %v674
        %800 = vmatprep.subr.bf16.mxu0 %v679
        %801 = vmatpush1.bf16.msra.mxu0 %v678
        %802 = vmatprep.subr.bf16.mxu0 %v683
        %803 = vmatpush1.bf16.msra.mxu0 %v682
        %804 = vmatprep.subr.bf16.mxu0 %v687
        %805 = vmatpush1.bf16.msra.mxu0 %v686
        %806 = vmatprep.subr.bf16.mxu0 %v691
        %807 = vmatpush1.bf16.msra.mxu0 %v690
        %808 = vmatprep.subr.bf16.mxu0 %v695
        %809 = vmatpush1.bf16.msra.mxu0 %v694
        %810 = vmatprep.subr.bf16.mxu0 %v699
        %811 = vmatpush1.bf16.msra.mxu0 %v698
        %812 = vmatprep.subr.bf16.mxu0 %v703
        %813 = vmatpush1.bf16.msra.mxu0 %v702
        %814 = vmatprep.subr.bf16.mxu0 %v707
        %815 = vmatpush1.bf16.msra.mxu0 %v706
        %816 = vmatprep.subr.bf16.mxu0 %v711
        %817 = vmatpush1.bf16.msra.mxu0 %v710
        %818 = vmatprep.subr.bf16.mxu0 %v715
        %819 = vmatpush1.bf16.msra.mxu0 %v714
        %820 = vmatprep.subr.bf16.mxu0 %v719
        %821 = vmatpush1.bf16.msra.mxu0 %v718
        %822 = vmatprep.subr.bf16.mxu0 %v723
        %823 = vmatpush1.bf16.msra.mxu0 %v722
        %824 = vmatprep.subr.bf16.mxu0 %v727
        %825 = vmatpush1.bf16.msra.mxu0 %v726
        %826 = vmatprep.mubr.bf16.mxu0 %v471
        %827 = vmatmul.mubr.bf16.gmra.mrb[0].mxu0 %v470
        %v828 = vpop.f32.mrb[0].mxu0
        %v829 = vadd.f32 %v447, %v828
        %v830 = vpop.f32.mrb[0].mxu0
        %v831 = vadd.f32 %v451, %v830
        %v832 = vpop.f32.mrb[0].mxu0
        %v833 = vadd.f32 %v447, %v832
        %v834 = vpop.f32.mrb[0].mxu0
        %v835 = vadd.f32 %v451, %v834
        %836 = vdwg.mxu0
        %837 = vmatprep.subr.bf16.mxu0 %v669
        %838 = vmatpush1.bf16.msra.mxu0 %v668
        %839 = vmatprep.subr.bf16.mxu0 %v673
        %840 = vmatpush1.bf16.msra.mxu0 %v672
        %841 = vmatprep.subr.bf16.mxu0 %v677
        %842 = vmatpush1.bf16.msra.mxu0 %v676
        %843 = vmatprep.subr.bf16.mxu0 %v681
        %844 = vmatpush1.bf16.msra.mxu0 %v680
        %845 = vmatprep.subr.bf16.mxu0 %v685
        %846 = vmatpush1.bf16.msra.mxu0 %v684
        %847 = vmatprep.subr.bf16.mxu0 %v689
        %848 = vmatpush1.bf16.msra.mxu0 %v688
        %849 = vmatprep.subr.bf16.mxu0 %v693
        %850 = vmatpush1.bf16.msra.mxu0 %v692
        %851 = vmatprep.subr.bf16.mxu0 %v697
        %852 = vmatpush1.bf16.msra.mxu0 %v696
        %853 = vmatprep.subr.bf16.mxu0 %v701
        %854 = vmatpush1.bf16.msra.mxu0 %v700
        %855 = vmatprep.subr.bf16.mxu0 %v705
        %856 = vmatpush1.bf16.msra.mxu0 %v704
        %857 = vmatprep.subr.bf16.mxu0 %v709
        %858 = vmatpush1.bf16.msra.mxu0 %v708
        %859 = vmatprep.subr.bf16.mxu0 %v713
        %860 = vmatpush1.bf16.msra.mxu0 %v712
        %861 = vmatprep.subr.bf16.mxu0 %v717
        %862 = vmatpush1.bf16.msra.mxu0 %v716
        %863 = vmatprep.subr.bf16.mxu0 %v721
        %864 = vmatpush1.bf16.msra.mxu0 %v720
        %865 = vmatprep.subr.bf16.mxu0 %v725
        %866 = vmatpush1.bf16.msra.mxu0 %v724
        %867 = vmatprep.subr.bf16.mxu0 %v729
        %868 = vmatpush1.bf16.msra.mxu0 %v728
        %869 = vmatprep.mubr.bf16.mxu0 %v471
        %870 = vmatmul.mubr.bf16.gmra.mrb[0].mxu0 %v470
        %v871 = vpop.f32.mrb[0].mxu0
        %v872 = vadd.f32 %v455, %v871
        %v873 = vpop.f32.mrb[0].mxu0
        %v874 = vadd.f32 %v459, %v873
        %v875 = vpop.f32.mrb[0].mxu0
        %v876 = vadd.f32 %v455, %v875
        %v877 = vpop.f32.mrb[0].mxu0
        %v878 = vadd.f32 %v459, %v877
        %879 = vdwg.mxu0
        %880 = vst [vmem:[%s360] sm:$0xff] %v829
        %881 = vst [vmem:[%s360 + $0x8] sm:$0xff] %v831
        %882 = vst [vmem:[%s360 + $0x10] sm:$0xff] %v872
        %883 = vst [vmem:[%s360 + $0x18] sm:$0xff] %v874
        %884 = vst [vmem:[%s360 + $0x20] sm:$0xff] %v833
        %885 = vst [vmem:[%s360 + $0x28] sm:$0xff] %v835
        %886 = vst [vmem:[%s360 + $0x30] sm:$0xff] %v876
        %887 = vst [vmem:[%s360 + $0x38] sm:$0xff] %v878
        %s888 = sand.u32 %s117, 1
        %s889 = scalar_lea.sflag [#allocation4], %s888
        %s890 = sand.u32 %s117, 1
        %s891 = smul.addr %s890, 64
        %s892 = scalar_lea.vmem [#allocation3], %s891
        // Predicated region
        $region56: #{transformer_lm_forward.19} parent=50 // pred_check
          %p893 = pneg %p127
        $region57: #{transformer_lm_forward.19} parent=50 // pred_check_branch
          %895 = sbr.rel (%p893) target = $region59
        $region58: #{transformer_lm_forward.19} parent=50 // pred_region
          %s896 = smul.u32 2, %s21
          %s897 = smul.u32 4, %s22
          %s899 = ssub.s32 1024, 1024
          %900 = vsyncadd %s889, %s899
          %s901 = smul.addr %s896, 8
          %s902 = sadd.s32 %s897, %s901
          %s903 = smul.addr %s902, 128
          %s904 = scalar_lea.hbm %s3, %s903
          %s905 = sshll.u32 %s892, 4
          %s906 = int_to_ptr.vmem [resolvable:$true] %s905
          %911 = dma.vmem_to_hbm [thread:$0]  %s906, 1024, %s904, %s889, 512, 1024, 32
        $region59: #{transformer_lm_forward.19} parent=50 // pred_fallthru
          _
      $region51: #{transformer_lm_forward.19} parent=5 // pred_fallthru
        _
      %p912 = scmp.le.s32.totalorder 2, %s12
      // Predicated region
      $region60: #{transformer_lm_forward.19} parent=5 // pred_check
        %p913 = pneg %p912
      $region61: #{transformer_lm_forward.19} parent=5 // pred_check_branch
        %915 = sbr.rel (%p913) target = $region63
      $region62: #{transformer_lm_forward.19} parent=5 // pred_region
        %s916 = ssub.s32 %s12, 2
        // Predicated region
        $region64: #{transformer_lm_forward.19} parent=62 // pred_check
          %p917 = pneg %p133
        $region65: #{transformer_lm_forward.19} parent=62 // pred_check_branch
          %919 = sbr.rel (%p917) target = $region67
        $region66: #{transformer_lm_forward.19} parent=62 // pred_region
          %s920 = sand.u32 %s118, 1
          %s921 = scalar_lea.sflag [#allocation4], %s920
          %s922 = sand.u32 %s118, 1
          %s923 = smul.addr %s922, 64
          %s924 = scalar_lea.vmem [#allocation3], %s923
          %925 = dma.done %s921, 1024
        $region67: #{transformer_lm_forward.19} parent=62 // pred_fallthru
          _
      $region63: #{transformer_lm_forward.19} parent=5 // pred_fallthru
        _
    $region6: #{transformer_lm_forward.19} parent=1 // loop_footer
      %s16 = sadd.s32 1, %s12
    $region7: #{transformer_lm_forward.19} parent=1 // loop_footer_branch
      %11 = sbr.rel target = $region3
    $region8: #{transformer_lm_forward.19} parent=1 // loop_exit
      _
    %926 = vsyncpa [#allocation4], 1
    %s927 = scalar_lea.sflag [#allocation4], 1
    %928 = vsyncpa %s927, 1

</llo_original>
